<compile_context>
chip_gen: v7x
topology: tpu7x:2x2x1
jax: 0.10.0
libtpu: 0.0.40
codegen_flags: <defaults>
</compile_context>

<pallas_src>
import functools
import math

import jax
import jax.numpy as jnp
from jax.experimental import pallas as pl
from jax.experimental.pallas import tpu as pltpu


# ----------------------------------------------------------------------------
# Pallas kernels
# ----------------------------------------------------------------------------

def _linear_kernel(x_ref, w_ref, b_ref, out_ref):
    """out = x @ w + b  (bf16 operands, f32 accumulation, cast on store)."""
    y = jnp.dot(x_ref[...], w_ref[...], preferred_element_type=jnp.float32)
    out_ref[...] = (y + b_ref[...]).astype(out_ref.dtype)


def _attn_ln_kernel(xq_ref, q_ref, k_ref, v_ref, pad_ref,
                    wo_ref, bo_ref, gamma_ref, beta_ref,
                    out_ref, acc_ref, *rest, causal, eps):
    """One (batch, head) step of attention + out-proj accumulate + residual + LN.

    grid = (B, H); the head axis is a reduction ("arbitrary"): each head's
    contribution to the output projection accumulates into acc_ref; the residual
    add + LayerNorm is applied (in f32) at the last head and stored as bf16.
    1/scale is already folded into Wq (exact), so no per-score scaling here.
    """
    h = pl.program_id(1)
    nh = pl.num_programs(1)
    bias_s = rest[0] if causal else None

    @pl.when(h == 0)
    def _():
        # residual + output-projection bias, added once per batch step
        acc_ref[...] = xq_ref[0].astype(jnp.float32) + bo_ref[...]
        if causal:
            nq, nkv = bias_s.shape
            row = jax.lax.broadcasted_iota(jnp.int32, (nq, nkv), 0)
            col = jax.lax.broadcasted_iota(jnp.int32, (nq, nkv), 1)
            bias_s[...] = pad_ref[0] + jnp.where(
                col > row, jnp.float32(-1e10), jnp.float32(0.0))

    qh = q_ref[0]          # (Nq, hd)  bf16 (scale folded into Wq)
    kh = k_ref[0]          # (Nkv, hd) bf16
    vh = v_ref[0]          # (Nkv, hd) bf16

    # scores: contract the head dim directly (no explicit transpose)
    scores = jax.lax.dot_general(
        qh, kh, (((1,), (1,)), ((), ())),
        preferred_element_type=jnp.float32)                       # (Nq, Nkv) f32

    if causal:
        scores = scores + bias_s[...]        # precomputed pad + causal bias
    else:
        scores = scores + pad_ref[0]         # (1, Nkv) pad bias, broadcast

    # explicit softmax: divide goes through the EUP (approx reciprocal)
    m = jnp.max(scores, axis=-1, keepdims=True)
    e = jnp.exp(scores - m)
    s = jnp.sum(e, axis=-1, keepdims=True)
    w = e * pl.reciprocal(s, approx=True)                          # (Nq, Nkv) f32

    attn = jnp.dot(w.astype(jnp.bfloat16), vh,
                   preferred_element_type=jnp.float32)             # (Nq, hd)

    # per-head rows of the output projection, accumulated over heads
    acc_ref[...] += jnp.dot(attn.astype(jnp.bfloat16), wo_ref[...],
                            preferred_element_type=jnp.float32)    # (Nq, d)

    @pl.when(h == nh - 1)
    def _():
        y = acc_ref[...]
        mean = jnp.mean(y, axis=-1, keepdims=True)
        var = jnp.mean((y - mean) ** 2, axis=-1, keepdims=True)
        out_ref[0] = ((y - mean) * jax.lax.rsqrt(var + eps) * gamma_ref[...]
                      + beta_ref[...]).astype(out_ref.dtype)


def _ffn_ln_kernel(x_ref, w1_ref, b1_ref, w2_ref, b2_ref,
                   gamma_ref, beta_ref, out_ref, acc_ref, *, eps):
    """FeedForward (Linear -> ReLU -> Linear) + residual + LN, d_ff tiled.

    grid = (rows//tm, d_ff//tkf); k (d_ff tile) is a reduction axis: partial
    relu(x@w1_k)@w2_k products accumulate into acc_ref.
    """
    k = pl.program_id(1)
    nk = pl.num_programs(1)

    @pl.when(k == 0)
    def _():
        acc_ref[...] = x_ref[...].astype(jnp.float32) + b2_ref[...]

    hdn = jnp.dot(x_ref[...], w1_ref[...],
                  preferred_element_type=jnp.float32) + b1_ref[...]
    hdn = jnp.maximum(hdn, 0.0)
    acc_ref[...] += jnp.dot(hdn.astype(jnp.bfloat16), w2_ref[...],
                            preferred_element_type=jnp.float32)

    @pl.when(k == nk - 1)
    def _():
        y = acc_ref[...]
        mean = jnp.mean(y, axis=-1, keepdims=True)
        var = jnp.mean((y - mean) ** 2, axis=-1, keepdims=True)
        out_ref[...] = ((y - mean) * jax.lax.rsqrt(var + eps) * gamma_ref[...]
                        + beta_ref[...]).astype(out_ref.dtype)


# ----------------------------------------------------------------------------
# Tiling helpers
# ----------------------------------------------------------------------------

def _row_tile(rows):
    """Largest row tile <= 1024 that divides `rows` (falls back to `rows`)."""
    for t in (1024, 512, 256, 128, 64, 32, 16, 8):
        if rows % t == 0:
            return t
    return rows


def _col_tile(cols):
    """Lane-dense (multiple of 128) column tile dividing `cols`."""
    for t in (2048, 1024, 512, 256, 128):
        if cols % t == 0:
            return t
    return cols


# ----------------------------------------------------------------------------
# Wrappers (pallas_call plumbing)
# ----------------------------------------------------------------------------

def linear_rows(x2, w, b, out_dtype):
    """Row- and column-tiled  x2 @ w + b  (x2: (rows, d) bf16, w bf16, b f32)."""
    rows, d = x2.shape
    cols = w.shape[1]
    tm = _row_tile(rows)
    tn = _col_tile(cols)
    out_bytes = 2 if out_dtype == jnp.bfloat16 else 4
    cost = pl.CostEstimate(
        flops=int(2 * rows * d * cols), transcendentals=0,
        bytes_accessed=int(rows * d * 2 + d * cols * 2 * (rows // tm)
                           + rows * cols * out_bytes))
    return pl.pallas_call(
        _linear_kernel,
        out_shape=jax.ShapeDtypeStruct((rows, cols), out_dtype),
        grid=(rows // tm, cols // tn),
        in_specs=[
            pl.BlockSpec((tm, d), lambda i, j: (i, 0)),
            pl.BlockSpec((d, tn), lambda i, j: (0, j)),
            pl.BlockSpec((1, tn), lambda i, j: (0, j)),
        ],
        out_specs=pl.BlockSpec((tm, tn), lambda i, j: (i, j)),
        compiler_params=pltpu.CompilerParams(
            dimension_semantics=("parallel", "parallel")),
        cost_estimate=cost,
    )(x2, w, b)


def mha_add_ln(x_q, x_kv, pad_bias, p, ln_g, ln_b, *, n_heads, causal):
    """LayerNorm(x_q + MHA(x_q, x_kv, x_kv))   (attention maps not emitted).

    x_q:      (B, Nq, d)  bf16 (query input == residual)
    x_kv:     (B, Nkv, d) bf16 (key/value input)
    pad_bias: (B, 1, Nkv) f32 additive key-pad bias (0 or -1e10)
    """
    B, Nq, d = x_q.shape
    Nkv = x_kv.shape[1]
    assert d % n_heads == 0, "d_model must be divisible by n_heads"
    hd = d // n_heads
    assert hd % 128 == 0, "head_dim must be a multiple of 128 for lane-aligned slices"

    # hoisted batched projections (weights streamed once, not per batch element)
    q_p = linear_rows(x_q.reshape(B * Nq, d), p['wq'], p['bq'],
                      jnp.bfloat16).reshape(B, Nq, d)
    kv_p = linear_rows(x_kv.reshape(B * Nkv, d), p['wkv'], p['bkv'],
                       jnp.bfloat16).reshape(B, Nkv, 2 * d)

    kern = functools.partial(_attn_ln_kernel, causal=causal, eps=1e-5)

    scratch = [pltpu.VMEM((Nq, d), jnp.float32)]
    if causal:
        scratch.append(pltpu.VMEM((Nq, Nkv), jnp.float32))   # combined bias

    cost = pl.CostEstimate(
        flops=int(2 * B * n_heads * (2 * Nq * Nkv * hd + Nq * hd * d)),
        transcendentals=int(B * n_heads * Nq * Nkv),
        bytes_accessed=int(B * (2 * Nq * d * 2 + Nq * d * 2 + Nkv * 2 * d * 2
                                + Nkv * 4) + B * d * d * 2))

    out = pl.pallas_call(
        kern,
        out_shape=jax.ShapeDtypeStruct((B, Nq, d), jnp.bfloat16),
        grid=(B, n_heads),
        in_specs=[
            pl.BlockSpec((1, Nq, d), lambda b, h: (b, 0, 0)),               # residual
            pl.BlockSpec((1, Nq, hd), lambda b, h: (b, 0, h)),              # q head
            pl.BlockSpec((1, Nkv, hd), lambda b, h: (b, 0, h)),             # k head
            pl.BlockSpec((1, Nkv, hd), lambda b, h: (b, 0, n_heads + h)),   # v head
            pl.BlockSpec((1, 1, Nkv), lambda b, h: (b, 0, 0)),              # pad bias
            pl.BlockSpec((hd, d), lambda b, h: (h, 0)),                     # Wo rows
            pl.BlockSpec((1, d), lambda b, h: (0, 0)),                      # bo
            pl.BlockSpec((1, d), lambda b, h: (0, 0)),                      # gamma
            pl.BlockSpec((1, d), lambda b, h: (0, 0)),                      # beta
        ],
        out_specs=pl.BlockSpec((1, Nq, d), lambda b, h: (b, 0, 0)),
        scratch_shapes=scratch,
        compiler_params=pltpu.CompilerParams(
            dimension_semantics=("parallel", "arbitrary")),
        cost_estimate=cost,
    )(x_q, q_p, kv_p, kv_p, pad_bias, p['wo'], p['bo'], ln_g, ln_b)
    return out
    # TODO(synk): flash-attention style (q-tile, kv-tile) online-softmax variant
    # (bounds the (Nq, Nkv) score tile for long sequences / v7x 64 MiB VMEM) and
    # head-pair blocking for the 256-wide MXU on v6e/v7x.


def ffn_add_ln(x, p, ln_g, ln_b):
    """LayerNorm(x + FFN(x)), row-tiled over (B*N) and tiled over d_ff."""
    B, N, d = x.shape
    d_ff = p['w1'].shape[1]
    rows = B * N
    tm = _row_tile(rows)
    tkf = _col_tile(d_ff)
    x2 = x.reshape(rows, d)
    cost = pl.CostEstimate(
        flops=int(4 * rows * d * d_ff), transcendentals=0,
        bytes_accessed=int(2 * rows * d * 2
                           + 2 * d * d_ff * 2 * (rows // tm)))
    out = pl.pallas_call(
        functools.partial(_ffn_ln_kernel, eps=1e-5),
        out_shape=jax.ShapeDtypeStruct((rows, d), jnp.bfloat16),
        grid=(rows // tm, d_ff // tkf),
        in_specs=[
            pl.BlockSpec((tm, d), lambda i, k: (i, 0)),
            pl.BlockSpec((d, tkf), lambda i, k: (0, k)),
            pl.BlockSpec((1, tkf), lambda i, k: (0, k)),
            pl.BlockSpec((tkf, d), lambda i, k: (k, 0)),
            pl.BlockSpec((1, d), lambda i, k: (0, 0)),
            pl.BlockSpec((1, d), lambda i, k: (0, 0)),
            pl.BlockSpec((1, d), lambda i, k: (0, 0)),
        ],
        out_specs=pl.BlockSpec((tm, d), lambda i, k: (i, 0)),
        scratch_shapes=[pltpu.VMEM((tm, d), jnp.float32)],
        compiler_params=pltpu.CompilerParams(
            dimension_semantics=("parallel", "arbitrary")),
        cost_estimate=cost,
    )(x2, p['w1'], p['b1'], p['w2'], p['b2'], ln_g, ln_b)
    return out.reshape(B, N, d)


def linear_out(x, w, b):
    """Vocab projection (f32 logits), tiled over rows and vocab columns."""
    B, N, d = x.shape
    V = w.shape[1]
    out = linear_rows(x.reshape(B * N, d), w, b, jnp.float32)
    return out.reshape(B, N, V)


# ----------------------------------------------------------------------------
# Parameter construction (deterministic, mirrors nn.Module __init__ shapes)
# ----------------------------------------------------------------------------

def _xavier(key, shape, dtype=jnp.float32, scale=1.0):
    fan_in, fan_out = shape
    limit = math.sqrt(6.0 / (fan_in + fan_out))
    w = jax.random.uniform(key, shape, jnp.float32, -limit, limit) * scale
    return w.astype(dtype)


def _mha_params(key, d_model, inv_scale):
    ks = jax.random.split(key, 4)
    bf = jnp.bfloat16
    # 1/scale is folded into Wq/bq (exact: (xW + b)/s == x(W/s) + b/s); Wk and
    # Wv are fused column-wise into one (d, 2d) weight for a single wide matmul.
    wk = _xavier(ks[1], (d_model, d_model), bf)
    wv = _xavier(ks[2], (d_model, d_model), bf)
    return {
        'wq': _xavier(ks[0], (d_model, d_model), bf, scale=inv_scale),
        'bq': jnp.zeros((1, d_model), jnp.float32),
        'wkv': jnp.concatenate([wk, wv], axis=1),
        'bkv': jnp.zeros((1, 2 * d_model), jnp.float32),
        'wo': _xavier(ks[3], (d_model, d_model), bf),
        'bo': jnp.zeros((1, d_model), jnp.float32),
    }


def _ff_params(key, d_model, d_ff):
    k1, k2 = jax.random.split(key)
    bf = jnp.bfloat16
    return {
        'w1': _xavier(k1, (d_model, d_ff), bf), 'b1': jnp.zeros((1, d_ff), jnp.float32),
        'w2': _xavier(k2, (d_ff, d_model), bf), 'b2': jnp.zeros((1, d_model), jnp.float32),
    }


def _ln_params(d_model):
    return jnp.ones((1, d_model), jnp.float32), jnp.zeros((1, d_model), jnp.float32)


def init_params(key, vocab_size, max_len, n_layers, d_model, d_ff, n_heads):
    inv_scale = 1.0 / math.sqrt(float(d_model) / n_heads)
    keys = jax.random.split(key, 4 + 4 * n_layers)
    params = {
        'emb': _xavier(keys[0], (vocab_size, d_model)),
        'enc_pos': _xavier(keys[1], (max_len, d_model)),
        'dec_pos': _xavier(keys[2], (max_len, d_model)),
        'fc_out_w': _xavier(keys[3], (d_model, vocab_size), jnp.bfloat16),
        'fc_out_b': jnp.zeros((1, vocab_size), jnp.float32),
        'enc_layers': [],
        'dec_layers': [],
    }
    ki = 4
    for _ in range(n_layers):
        g1, b1 = _ln_params(d_model)
        g2, b2 = _ln_params(d_model)
        params['enc_layers'].append({
            'self': _mha_params(keys[ki], d_model, inv_scale),
            'ff': _ff_params(keys[ki + 1], d_model, d_ff),
            'ln1_g': g1, 'ln1_b': b1, 'ln2_g': g2, 'ln2_b': b2,
        })
        ki += 2
    for _ in range(n_layers):
        g1, b1 = _ln_params(d_model)
        g2, b2 = _ln_params(d_model)
        g3, b3 = _ln_params(d_model)
        params['dec_layers'].append({
            'self': _mha_params(keys[ki], d_model, inv_scale),
            'cross': _mha_params(jax.random.fold_in(keys[ki], 7), d_model, inv_scale),
            'ff': _ff_params(keys[ki + 1], d_model, d_ff),
            'ln1_g': g1, 'ln1_b': b1, 'ln2_g': g2, 'ln2_b': b2,
            'ln3_g': g3, 'ln3_b': b3,
        })
        ki += 2
    return params


# ----------------------------------------------------------------------------
# Full forward pass (mask building / embedding gather = glue, rest = Pallas)
# ----------------------------------------------------------------------------

def transformer_forward(src, trg, params, *, n_heads, pad_idx):
    d_model = params['emb'].shape[1]
    scale_emb = math.sqrt(float(d_model))

    B, Ns = src.shape
    Nt = trg.shape[1]

    # additive pad biases over keys (0 = keep, -1e10 = masked); the causal mask
    # for decoder self-attention is generated inside the kernel with iota.
    neg = jnp.float32(-1e10)
    src_bias = jnp.where(src == pad_idx, neg, jnp.float32(0.0))[:, None, :]  # (B,1,Ns)
    trg_bias = jnp.where(trg == pad_idx, neg, jnp.float32(0.0))[:, None, :]  # (B,1,Nt)

    # embeddings (gather = glue); dropout is identity (eval mode); activations bf16
    x = (scale_emb * jnp.take(params['emb'], src, axis=0)
         + params['enc_pos'][None, :Ns, :]).astype(jnp.bfloat16)

    # --- encoder ---
    for lp in params['enc_layers']:
        x = mha_add_ln(x, x, src_bias, lp['self'], lp['ln1_g'], lp['ln1_b'],
                       n_heads=n_heads, causal=False)
        x = ffn_add_ln(x, lp['ff'], lp['ln2_g'], lp['ln2_b'])
    enc_out = x

    # --- decoder ---
    y = (scale_emb * jnp.take(params['emb'], trg, axis=0)
         + params['dec_pos'][None, :Nt, :]).astype(jnp.bfloat16)
    for lp in params['dec_layers']:
        y = mha_add_ln(y, y, trg_bias, lp['self'], lp['ln1_g'], lp['ln1_b'],
                       n_heads=n_heads, causal=True)
        y = mha_add_ln(y, enc_out, src_bias, lp['cross'], lp['ln2_g'], lp['ln2_b'],
                       n_heads=n_heads, causal=False)
        y = ffn_add_ln(y, lp['ff'], lp['ln3_g'], lp['ln3_b'])

    out = linear_out(y, params['fc_out_w'], params['fc_out_b'])

    # atten_map_save=False in the reference forward -> empty attention stacks.
    # TODO(synk): atten_map_save=True path (materializing per-layer attention
    # maps) is intentionally not emitted to avoid dead HBM writeback.
    empty = jnp.zeros((0,), jnp.float32)
    return out, empty, empty, empty


# ----------------------------------------------------------------------------
# Demo
# ----------------------------------------------------------------------------

if __name__ == "__main__":
    # small synthetic config (HF tokenizer vocab replaced by a constant);
    # shapes chosen lane-dense: d_model/d_ff/vocab multiples of 128, head_dim=128.
    VOCAB = 256
    PAD_IDX = 1
    MAX_LEN = 16
    N_LAYERS = 2
    D_MODEL = 256
    D_FF = 512
    N_HEADS = 2          # head_dim = 128 (lane-aligned per-head slices)
    B, NS, NT = 2, 8, 8

    key = jax.random.PRNGKey(0)
    k_params, k_src, k_trg = jax.random.split(key, 3)

    params = init_params(k_params, VOCAB, MAX_LEN, N_LAYERS, D_MODEL, D_FF, N_HEADS)

    src = jax.random.randint(k_src, (B, NS), 2, VOCAB, dtype=jnp.int32)
    trg = jax.random.randint(k_trg, (B, NT), 2, VOCAB, dtype=jnp.int32)
    # trailing padding, as in real batches
    src = src.at[:, -2:].set(PAD_IDX)
    trg = trg.at[:, -1:].set(PAD_IDX)

    fwd = jax.jit(functools.partial(transformer_forward,
                                    n_heads=N_HEADS, pad_idx=PAD_IDX))
    out, a_enc, a_dec, a_ed = fwd(src, trg, params)
    jax.block_until_ready(out)

    assert out.shape == (B, NT, VOCAB), out.shape
    assert jnp.all(jnp.isfinite(out))
    print("KERNEL_OK")
</pallas_src>

<mosaic_0001>
module attributes {stable_mosaic.version = 11 : i64} {
  func.func @_linear_kernel(%arg0: i32, %arg1: i32, %arg2: memref<16x256xbf16, #tpu.memory_space<vmem>>, %arg3: memref<256x512xbf16, #tpu.memory_space<vmem>>, %arg4: memref<1x512xf32, #tpu.memory_space<vmem>>, %arg5: memref<16x512xbf16, #tpu.memory_space<vmem>>) attributes {dimension_semantics = [#tpu.dimension_semantics<parallel>, #tpu.dimension_semantics<parallel>], iteration_bounds = array<i64: 1, 1>, scalar_prefetch = 0 : i64, scratch_operands = 0 : i64, tpu.core_type = #tpu.core_type<tc>, window_params = [{transform_indices = @transform_0, window_bounds = array<i64: 16, 256>}, {transform_indices = @transform_1, window_bounds = array<i64: 256, 512>}, {transform_indices = @transform_2, window_bounds = array<i64: 1, 512>}, {transform_indices = @transform_3, window_bounds = array<i64: 16, 512>}]} {
    %c0 = arith.constant 0 : index
    %c0_0 = arith.constant 0 : index
    %0 = vector.load %arg2[%c0, %c0_0] : memref<16x256xbf16, #tpu.memory_space<vmem>>, vector<16x256xbf16>
    %c0_1 = arith.constant 0 : index
    %c0_2 = arith.constant 0 : index
    %1 = vector.load %arg3[%c0_1, %c0_2] : memref<256x512xbf16, #tpu.memory_space<vmem>>, vector<256x512xbf16>
    %cst = arith.constant dense<0.000000e+00> : vector<16x512xf32>
    %2 = tpu.matmul %0, %1, %cst {dimension_numbers = #tpu.dot_dimension_numbers<[1], [0], [0], [1], [0, 0, 1, 1], [], []>} : vector<16x256xbf16>, vector<256x512xbf16>, vector<16x512xf32> -> vector<16x512xf32>
    %c0_3 = arith.constant 0 : index
    %c0_4 = arith.constant 0 : index
    %3 = vector.load %arg4[%c0_3, %c0_4] : memref<1x512xf32, #tpu.memory_space<vmem>>, vector<1x512xf32>
    %4 = vector.broadcast %3 : vector<1x512xf32> to vector<16x512xf32>
    %5 = arith.addf %2, %4 : vector<16x512xf32>
    %6 = arith.truncf %5 : vector<16x512xf32> to vector<16x512xbf16>
    %c0_5 = arith.constant 0 : index
    %c0_6 = arith.constant 0 : index
    %7 = vector.load %arg5[%c0_5, %c0_6] : memref<16x512xbf16, #tpu.memory_space<vmem>>, vector<16x512xbf16>
    tpu.vector_store %arg5[%c0_5, %c0_6], %6 {strides = array<i32>} : memref<16x512xbf16, #tpu.memory_space<vmem>>, vector<16x512xbf16>,
    return
  }
  func.func @transform_0(%arg0: i32, %arg1: i32) -> (i32, i32) {
    %c0_i32 = arith.constant 0 : i32
    %c0_i32_0 = arith.constant 0 : i32
    return %arg0, %c0_i32 : i32, i32
  }
  func.func @transform_1(%arg0: i32, %arg1: i32) -> (i32, i32) {
    %c0_i32 = arith.constant 0 : i32
    %c0_i32_0 = arith.constant 0 : i32
    return %c0_i32, %arg1 : i32, i32
  }
  func.func @transform_2(%arg0: i32, %arg1: i32) -> (i32, i32) {
    %c0_i32 = arith.constant 0 : i32
    %c0_i32_0 = arith.constant 0 : i32
    return %c0_i32, %arg1 : i32, i32
  }
  func.func @transform_3(%arg0: i32, %arg1: i32) -> (i32, i32) {
    %c0_i32 = arith.constant 0 : i32
    return %arg0, %arg1 : i32, i32
  }
}

module attributes {stable_mosaic.version = 11 : i64} {
  func.func @_linear_kernel(%arg0: i32, %arg1: i32, %arg2: memref<16x256xbf16, #tpu.memory_space<vmem>>, %arg3: memref<256x256xbf16, #tpu.memory_space<vmem>>, %arg4: memref<1x256xf32, #tpu.memory_space<vmem>>, %arg5: memref<16x256xbf16, #tpu.memory_space<vmem>>) attributes {dimension_semantics = [#tpu.dimension_semantics<parallel>, #tpu.dimension_semantics<parallel>], iteration_bounds = array<i64: 1, 1>, scalar_prefetch = 0 : i64, scratch_operands = 0 : i64, tpu.core_type = #tpu.core_type<tc>, window_params = [{transform_indices = @transform_0, window_bounds = array<i64: 16, 256>}, {transform_indices = @transform_1, window_bounds = array<i64: 256, 256>}, {transform_indices = @transform_2, window_bounds = array<i64: 1, 256>}, {transform_indices = @transform_3, window_bounds = array<i64: 16, 256>}]} {
    %c0 = arith.constant 0 : index
    %c0_0 = arith.constant 0 : index
    %0 = vector.load %arg2[%c0, %c0_0] : memref<16x256xbf16, #tpu.memory_space<vmem>>, vector<16x256xbf16>
    %c0_1 = arith.constant 0 : index
    %c0_2 = arith.constant 0 : index
    %1 = vector.load %arg3[%c0_1, %c0_2] : memref<256x256xbf16, #tpu.memory_space<vmem>>, vector<256x256xbf16>
    %cst = arith.constant dense<0.000000e+00> : vector<16x256xf32>
    %2 = tpu.matmul %0, %1, %cst {dimension_numbers = #tpu.dot_dimension_numbers<[1], [0], [0], [1], [0, 0, 1, 1], [], []>} : vector<16x256xbf16>, vector<256x256xbf16>, vector<16x256xf32> -> vector<16x256xf32>
    %c0_3 = arith.constant 0 : index
    %c0_4 = arith.constant 0 : index
    %3 = vector.load %arg4[%c0_3, %c0_4] : memref<1x256xf32, #tpu.memory_space<vmem>>, vector<1x256xf32>
    %4 = vector.broadcast %3 : vector<1x256xf32> to vector<16x256xf32>
    %5 = arith.addf %2, %4 : vector<16x256xf32>
    %6 = arith.truncf %5 : vector<16x256xf32> to vector<16x256xbf16>
    %c0_5 = arith.constant 0 : index
    %c0_6 = arith.constant 0 : index
    %7 = vector.load %arg5[%c0_5, %c0_6] : memref<16x256xbf16, #tpu.memory_space<vmem>>, vector<16x256xbf16>
    tpu.vector_store %arg5[%c0_5, %c0_6], %6 {strides = array<i32>} : memref<16x256xbf16, #tpu.memory_space<vmem>>, vector<16x256xbf16>,
    return
  }
  func.func @transform_0(%arg0: i32, %arg1: i32) -> (i32, i32) {
    %c0_i32 = arith.constant 0 : i32
    %c0_i32_0 = arith.constant 0 : i32
    return %arg0, %c0_i32 : i32, i32
  }
  func.func @transform_1(%arg0: i32, %arg1: i32) -> (i32, i32) {
    %c0_i32 = arith.constant 0 : i32
    %c0_i32_0 = arith.constant 0 : i32
    return %c0_i32, %arg1 : i32, i32
  }
  func.func @transform_2(%arg0: i32, %arg1: i32) -> (i32, i32) {
    %c0_i32 = arith.constant 0 : i32
    %c0_i32_0 = arith.constant 0 : i32
    return %c0_i32, %arg1 : i32, i32
  }
  func.func @transform_3(%arg0: i32, %arg1: i32) -> (i32, i32) {
    %c0_i32 = arith.constant 0 : i32
    return %arg0, %arg1 : i32, i32
  }
}

module attributes {stable_mosaic.version = 11 : i64} {
  func.func @_attn_ln_kernel(%arg0: i32, %arg1: i32, %arg2: memref<1x8x256xbf16, #tpu.memory_space<vmem>>, %arg3: memref<1x8x128xbf16, #tpu.memory_space<vmem>>, %arg4: memref<1x8x128xbf16, #tpu.memory_space<vmem>>, %arg5: memref<1x8x128xbf16, #tpu.memory_space<vmem>>, %arg6: memref<1x1x8xf32, #tpu.memory_space<vmem>>, %arg7: memref<128x256xbf16, #tpu.memory_space<vmem>>, %arg8: memref<1x256xf32, #tpu.memory_space<vmem>>, %arg9: memref<1x256xf32, #tpu.memory_space<vmem>>, %arg10: memref<1x256xf32, #tpu.memory_space<vmem>>, %arg11: memref<1x8x256xbf16, #tpu.memory_space<vmem>>, %arg12: memref<8x256xf32, #tpu.memory_space<vmem>>, %arg13: memref<8x8xf32, #tpu.memory_space<vmem>>) attributes {dimension_semantics = [#tpu.dimension_semantics<parallel>, #tpu.dimension_semantics<arbitrary>], iteration_bounds = array<i64: 2, 2>, scalar_prefetch = 0 : i64, scratch_operands = 2 : i64, tpu.core_type = #tpu.core_type<tc>, window_params = [{transform_indices = @transform_0, window_bounds = array<i64: 1, 8, 256>}, {transform_indices = @transform_1, window_bounds = array<i64: 1, 8, 128>}, {transform_indices = @transform_2, window_bounds = array<i64: 1, 8, 128>}, {transform_indices = @transform_3, window_bounds = array<i64: 1, 8, 128>}, {transform_indices = @transform_4, window_bounds = array<i64: 1, 1, 8>}, {transform_indices = @transform_5, window_bounds = array<i64: 128, 256>}, {pipeline_mode = #tpu.pipeline_mode<synchronous>, transform_indices = @transform_6, window_bounds = array<i64: 1, 256>}, {pipeline_mode = #tpu.pipeline_mode<synchronous>, transform_indices = @transform_7, window_bounds = array<i64: 1, 256>}, {pipeline_mode = #tpu.pipeline_mode<synchronous>, transform_indices = @transform_8, window_bounds = array<i64: 1, 256>}, {transform_indices = @transform_9, window_bounds = array<i64: 1, 8, 256>}]} {
    %c0_i32 = arith.constant 0 : i32
    %0 = arith.cmpi eq, %arg1, %c0_i32 : i32
    %1 = arith.extui %0 : i1 to i32
    %c0_i32_0 = arith.constant 0 : i32
    %2 = arith.cmpi ne, %1, %c0_i32_0 : i32
    scf.if %2 {
      %c0_22 = arith.constant 0 : index
      %c0_23 = arith.constant 0 : index
      %c0_24 = arith.constant 0 : index
      %33 = vector.load %arg2[%c0_22, %c0_23, %c0_24] : memref<1x8x256xbf16, #tpu.memory_space<vmem>>, vector<1x8x256xbf16>
      %34 = vector.shape_cast %33 : vector<1x8x256xbf16> to vector<8x256xbf16>
      %35 = arith.extf %34 : vector<8x256xbf16> to vector<8x256xf32>
      %c0_25 = arith.constant 0 : index
      %c0_26 = arith.constant 0 : index
      %36 = vector.load %arg8[%c0_25, %c0_26] : memref<1x256xf32, #tpu.memory_space<vmem>>, vector<1x256xf32>
      %37 = vector.broadcast %36 : vector<1x256xf32> to vector<8x256xf32>
      %38 = arith.addf %35, %37 : vector<8x256xf32>
      %c0_27 = arith.constant 0 : index
      %c0_28 = arith.constant 0 : index
      %39 = vector.load %arg12[%c0_27, %c0_28] : memref<8x256xf32, #tpu.memory_space<vmem>>, vector<8x256xf32>
      tpu.vector_store %arg12[%c0_27, %c0_28], %38 {strides = array<i32>} : memref<8x256xf32, #tpu.memory_space<vmem>>, vector<8x256xf32>,
      %40 = tpu.iota {dimensions = array<i32: 0>} : vector<8x8xi32>
      %41 = tpu.iota {dimensions = array<i32: 1>} : vector<8x8xi32>
      %c0_29 = arith.constant 0 : index
      %c0_30 = arith.constant 0 : index
      %c0_31 = arith.constant 0 : index
      %42 = vector.load %arg6[%c0_29, %c0_30, %c0_31] : memref<1x1x8xf32, #tpu.memory_space<vmem>>, vector<1x1x8xf32>
      %43 = vector.shape_cast %42 : vector<1x1x8xf32> to vector<1x8xf32>
      %44 = arith.cmpi sgt, %41, %40 : vector<8x8xi32>
      %cst_32 = arith.constant -1.000000e+10 : f32
      %cst_33 = arith.constant 0.000000e+00 : f32
      %45 = vector.broadcast %cst_32 : f32 to vector<8x8xf32>
      %46 = vector.broadcast %cst_33 : f32 to vector<8x8xf32>
      %47 = arith.select %44, %45, %46 : vector<8x8xi1>, vector<8x8xf32>
      %48 = vector.broadcast %43 : vector<1x8xf32> to vector<8x8xf32>
      %49 = arith.addf %48, %47 : vector<8x8xf32>
      %c0_34 = arith.constant 0 : index
      %c0_35 = arith.constant 0 : index
      %50 = vector.load %arg13[%c0_34, %c0_35] : memref<8x8xf32, #tpu.memory_space<vmem>>, vector<8x8xf32>
      tpu.vector_store %arg13[%c0_34, %c0_35], %49 {strides = array<i32>} : memref<8x8xf32, #tpu.memory_space<vmem>>, vector<8x8xf32>,
    } else {
    }
    %c0 = arith.constant 0 : index
    %c0_1 = arith.constant 0 : index
    %c0_2 = arith.constant 0 : index
    %3 = vector.load %arg3[%c0, %c0_1, %c0_2] : memref<1x8x128xbf16, #tpu.memory_space<vmem>>, vector<1x8x128xbf16>
    %4 = vector.shape_cast %3 : vector<1x8x128xbf16> to vector<8x128xbf16>
    %c0_3 = arith.constant 0 : index
    %c0_4 = arith.constant 0 : index
    %c0_5 = arith.constant 0 : index
    %5 = vector.load %arg4[%c0_3, %c0_4, %c0_5] : memref<1x8x128xbf16, #tpu.memory_space<vmem>>, vector<1x8x128xbf16>
    %6 = vector.shape_cast %5 : vector<1x8x128xbf16> to vector<8x128xbf16>
    %c0_6 = arith.constant 0 : index
    %c0_7 = arith.constant 0 : index
    %c0_8 = arith.constant 0 : index
    %7 = vector.load %arg5[%c0_6, %c0_7, %c0_8] : memref<1x8x128xbf16, #tpu.memory_space<vmem>>, vector<1x8x128xbf16>
    %8 = vector.shape_cast %7 : vector<1x8x128xbf16> to vector<8x128xbf16>
    %cst = arith.constant dense<0.000000e+00> : vector<8x8xf32>
    %9 = tpu.matmul %4, %6, %cst {dimension_numbers = #tpu.dot_dimension_numbers<[1], [1], [0], [0], [0, 0, 1, 0], [], []>} : vector<8x128xbf16>, vector<8x128xbf16>, vector<8x8xf32> -> vector<8x8xf32>
    %c0_9 = arith.constant 0 : index
    %c0_10 = arith.constant 0 : index
    %10 = vector.load %arg13[%c0_9, %c0_10] : memref<8x8xf32, #tpu.memory_space<vmem>>, vector<8x8xf32>
    %11 = arith.addf %9, %10 : vector<8x8xf32>
    %cst_11 = arith.constant dense<0xFF800000> : vector<8xf32>
    %12 = vector.multi_reduction <maximumf>, %11, %cst_11 [1] : vector<8x8xf32> to vector<8xf32>
    %13 = vector.shape_cast %12 : vector<8xf32> to vector<8x1xf32>
    %14 = vector.broadcast %13 : vector<8x1xf32> to vector<8x8xf32>
    %15 = arith.subf %11, %14 : vector<8x8xf32>
    %16 = math.exp %15 : vector<8x8xf32>
    %cst_12 = arith.constant dense<0.000000e+00> : vector<8xf32>
    %17 = vector.multi_reduction <add>, %16, %cst_12 [1] : vector<8x8xf32> to vector<8xf32>
    %18 = vector.shape_cast %17 : vector<8xf32> to vector<8x1xf32>
    %19 = tpu.reciprocal %18 {approx = true} : vector<8x1xf32> -> vector<8x1xf32>
    %20 = vector.broadcast %19 : vector<8x1xf32> to vector<8x8xf32>
    %21 = arith.mulf %16, %20 : vector<8x8xf32>
    %22 = arith.truncf %21 : vector<8x8xf32> to vector<8x8xbf16>
    %cst_13 = arith.constant dense<0.000000e+00> : vector<8x128xf32>
    %23 = tpu.matmul %22, %8, %cst_13 {dimension_numbers = #tpu.dot_dimension_numbers<[1], [0], [0], [1], [0, 0, 1, 1], [], []>} : vector<8x8xbf16>, vector<8x128xbf16>, vector<8x128xf32> -> vector<8x128xf32>
    %c0_14 = arith.constant 0 : index
    %c0_15 = arith.constant 0 : index
    %24 = vector.load %arg12[%c0_14, %c0_15] : memref<8x256xf32, #tpu.memory_space<vmem>>, vector<8x256xf32>
    %25 = arith.truncf %23 : vector<8x128xf32> to vector<8x128xbf16>
    %c0_16 = arith.constant 0 : index
    %c0_17 = arith.constant 0 : index
    %26 = vector.load %arg7[%c0_16, %c0_17] : memref<128x256xbf16, #tpu.memory_space<vmem>>, vector<128x256xbf16>
    %cst_18 = arith.constant dense<0.000000e+00> : vector<8x256xf32>
    %27 = tpu.matmul %25, %26, %cst_18 {dimension_numbers = #tpu.dot_dimension_numbers<[1], [0], [0], [1], [0, 0, 1, 1], [], []>} : vector<8x128xbf16>, vector<128x256xbf16>, vector<8x256xf32> -> vector<8x256xf32>
    %28 = arith.addf %24, %27 : vector<8x256xf32>
    %c0_19 = arith.constant 0 : index
    %c0_20 = arith.constant 0 : index
    %29 = vector.load %arg12[%c0_19, %c0_20] : memref<8x256xf32, #tpu.memory_space<vmem>>, vector<8x256xf32>
    tpu.vector_store %arg12[%c0_19, %c0_20], %28 {strides = array<i32>} : memref<8x256xf32, #tpu.memory_space<vmem>>, vector<8x256xf32>,
    %c1_i32 = arith.constant 1 : i32
    %30 = arith.cmpi eq, %arg1, %c1_i32 : i32
    %31 = arith.extui %30 : i1 to i32
    %c0_i32_21 = arith.constant 0 : i32
    %32 = arith.cmpi ne, %31, %c0_i32_21 : i32
    scf.if %32 {
      %c0_22 = arith.constant 0 : index
      %c0_23 = arith.constant 0 : index
      %33 = vector.load %arg12[%c0_22, %c0_23] : memref<8x256xf32, #tpu.memory_space<vmem>>, vector<8x256xf32>
      %cst_24 = arith.constant dense<0.000000e+00> : vector<8xf32>
      %34 = vector.multi_reduction <add>, %33, %cst_24 [1] : vector<8x256xf32> to vector<8xf32>
      %35 = vector.shape_cast %34 : vector<8xf32> to vector<8x1xf32>
      %cst_25 = arith.constant 2.560000e+02 : f32
      %36 = vector.broadcast %cst_25 : f32 to vector<8x1xf32>
      %37 = arith.divf %35, %36 : vector<8x1xf32>
      %38 = vector.broadcast %37 : vector<8x1xf32> to vector<8x256xf32>
      %39 = arith.subf %33, %38 : vector<8x256xf32>
      %40 = arith.mulf %39, %39 : vector<8x256xf32>
      %cst_26 = arith.constant dense<0.000000e+00> : vector<8xf32>
      %41 = vector.multi_reduction <add>, %40, %cst_26 [1] : vector<8x256xf32> to vector<8xf32>
      %42 = vector.shape_cast %41 : vector<8xf32> to vector<8x1xf32>
      %cst_27 = arith.constant 2.560000e+02 : f32
      %43 = vector.broadcast %cst_27 : f32 to vector<8x1xf32>
      %44 = arith.divf %42, %43 : vector<8x1xf32>
      %45 = vector.broadcast %37 : vector<8x1xf32> to vector<8x256xf32>
      %46 = arith.subf %33, %45 : vector<8x256xf32>
      %cst_28 = arith.constant 9.99999974E-6 : f32
      %47 = vector.broadcast %cst_28 : f32 to vector<8x1xf32>
      %48 = arith.addf %44, %47 : vector<8x1xf32>
      %49 = math.rsqrt %48 : vector<8x1xf32>
      %50 = vector.broadcast %49 : vector<8x1xf32> to vector<8x256xf32>
      %51 = arith.mulf %46, %50 : vector<8x256xf32>
      %c0_29 = arith.constant 0 : index
      %c0_30 = arith.constant 0 : index
      %52 = vector.load %arg9[%c0_29, %c0_30] : memref<1x256xf32, #tpu.memory_space<vmem>>, vector<1x256xf32>
      %53 = vector.broadcast %52 : vector<1x256xf32> to vector<8x256xf32>
      %54 = arith.mulf %51, %53 : vector<8x256xf32>
      %c0_31 = arith.constant 0 : index
      %c0_32 = arith.constant 0 : index
      %55 = vector.load %arg10[%c0_31, %c0_32] : memref<1x256xf32, #tpu.memory_space<vmem>>, vector<1x256xf32>
      %56 = vector.broadcast %55 : vector<1x256xf32> to vector<8x256xf32>
      %57 = arith.addf %54, %56 : vector<8x256xf32>
      %58 = arith.truncf %57 : vector<8x256xf32> to vector<8x256xbf16>
      %c0_33 = arith.constant 0 : index
      %c0_34 = arith.constant 0 : index
      %c0_35 = arith.constant 0 : index
      %59 = vector.load %arg11[%c0_33, %c0_34, %c0_35] : memref<1x8x256xbf16, #tpu.memory_space<vmem>>, vector<1x8x256xbf16>
      %60 = vector.shape_cast %59 : vector<1x8x256xbf16> to vector<8x256xbf16>
      %61 = vector.shape_cast %58 : vector<8x256xbf16> to vector<1x8x256xbf16>
      tpu.vector_store %arg11[%c0_33, %c0_34, %c0_35], %61 {strides = array<i32>} : memref<1x8x256xbf16, #tpu.memory_space<vmem>>, vector<1x8x256xbf16>,
    } else {
    }
    return
  }
  func.func @transform_0(%arg0: i32, %arg1: i32) -> (i32, i32, i32) {
    %c0_i32 = arith.constant 0 : i32
    %c0_i32_0 = arith.constant 0 : i32
    %c0_i32_1 = arith.constant 0 : i32
    return %arg0, %c0_i32, %c0_i32_0 : i32, i32, i32
  }
  func.func @transform_1(%arg0: i32, %arg1: i32) -> (i32, i32, i32) {
    %c0_i32 = arith.constant 0 : i32
    %c0_i32_0 = arith.constant 0 : i32
    return %arg0, %c0_i32, %arg1 : i32, i32, i32
  }
  func.func @transform_2(%arg0: i32, %arg1: i32) -> (i32, i32, i32) {
    %c0_i32 = arith.constant 0 : i32
    %c0_i32_0 = arith.constant 0 : i32
    return %arg0, %c0_i32, %arg1 : i32, i32, i32
  }
  func.func @transform_3(%arg0: i32, %arg1: i32) -> (i32, i32, i32) {
    %c2_i32 = arith.constant 2 : i32
    %0 = arith.addi %c2_i32, %arg1 : i32
    %c0_i32 = arith.constant 0 : i32
    %c0_i32_0 = arith.constant 0 : i32
    return %arg0, %c0_i32, %0 : i32, i32, i32
  }
  func.func @transform_4(%arg0: i32, %arg1: i32) -> (i32, i32, i32) {
    %c0_i32 = arith.constant 0 : i32
    %c0_i32_0 = arith.constant 0 : i32
    %c0_i32_1 = arith.constant 0 : i32
    return %arg0, %c0_i32, %c0_i32_0 : i32, i32, i32
  }
  func.func @transform_5(%arg0: i32, %arg1: i32) -> (i32, i32) {
    %c0_i32 = arith.constant 0 : i32
    %c0_i32_0 = arith.constant 0 : i32
    return %arg1, %c0_i32 : i32, i32
  }
  func.func @transform_6(%arg0: i32, %arg1: i32) -> (i32, i32) {
    %c0_i32 = arith.constant 0 : i32
    %c0_i32_0 = arith.constant 0 : i32
    %c0_i32_1 = arith.constant 0 : i32
    return %c0_i32, %c0_i32_0 : i32, i32
  }
  func.func @transform_7(%arg0: i32, %arg1: i32) -> (i32, i32) {
    %c0_i32 = arith.constant 0 : i32
    %c0_i32_0 = arith.constant 0 : i32
    %c0_i32_1 = arith.constant 0 : i32
    return %c0_i32, %c0_i32_0 : i32, i32
  }
  func.func @transform_8(%arg0: i32, %arg1: i32) -> (i32, i32) {
    %c0_i32 = arith.constant 0 : i32
    %c0_i32_0 = arith.constant 0 : i32
    %c0_i32_1 = arith.constant 0 : i32
    return %c0_i32, %c0_i32_0 : i32, i32
  }
  func.func @transform_9(%arg0: i32, %arg1: i32) -> (i32, i32, i32) {
    %c0_i32 = arith.constant 0 : i32
    %c0_i32_0 = arith.constant 0 : i32
    %c0_i32_1 = arith.constant 0 : i32
    return %arg0, %c0_i32, %c0_i32_0 : i32, i32, i32
  }
}

module attributes {stable_mosaic.version = 11 : i64} {
  func.func @_attn_ln_kernel(%arg0: i32, %arg1: i32, %arg2: memref<1x8x256xbf16, #tpu.memory_space<vmem>>, %arg3: memref<1x8x128xbf16, #tpu.memory_space<vmem>>, %arg4: memref<1x8x128xbf16, #tpu.memory_space<vmem>>, %arg5: memref<1x8x128xbf16, #tpu.memory_space<vmem>>, %arg6: memref<1x1x8xf32, #tpu.memory_space<vmem>>, %arg7: memref<128x256xbf16, #tpu.memory_space<vmem>>, %arg8: memref<1x256xf32, #tpu.memory_space<vmem>>, %arg9: memref<1x256xf32, #tpu.memory_space<vmem>>, %arg10: memref<1x256xf32, #tpu.memory_space<vmem>>, %arg11: memref<1x8x256xbf16, #tpu.memory_space<vmem>>, %arg12: memref<8x256xf32, #tpu.memory_space<vmem>>) attributes {dimension_semantics = [#tpu.dimension_semantics<parallel>, #tpu.dimension_semantics<arbitrary>], iteration_bounds = array<i64: 2, 2>, scalar_prefetch = 0 : i64, scratch_operands = 1 : i64, tpu.core_type = #tpu.core_type<tc>, window_params = [{transform_indices = @transform_0, window_bounds = array<i64: 1, 8, 256>}, {transform_indices = @transform_1, window_bounds = array<i64: 1, 8, 128>}, {transform_indices = @transform_2, window_bounds = array<i64: 1, 8, 128>}, {transform_indices = @transform_3, window_bounds = array<i64: 1, 8, 128>}, {transform_indices = @transform_4, window_bounds = array<i64: 1, 1, 8>}, {transform_indices = @transform_5, window_bounds = array<i64: 128, 256>}, {pipeline_mode = #tpu.pipeline_mode<synchronous>, transform_indices = @transform_6, window_bounds = array<i64: 1, 256>}, {pipeline_mode = #tpu.pipeline_mode<synchronous>, transform_indices = @transform_7, window_bounds = array<i64: 1, 256>}, {pipeline_mode = #tpu.pipeline_mode<synchronous>, transform_indices = @transform_8, window_bounds = array<i64: 1, 256>}, {transform_indices = @transform_9, window_bounds = array<i64: 1, 8, 256>}]} {
    %c0_i32 = arith.constant 0 : i32
    %0 = arith.cmpi eq, %arg1, %c0_i32 : i32
    %1 = arith.extui %0 : i1 to i32
    %c0_i32_0 = arith.constant 0 : i32
    %2 = arith.cmpi ne, %1, %c0_i32_0 : i32
    scf.if %2 {
      %c0_23 = arith.constant 0 : index
      %c0_24 = arith.constant 0 : index
      %c0_25 = arith.constant 0 : index
      %35 = vector.load %arg2[%c0_23, %c0_24, %c0_25] : memref<1x8x256xbf16, #tpu.memory_space<vmem>>, vector<1x8x256xbf16>
      %36 = vector.shape_cast %35 : vector<1x8x256xbf16> to vector<8x256xbf16>
      %37 = arith.extf %36 : vector<8x256xbf16> to vector<8x256xf32>
      %c0_26 = arith.constant 0 : index
      %c0_27 = arith.constant 0 : index
      %38 = vector.load %arg8[%c0_26, %c0_27] : memref<1x256xf32, #tpu.memory_space<vmem>>, vector<1x256xf32>
      %39 = vector.broadcast %38 : vector<1x256xf32> to vector<8x256xf32>
      %40 = arith.addf %37, %39 : vector<8x256xf32>
      %c0_28 = arith.constant 0 : index
      %c0_29 = arith.constant 0 : index
      %41 = vector.load %arg12[%c0_28, %c0_29] : memref<8x256xf32, #tpu.memory_space<vmem>>, vector<8x256xf32>
      tpu.vector_store %arg12[%c0_28, %c0_29], %40 {strides = array<i32>} : memref<8x256xf32, #tpu.memory_space<vmem>>, vector<8x256xf32>,
    } else {
    }
    %c0 = arith.constant 0 : index
    %c0_1 = arith.constant 0 : index
    %c0_2 = arith.constant 0 : index
    %3 = vector.load %arg3[%c0, %c0_1, %c0_2] : memref<1x8x128xbf16, #tpu.memory_space<vmem>>, vector<1x8x128xbf16>
    %4 = vector.shape_cast %3 : vector<1x8x128xbf16> to vector<8x128xbf16>
    %c0_3 = arith.constant 0 : index
    %c0_4 = arith.constant 0 : index
    %c0_5 = arith.constant 0 : index
    %5 = vector.load %arg4[%c0_3, %c0_4, %c0_5] : memref<1x8x128xbf16, #tpu.memory_space<vmem>>, vector<1x8x128xbf16>
    %6 = vector.shape_cast %5 : vector<1x8x128xbf16> to vector<8x128xbf16>
    %c0_6 = arith.constant 0 : index
    %c0_7 = arith.constant 0 : index
    %c0_8 = arith.constant 0 : index
    %7 = vector.load %arg5[%c0_6, %c0_7, %c0_8] : memref<1x8x128xbf16, #tpu.memory_space<vmem>>, vector<1x8x128xbf16>
    %8 = vector.shape_cast %7 : vector<1x8x128xbf16> to vector<8x128xbf16>
    %cst = arith.constant dense<0.000000e+00> : vector<8x8xf32>
    %9 = tpu.matmul %4, %6, %cst {dimension_numbers = #tpu.dot_dimension_numbers<[1], [1], [0], [0], [0, 0, 1, 0], [], []>} : vector<8x128xbf16>, vector<8x128xbf16>, vector<8x8xf32> -> vector<8x8xf32>
    %c0_9 = arith.constant 0 : index
    %c0_10 = arith.constant 0 : index
    %c0_11 = arith.constant 0 : index
    %10 = vector.load %arg6[%c0_9, %c0_10, %c0_11] : memref<1x1x8xf32, #tpu.memory_space<vmem>>, vector<1x1x8xf32>
    %11 = vector.shape_cast %10 : vector<1x1x8xf32> to vector<1x8xf32>
    %12 = vector.broadcast %11 : vector<1x8xf32> to vector<8x8xf32>
    %13 = arith.addf %9, %12 : vector<8x8xf32>
    %cst_12 = arith.constant dense<0xFF800000> : vector<8xf32>
    %14 = vector.multi_reduction <maximumf>, %13, %cst_12 [1] : vector<8x8xf32> to vector<8xf32>
    %15 = vector.shape_cast %14 : vector<8xf32> to vector<8x1xf32>
    %16 = vector.broadcast %15 : vector<8x1xf32> to vector<8x8xf32>
    %17 = arith.subf %13, %16 : vector<8x8xf32>
    %18 = math.exp %17 : vector<8x8xf32>
    %cst_13 = arith.constant dense<0.000000e+00> : vector<8xf32>
    %19 = vector.multi_reduction <add>, %18, %cst_13 [1] : vector<8x8xf32> to vector<8xf32>
    %20 = vector.shape_cast %19 : vector<8xf32> to vector<8x1xf32>
    %21 = tpu.reciprocal %20 {approx = true} : vector<8x1xf32> -> vector<8x1xf32>
    %22 = vector.broadcast %21 : vector<8x1xf32> to vector<8x8xf32>
    %23 = arith.mulf %18, %22 : vector<8x8xf32>
    %24 = arith.truncf %23 : vector<8x8xf32> to vector<8x8xbf16>
    %cst_14 = arith.constant dense<0.000000e+00> : vector<8x128xf32>
    %25 = tpu.matmul %24, %8, %cst_14 {dimension_numbers = #tpu.dot_dimension_numbers<[1], [0], [0], [1], [0, 0, 1, 1], [], []>} : vector<8x8xbf16>, vector<8x128xbf16>, vector<8x128xf32> -> vector<8x128xf32>
    %c0_15 = arith.constant 0 : index
    %c0_16 = arith.constant 0 : index
    %26 = vector.load %arg12[%c0_15, %c0_16] : memref<8x256xf32, #tpu.memory_space<vmem>>, vector<8x256xf32>
    %27 = arith.truncf %25 : vector<8x128xf32> to vector<8x128xbf16>
    %c0_17 = arith.constant 0 : index
    %c0_18 = arith.constant 0 : index
    %28 = vector.load %arg7[%c0_17, %c0_18] : memref<128x256xbf16, #tpu.memory_space<vmem>>, vector<128x256xbf16>
    %cst_19 = arith.constant dense<0.000000e+00> : vector<8x256xf32>
    %29 = tpu.matmul %27, %28, %cst_19 {dimension_numbers = #tpu.dot_dimension_numbers<[1], [0], [0], [1], [0, 0, 1, 1], [], []>} : vector<8x128xbf16>, vector<128x256xbf16>, vector<8x256xf32> -> vector<8x256xf32>
    %30 = arith.addf %26, %29 : vector<8x256xf32>
    %c0_20 = arith.constant 0 : index
    %c0_21 = arith.constant 0 : index
    %31 = vector.load %arg12[%c0_20, %c0_21] : memref<8x256xf32, #tpu.memory_space<vmem>>, vector<8x256xf32>
    tpu.vector_store %arg12[%c0_20, %c0_21], %30 {strides = array<i32>} : memref<8x256xf32, #tpu.memory_space<vmem>>, vector<8x256xf32>,
    %c1_i32 = arith.constant 1 : i32
    %32 = arith.cmpi eq, %arg1, %c1_i32 : i32
    %33 = arith.extui %32 : i1 to i32
    %c0_i32_22 = arith.constant 0 : i32
    %34 = arith.cmpi ne, %33, %c0_i32_22 : i32
    scf.if %34 {
      %c0_23 = arith.constant 0 : index
      %c0_24 = arith.constant 0 : index
      %35 = vector.load %arg12[%c0_23, %c0_24] : memref<8x256xf32, #tpu.memory_space<vmem>>, vector<8x256xf32>
      %cst_25 = arith.constant dense<0.000000e+00> : vector<8xf32>
      %36 = vector.multi_reduction <add>, %35, %cst_25 [1] : vector<8x256xf32> to vector<8xf32>
      %37 = vector.shape_cast %36 : vector<8xf32> to vector<8x1xf32>
      %cst_26 = arith.constant 2.560000e+02 : f32
      %38 = vector.broadcast %cst_26 : f32 to vector<8x1xf32>
      %39 = arith.divf %37, %38 : vector<8x1xf32>
      %40 = vector.broadcast %39 : vector<8x1xf32> to vector<8x256xf32>
      %41 = arith.subf %35, %40 : vector<8x256xf32>
      %42 = arith.mulf %41, %41 : vector<8x256xf32>
      %cst_27 = arith.constant dense<0.000000e+00> : vector<8xf32>
      %43 = vector.multi_reduction <add>, %42, %cst_27 [1] : vector<8x256xf32> to vector<8xf32>
      %44 = vector.shape_cast %43 : vector<8xf32> to vector<8x1xf32>
      %cst_28 = arith.constant 2.560000e+02 : f32
      %45 = vector.broadcast %cst_28 : f32 to vector<8x1xf32>
      %46 = arith.divf %44, %45 : vector<8x1xf32>
      %47 = vector.broadcast %39 : vector<8x1xf32> to vector<8x256xf32>
      %48 = arith.subf %35, %47 : vector<8x256xf32>
      %cst_29 = arith.constant 9.99999974E-6 : f32
      %49 = vector.broadcast %cst_29 : f32 to vector<8x1xf32>
      %50 = arith.addf %46, %49 : vector<8x1xf32>
      %51 = math.rsqrt %50 : vector<8x1xf32>
      %52 = vector.broadcast %51 : vector<8x1xf32> to vector<8x256xf32>
      %53 = arith.mulf %48, %52 : vector<8x256xf32>
      %c0_30 = arith.constant 0 : index
      %c0_31 = arith.constant 0 : index
      %54 = vector.load %arg9[%c0_30, %c0_31] : memref<1x256xf32, #tpu.memory_space<vmem>>, vector<1x256xf32>
      %55 = vector.broadcast %54 : vector<1x256xf32> to vector<8x256xf32>
      %56 = arith.mulf %53, %55 : vector<8x256xf32>
      %c0_32 = arith.constant 0 : index
      %c0_33 = arith.constant 0 : index
      %57 = vector.load %arg10[%c0_32, %c0_33] : memref<1x256xf32, #tpu.memory_space<vmem>>, vector<1x256xf32>
      %58 = vector.broadcast %57 : vector<1x256xf32> to vector<8x256xf32>
      %59 = arith.addf %56, %58 : vector<8x256xf32>
      %60 = arith.truncf %59 : vector<8x256xf32> to vector<8x256xbf16>
      %c0_34 = arith.constant 0 : index
      %c0_35 = arith.constant 0 : index
      %c0_36 = arith.constant 0 : index
      %61 = vector.load %arg11[%c0_34, %c0_35, %c0_36] : memref<1x8x256xbf16, #tpu.memory_space<vmem>>, vector<1x8x256xbf16>
      %62 = vector.shape_cast %61 : vector<1x8x256xbf16> to vector<8x256xbf16>
      %63 = vector.shape_cast %60 : vector<8x256xbf16> to vector<1x8x256xbf16>
      tpu.vector_store %arg11[%c0_34, %c0_35, %c0_36], %63 {strides = array<i32>} : memref<1x8x256xbf16, #tpu.memory_space<vmem>>, vector<1x8x256xbf16>,
    } else {
    }
    return
  }
  func.func @transform_0(%arg0: i32, %arg1: i32) -> (i32, i32, i32) {
    %c0_i32 = arith.constant 0 : i32
    %c0_i32_0 = arith.constant 0 : i32
    %c0_i32_1 = arith.constant 0 : i32
    return %arg0, %c0_i32, %c0_i32_0 : i32, i32, i32
  }
  func.func @transform_1(%arg0: i32, %arg1: i32) -> (i32, i32, i32) {
    %c0_i32 = arith.constant 0 : i32
    %c0_i32_0 = arith.constant 0 : i32
    return %arg0, %c0_i32, %arg1 : i32, i32, i32
  }
  func.func @transform_2(%arg0: i32, %arg1: i32) -> (i32, i32, i32) {
    %c0_i32 = arith.constant 0 : i32
    %c0_i32_0 = arith.constant 0 : i32
    return %arg0, %c0_i32, %arg1 : i32, i32, i32
  }
  func.func @transform_3(%arg0: i32, %arg1: i32) -> (i32, i32, i32) {
    %c2_i32 = arith.constant 2 : i32
    %0 = arith.addi %c2_i32, %arg1 : i32
    %c0_i32 = arith.constant 0 : i32
    %c0_i32_0 = arith.constant 0 : i32
    return %arg0, %c0_i32, %0 : i32, i32, i32
  }
  func.func @transform_4(%arg0: i32, %arg1: i32) -> (i32, i32, i32) {
    %c0_i32 = arith.constant 0 : i32
    %c0_i32_0 = arith.constant 0 : i32
    %c0_i32_1 = arith.constant 0 : i32
    return %arg0, %c0_i32, %c0_i32_0 : i32, i32, i32
  }
  func.func @transform_5(%arg0: i32, %arg1: i32) -> (i32, i32) {
    %c0_i32 = arith.constant 0 : i32
    %c0_i32_0 = arith.constant 0 : i32
    return %arg1, %c0_i32 : i32, i32
  }
  func.func @transform_6(%arg0: i32, %arg1: i32) -> (i32, i32) {
    %c0_i32 = arith.constant 0 : i32
    %c0_i32_0 = arith.constant 0 : i32
    %c0_i32_1 = arith.constant 0 : i32
    return %c0_i32, %c0_i32_0 : i32, i32
  }
  func.func @transform_7(%arg0: i32, %arg1: i32) -> (i32, i32) {
    %c0_i32 = arith.constant 0 : i32
    %c0_i32_0 = arith.constant 0 : i32
    %c0_i32_1 = arith.constant 0 : i32
    return %c0_i32, %c0_i32_0 : i32, i32
  }
  func.func @transform_8(%arg0: i32, %arg1: i32) -> (i32, i32) {
    %c0_i32 = arith.constant 0 : i32
    %c0_i32_0 = arith.constant 0 : i32
    %c0_i32_1 = arith.constant 0 : i32
    return %c0_i32, %c0_i32_0 : i32, i32
  }
  func.func @transform_9(%arg0: i32, %arg1: i32) -> (i32, i32, i32) {
    %c0_i32 = arith.constant 0 : i32
    %c0_i32_0 = arith.constant 0 : i32
    %c0_i32_1 = arith.constant 0 : i32
    return %arg0, %c0_i32, %c0_i32_0 : i32, i32, i32
  }
}

module attributes {stable_mosaic.version = 11 : i64} {
  func.func @_ffn_ln_kernel(%arg0: i32, %arg1: i32, %arg2: memref<16x256xbf16, #tpu.memory_space<vmem>>, %arg3: memref<256x512xbf16, #tpu.memory_space<vmem>>, %arg4: memref<1x512xf32, #tpu.memory_space<vmem>>, %arg5: memref<512x256xbf16, #tpu.memory_space<vmem>>, %arg6: memref<1x256xf32, #tpu.memory_space<vmem>>, %arg7: memref<1x256xf32, #tpu.memory_space<vmem>>, %arg8: memref<1x256xf32, #tpu.memory_space<vmem>>, %arg9: memref<16x256xbf16, #tpu.memory_space<vmem>>, %arg10: memref<16x256xf32, #tpu.memory_space<vmem>>) attributes {dimension_semantics = [#tpu.dimension_semantics<parallel>, #tpu.dimension_semantics<arbitrary>], iteration_bounds = array<i64: 1, 1>, scalar_prefetch = 0 : i64, scratch_operands = 1 : i64, tpu.core_type = #tpu.core_type<tc>, window_params = [{transform_indices = @transform_0, window_bounds = array<i64: 16, 256>}, {transform_indices = @transform_1, window_bounds = array<i64: 256, 512>}, {transform_indices = @transform_2, window_bounds = array<i64: 1, 512>}, {transform_indices = @transform_3, window_bounds = array<i64: 512, 256>}, {pipeline_mode = #tpu.pipeline_mode<synchronous>, transform_indices = @transform_4, window_bounds = array<i64: 1, 256>}, {pipeline_mode = #tpu.pipeline_mode<synchronous>, transform_indices = @transform_5, window_bounds = array<i64: 1, 256>}, {pipeline_mode = #tpu.pipeline_mode<synchronous>, transform_indices = @transform_6, window_bounds = array<i64: 1, 256>}, {transform_indices = @transform_7, window_bounds = array<i64: 16, 256>}]} {
    %c0_i32 = arith.constant 0 : i32
    %0 = arith.cmpi eq, %arg1, %c0_i32 : i32
    %1 = arith.extui %0 : i1 to i32
    %c0_i32_0 = arith.constant 0 : i32
    %2 = arith.cmpi ne, %1, %c0_i32_0 : i32
    scf.if %2 {
      %c0_16 = arith.constant 0 : index
      %c0_17 = arith.constant 0 : index
      %20 = vector.load %arg2[%c0_16, %c0_17] : memref<16x256xbf16, #tpu.memory_space<vmem>>, vector<16x256xbf16>
      %21 = arith.extf %20 : vector<16x256xbf16> to vector<16x256xf32>
      %c0_18 = arith.constant 0 : index
      %c0_19 = arith.constant 0 : index
      %22 = vector.load %arg6[%c0_18, %c0_19] : memref<1x256xf32, #tpu.memory_space<vmem>>, vector<1x256xf32>
      %23 = vector.broadcast %22 : vector<1x256xf32> to vector<16x256xf32>
      %24 = arith.addf %21, %23 : vector<16x256xf32>
      %c0_20 = arith.constant 0 : index
      %c0_21 = arith.constant 0 : index
      %25 = vector.load %arg10[%c0_20, %c0_21] : memref<16x256xf32, #tpu.memory_space<vmem>>, vector<16x256xf32>
      tpu.vector_store %arg10[%c0_20, %c0_21], %24 {strides = array<i32>} : memref<16x256xf32, #tpu.memory_space<vmem>>, vector<16x256xf32>,
    } else {
    }
    %c0 = arith.constant 0 : index
    %c0_1 = arith.constant 0 : index
    %3 = vector.load %arg2[%c0, %c0_1] : memref<16x256xbf16, #tpu.memory_space<vmem>>, vector<16x256xbf16>
    %c0_2 = arith.constant 0 : index
    %c0_3 = arith.constant 0 : index
    %4 = vector.load %arg3[%c0_2, %c0_3] : memref<256x512xbf16, #tpu.memory_space<vmem>>, vector<256x512xbf16>
    %cst = arith.constant dense<0.000000e+00> : vector<16x512xf32>
    %5 = tpu.matmul %3, %4, %cst {dimension_numbers = #tpu.dot_dimension_numbers<[1], [0], [0], [1], [0, 0, 1, 1], [], []>} : vector<16x256xbf16>, vector<256x512xbf16>, vector<16x512xf32> -> vector<16x512xf32>
    %c0_4 = arith.constant 0 : index
    %c0_5 = arith.constant 0 : index
    %6 = vector.load %arg4[%c0_4, %c0_5] : memref<1x512xf32, #tpu.memory_space<vmem>>, vector<1x512xf32>
    %7 = vector.broadcast %6 : vector<1x512xf32> to vector<16x512xf32>
    %8 = arith.addf %5, %7 : vector<16x512xf32>
    %cst_6 = arith.constant 0.000000e+00 : f32
    %9 = vector.broadcast %cst_6 : f32 to vector<16x512xf32>
    %10 = arith.maximumf %8, %9 : vector<16x512xf32>
    %c0_7 = arith.constant 0 : index
    %c0_8 = arith.constant 0 : index
    %11 = vector.load %arg10[%c0_7, %c0_8] : memref<16x256xf32, #tpu.memory_space<vmem>>, vector<16x256xf32>
    %12 = arith.truncf %10 : vector<16x512xf32> to vector<16x512xbf16>
    %c0_9 = arith.constant 0 : index
    %c0_10 = arith.constant 0 : index
    %13 = vector.load %arg5[%c0_9, %c0_10] : memref<512x256xbf16, #tpu.memory_space<vmem>>, vector<512x256xbf16>
    %cst_11 = arith.constant dense<0.000000e+00> : vector<16x256xf32>
    %14 = tpu.matmul %12, %13, %cst_11 {dimension_numbers = #tpu.dot_dimension_numbers<[1], [0], [0], [1], [0, 0, 1, 1], [], []>} : vector<16x512xbf16>, vector<512x256xbf16>, vector<16x256xf32> -> vector<16x256xf32>
    %15 = arith.addf %11, %14 : vector<16x256xf32>
    %c0_12 = arith.constant 0 : index
    %c0_13 = arith.constant 0 : index
    %16 = vector.load %arg10[%c0_12, %c0_13] : memref<16x256xf32, #tpu.memory_space<vmem>>, vector<16x256xf32>
    tpu.vector_store %arg10[%c0_12, %c0_13], %15 {strides = array<i32>} : memref<16x256xf32, #tpu.memory_space<vmem>>, vector<16x256xf32>,
    %c0_i32_14 = arith.constant 0 : i32
    %17 = arith.cmpi eq, %arg1, %c0_i32_14 : i32
    %18 = arith.extui %17 : i1 to i32
    %c0_i32_15 = arith.constant 0 : i32
    %19 = arith.cmpi ne, %18, %c0_i32_15 : i32
    scf.if %19 {
      %c0_16 = arith.constant 0 : index
      %c0_17 = arith.constant 0 : index
      %20 = vector.load %arg10[%c0_16, %c0_17] : memref<16x256xf32, #tpu.memory_space<vmem>>, vector<16x256xf32>
      %cst_18 = arith.constant dense<0.000000e+00> : vector<16xf32>
      %21 = vector.multi_reduction <add>, %20, %cst_18 [1] : vector<16x256xf32> to vector<16xf32>
      %22 = vector.shape_cast %21 : vector<16xf32> to vector<16x1xf32>
      %cst_19 = arith.constant 2.560000e+02 : f32
      %23 = vector.broadcast %cst_19 : f32 to vector<16x1xf32>
      %24 = arith.divf %22, %23 : vector<16x1xf32>
      %25 = vector.broadcast %24 : vector<16x1xf32> to vector<16x256xf32>
      %26 = arith.subf %20, %25 : vector<16x256xf32>
      %27 = arith.mulf %26, %26 : vector<16x256xf32>
      %cst_20 = arith.constant dense<0.000000e+00> : vector<16xf32>
      %28 = vector.multi_reduction <add>, %27, %cst_20 [1] : vector<16x256xf32> to vector<16xf32>
      %29 = vector.shape_cast %28 : vector<16xf32> to vector<16x1xf32>
      %cst_21 = arith.constant 2.560000e+02 : f32
      %30 = vector.broadcast %cst_21 : f32 to vector<16x1xf32>
      %31 = arith.divf %29, %30 : vector<16x1xf32>
      %32 = vector.broadcast %24 : vector<16x1xf32> to vector<16x256xf32>
      %33 = arith.subf %20, %32 : vector<16x256xf32>
      %cst_22 = arith.constant 9.99999974E-6 : f32
      %34 = vector.broadcast %cst_22 : f32 to vector<16x1xf32>
      %35 = arith.addf %31, %34 : vector<16x1xf32>
      %36 = math.rsqrt %35 : vector<16x1xf32>
      %37 = vector.broadcast %36 : vector<16x1xf32> to vector<16x256xf32>
      %38 = arith.mulf %33, %37 : vector<16x256xf32>
      %c0_23 = arith.constant 0 : index
      %c0_24 = arith.constant 0 : index
      %39 = vector.load %arg7[%c0_23, %c0_24] : memref<1x256xf32, #tpu.memory_space<vmem>>, vector<1x256xf32>
      %40 = vector.broadcast %39 : vector<1x256xf32> to vector<16x256xf32>
      %41 = arith.mulf %38, %40 : vector<16x256xf32>
      %c0_25 = arith.constant 0 : index
      %c0_26 = arith.constant 0 : index
      %42 = vector.load %arg8[%c0_25, %c0_26] : memref<1x256xf32, #tpu.memory_space<vmem>>, vector<1x256xf32>
      %43 = vector.broadcast %42 : vector<1x256xf32> to vector<16x256xf32>
      %44 = arith.addf %41, %43 : vector<16x256xf32>
      %45 = arith.truncf %44 : vector<16x256xf32> to vector<16x256xbf16>
      %c0_27 = arith.constant 0 : index
      %c0_28 = arith.constant 0 : index
      %46 = vector.load %arg9[%c0_27, %c0_28] : memref<16x256xbf16, #tpu.memory_space<vmem>>, vector<16x256xbf16>
      tpu.vector_store %arg9[%c0_27, %c0_28], %45 {strides = array<i32>} : memref<16x256xbf16, #tpu.memory_space<vmem>>, vector<16x256xbf16>,
    } else {
    }
    return
  }
  func.func @transform_0(%arg0: i32, %arg1: i32) -> (i32, i32) {
    %c0_i32 = arith.constant 0 : i32
    %c0_i32_0 = arith.constant 0 : i32
    return %arg0, %c0_i32 : i32, i32
  }
  func.func @transform_1(%arg0: i32, %arg1: i32) -> (i32, i32) {
    %c0_i32 = arith.constant 0 : i32
    %c0_i32_0 = arith.constant 0 : i32
    return %c0_i32, %arg1 : i32, i32
  }
  func.func @transform_2(%arg0: i32, %arg1: i32) -> (i32, i32) {
    %c0_i32 = arith.constant 0 : i32
    %c0_i32_0 = arith.constant 0 : i32
    return %c0_i32, %arg1 : i32, i32
  }
  func.func @transform_3(%arg0: i32, %arg1: i32) -> (i32, i32) {
    %c0_i32 = arith.constant 0 : i32
    %c0_i32_0 = arith.constant 0 : i32
    return %arg1, %c0_i32 : i32, i32
  }
  func.func @transform_4(%arg0: i32, %arg1: i32) -> (i32, i32) {
    %c0_i32 = arith.constant 0 : i32
    %c0_i32_0 = arith.constant 0 : i32
    %c0_i32_1 = arith.constant 0 : i32
    return %c0_i32, %c0_i32_0 : i32, i32
  }
  func.func @transform_5(%arg0: i32, %arg1: i32) -> (i32, i32) {
    %c0_i32 = arith.constant 0 : i32
    %c0_i32_0 = arith.constant 0 : i32
    %c0_i32_1 = arith.constant 0 : i32
    return %c0_i32, %c0_i32_0 : i32, i32
  }
  func.func @transform_6(%arg0: i32, %arg1: i32) -> (i32, i32) {
    %c0_i32 = arith.constant 0 : i32
    %c0_i32_0 = arith.constant 0 : i32
    %c0_i32_1 = arith.constant 0 : i32
    return %c0_i32, %c0_i32_0 : i32, i32
  }
  func.func @transform_7(%arg0: i32, %arg1: i32) -> (i32, i32) {
    %c0_i32 = arith.constant 0 : i32
    %c0_i32_0 = arith.constant 0 : i32
    return %arg0, %c0_i32 : i32, i32
  }
}

module attributes {stable_mosaic.version = 11 : i64} {
  func.func @_linear_kernel(%arg0: i32, %arg1: i32, %arg2: memref<16x256xbf16, #tpu.memory_space<vmem>>, %arg3: memref<256x256xbf16, #tpu.memory_space<vmem>>, %arg4: memref<1x256xf32, #tpu.memory_space<vmem>>, %arg5: memref<16x256xf32, #tpu.memory_space<vmem>>) attributes {dimension_semantics = [#tpu.dimension_semantics<parallel>, #tpu.dimension_semantics<parallel>], iteration_bounds = array<i64: 1, 1>, scalar_prefetch = 0 : i64, scratch_operands = 0 : i64, tpu.core_type = #tpu.core_type<tc>, window_params = [{transform_indices = @transform_0, window_bounds = array<i64: 16, 256>}, {transform_indices = @transform_1, window_bounds = array<i64: 256, 256>}, {transform_indices = @transform_2, window_bounds = array<i64: 1, 256>}, {transform_indices = @transform_3, window_bounds = array<i64: 16, 256>}]} {
    %c0 = arith.constant 0 : index
    %c0_0 = arith.constant 0 : index
    %0 = vector.load %arg2[%c0, %c0_0] : memref<16x256xbf16, #tpu.memory_space<vmem>>, vector<16x256xbf16>
    %c0_1 = arith.constant 0 : index
    %c0_2 = arith.constant 0 : index
    %1 = vector.load %arg3[%c0_1, %c0_2] : memref<256x256xbf16, #tpu.memory_space<vmem>>, vector<256x256xbf16>
    %cst = arith.constant dense<0.000000e+00> : vector<16x256xf32>
    %2 = tpu.matmul %0, %1, %cst {dimension_numbers = #tpu.dot_dimension_numbers<[1], [0], [0], [1], [0, 0, 1, 1], [], []>} : vector<16x256xbf16>, vector<256x256xbf16>, vector<16x256xf32> -> vector<16x256xf32>
    %c0_3 = arith.constant 0 : index
    %c0_4 = arith.constant 0 : index
    %3 = vector.load %arg4[%c0_3, %c0_4] : memref<1x256xf32, #tpu.memory_space<vmem>>, vector<1x256xf32>
    %4 = vector.broadcast %3 : vector<1x256xf32> to vector<16x256xf32>
    %5 = arith.addf %2, %4 : vector<16x256xf32>
    %c0_5 = arith.constant 0 : index
    %c0_6 = arith.constant 0 : index
    %6 = vector.load %arg5[%c0_5, %c0_6] : memref<16x256xf32, #tpu.memory_space<vmem>>, vector<16x256xf32>
    tpu.vector_store %arg5[%c0_5, %c0_6], %5 {strides = array<i32>} : memref<16x256xf32, #tpu.memory_space<vmem>>, vector<16x256xf32>,
    return
  }
  func.func @transform_0(%arg0: i32, %arg1: i32) -> (i32, i32) {
    %c0_i32 = arith.constant 0 : i32
    %c0_i32_0 = arith.constant 0 : i32
    return %arg0, %c0_i32 : i32, i32
  }
  func.func @transform_1(%arg0: i32, %arg1: i32) -> (i32, i32) {
    %c0_i32 = arith.constant 0 : i32
    %c0_i32_0 = arith.constant 0 : i32
    return %c0_i32, %arg1 : i32, i32
  }
  func.func @transform_2(%arg0: i32, %arg1: i32) -> (i32, i32) {
    %c0_i32 = arith.constant 0 : i32
    %c0_i32_0 = arith.constant 0 : i32
    return %c0_i32, %arg1 : i32, i32
  }
  func.func @transform_3(%arg0: i32, %arg1: i32) -> (i32, i32) {
    %c0_i32 = arith.constant 0 : i32
    return %arg0, %arg1 : i32, i32
  }
}

</mosaic_0001>

<llo_original>
// kernel: transformer_forward.31
$region0: #{transformer_forward.31}
  #allocation0 [shape = 'u32[]', space=smem, size = 0x4, offset = 0x4, fixed_abs, tag = 'smem constant byte address 0x4 - core index']
  #allocation1 [shape = 'u32[144,128]{1,0:T(1,128)}', space=vmem, size = 0x12000, scoped, tag = 'internal scratch']
  %s0 = inlined_call_operand.vmem [shape: bf16[16,256], index: 0, kind: input, shape index: {}]
  %s1 = inlined_call_operand.vmem [shape: bf16[256,256], index: 1, kind: input, shape index: {}]
  %s2 = inlined_call_operand.vmem [shape: f32[1,256], index: 2, kind: input, shape index: {}]
  %s3 = inlined_call_operand.vmem [shape: bf16[16,256], index: 3, kind: output, shape index: {}]
  %s4 = sld [smem:[#allocation0]]
  $region22: #{transformer_forward.31} parent=0
    _
  %s6 = ssub.s32 1, %s4
  %s7 = scalar_select 0, %s6, %s4
  // Predicated region
  $region2: #{transformer_forward.31} parent=0 // pred_check
    _
  $region3: #{transformer_forward.31} parent=0 // pred_check_branch
    %9 = sbr.rel (0) target = $region5
  $region4: #{transformer_forward.31} parent=0 // pred_region
    _
  $region5: #{transformer_forward.31} parent=0 // pred_fallthru
    _
  // Predicated region
  $region6: #{transformer_forward.31} parent=0 // pred_check
    _
  $region7: #{transformer_forward.31} parent=0 // pred_check_branch
    %11 = sbr.rel (0) target = $region9
  $region8: #{transformer_forward.31} parent=0 // pred_region
    _
  $region9: #{transformer_forward.31} parent=0 // pred_fallthru
    _
  // Predicated region
  $region10: #{transformer_forward.31} parent=0 // pred_check
    _
  $region11: #{transformer_forward.31} parent=0 // pred_check_branch
    %13 = sbr.rel (0) target = $region13
  $region12: #{transformer_forward.31} parent=0 // pred_region
    _
  $region13: #{transformer_forward.31} parent=0 // pred_fallthru
    _
  %v14 = vld [vmem:[%s0] sm:$0xff]
  %v15 = vld [vmem:[%s0 + $0x8] sm:$0xff]
  %v16 = vld [vmem:[%s1] sm:$0xff]
  %v17 = vld [vmem:[%s1 + $0x8] sm:$0xff]
  %v18 = vld [vmem:[%s1 + $0x10] sm:$0xff]
  %v19 = vld [vmem:[%s1 + $0x18] sm:$0xff]
  %v20 = vld [vmem:[%s1 + $0x20] sm:$0xff]
  %v21 = vld [vmem:[%s1 + $0x28] sm:$0xff]
  %v22 = vld [vmem:[%s1 + $0x30] sm:$0xff]
  %v23 = vld [vmem:[%s1 + $0x38] sm:$0xff]
  %v24 = vld [vmem:[%s1 + $0x40] sm:$0xff]
  %v25 = vld [vmem:[%s1 + $0x48] sm:$0xff]
  %v26 = vld [vmem:[%s1 + $0x50] sm:$0xff]
  %v27 = vld [vmem:[%s1 + $0x58] sm:$0xff]
  %v28 = vld [vmem:[%s1 + $0x60] sm:$0xff]
  %v29 = vld [vmem:[%s1 + $0x68] sm:$0xff]
  %v30 = vld [vmem:[%s1 + $0x70] sm:$0xff]
  %v31 = vld [vmem:[%s1 + $0x78] sm:$0xff]
  %v32 = vld [vmem:[%s1 + $0x80] sm:$0xff]
  %v33 = vld [vmem:[%s1 + $0x88] sm:$0xff]
  %v34 = vld [vmem:[%s1 + $0x90] sm:$0xff]
  %v35 = vld [vmem:[%s1 + $0x98] sm:$0xff]
  %v36 = vld [vmem:[%s1 + $0xa0] sm:$0xff]
  %v37 = vld [vmem:[%s1 + $0xa8] sm:$0xff]
  %v38 = vld [vmem:[%s1 + $0xb0] sm:$0xff]
  %v39 = vld [vmem:[%s1 + $0xb8] sm:$0xff]
  %v40 = vld [vmem:[%s1 + $0xc0] sm:$0xff]
  %v41 = vld [vmem:[%s1 + $0xc8] sm:$0xff]
  %v42 = vld [vmem:[%s1 + $0xd0] sm:$0xff]
  %v43 = vld [vmem:[%s1 + $0xd8] sm:$0xff]
  %v44 = vld [vmem:[%s1 + $0xe0] sm:$0xff]
  %v45 = vld [vmem:[%s1 + $0xe8] sm:$0xff]
  %v46 = vld [vmem:[%s1 + $0xf0] sm:$0xff]
  %v47 = vld [vmem:[%s1 + $0xf8] sm:$0xff]
  %v48 = vld [vmem:[%s2] sm:$0x3]
  %v50 = vlaneseq
  %v51 = vshrl.u32 %v50, 7
  %v52 = vsub.s32 0, %v51
  %v53 = vrot.slane %v48, %v52
  %v54 = vlaneseq
  %v55 = vshrl.u32 %v54, 7
  %v56 = vsub.s32 1, %v55
  %v57 = vrot.slane %v48, %v56
  %v62 = vunpack.c.l.b16 %v14
  %v63 = vunpack.c.h.b16 %v14
  %v64 = vunpack.c.l.b16 %v15
  %v65 = vunpack.c.h.b16 %v15
  %v66 = vpack.c.b16 %v64, %v62
  %v67 = vpack.c.b16 %v65, %v63
  %v102 = vunpack.c.l.b16 %v16
  %v103 = vunpack.c.h.b16 %v16
  %v104 = vunpack.c.l.b16 %v17
  %v105 = vunpack.c.h.b16 %v17
  %v106 = vunpack.c.l.b16 %v18
  %v107 = vunpack.c.h.b16 %v18
  %v108 = vunpack.c.l.b16 %v19
  %v109 = vunpack.c.h.b16 %v19
  %v110 = vunpack.c.l.b16 %v20
  %v111 = vunpack.c.h.b16 %v20
  %v112 = vunpack.c.l.b16 %v21
  %v113 = vunpack.c.h.b16 %v21
  %v114 = vunpack.c.l.b16 %v22
  %v115 = vunpack.c.h.b16 %v22
  %v116 = vunpack.c.l.b16 %v23
  %v117 = vunpack.c.h.b16 %v23
  %v118 = vunpack.c.l.b16 %v24
  %v119 = vunpack.c.h.b16 %v24
  %v120 = vunpack.c.l.b16 %v25
  %v121 = vunpack.c.h.b16 %v25
  %v122 = vunpack.c.l.b16 %v26
  %v123 = vunpack.c.h.b16 %v26
  %v124 = vunpack.c.l.b16 %v27
  %v125 = vunpack.c.h.b16 %v27
  %v126 = vunpack.c.l.b16 %v28
  %v127 = vunpack.c.h.b16 %v28
  %v128 = vunpack.c.l.b16 %v29
  %v129 = vunpack.c.h.b16 %v29
  %v130 = vunpack.c.l.b16 %v30
  %v131 = vunpack.c.h.b16 %v30
  %v132 = vunpack.c.l.b16 %v31
  %v133 = vunpack.c.h.b16 %v31
  %v134 = vunpack.c.l.b16 %v32
  %v135 = vunpack.c.h.b16 %v32
  %v136 = vunpack.c.l.b16 %v33
  %v137 = vunpack.c.h.b16 %v33
  %v138 = vunpack.c.l.b16 %v34
  %v139 = vunpack.c.h.b16 %v34
  %v140 = vunpack.c.l.b16 %v35
  %v141 = vunpack.c.h.b16 %v35
  %v142 = vunpack.c.l.b16 %v36
  %v143 = vunpack.c.h.b16 %v36
  %v144 = vunpack.c.l.b16 %v37
  %v145 = vunpack.c.h.b16 %v37
  %v146 = vunpack.c.l.b16 %v38
  %v147 = vunpack.c.h.b16 %v38
  %v148 = vunpack.c.l.b16 %v39
  %v149 = vunpack.c.h.b16 %v39
  %v150 = vunpack.c.l.b16 %v40
  %v151 = vunpack.c.h.b16 %v40
  %v152 = vunpack.c.l.b16 %v41
  %v153 = vunpack.c.h.b16 %v41
  %v154 = vunpack.c.l.b16 %v42
  %v155 = vunpack.c.h.b16 %v42
  %v156 = vunpack.c.l.b16 %v43
  %v157 = vunpack.c.h.b16 %v43
  %v158 = vunpack.c.l.b16 %v44
  %v159 = vunpack.c.h.b16 %v44
  %v160 = vunpack.c.l.b16 %v45
  %v161 = vunpack.c.h.b16 %v45
  %v162 = vunpack.c.l.b16 %v46
  %v163 = vunpack.c.h.b16 %v46
  %v164 = vunpack.c.l.b16 %v47
  %v165 = vunpack.c.h.b16 %v47
  %v166 = vpack.c.b16 %v104, %v102
  %v167 = vpack.c.b16 %v105, %v103
  %v168 = vpack.c.b16 %v108, %v106
  %v169 = vpack.c.b16 %v109, %v107
  %v170 = vpack.c.b16 %v112, %v110
  %v171 = vpack.c.b16 %v113, %v111
  %v172 = vpack.c.b16 %v116, %v114
  %v173 = vpack.c.b16 %v117, %v115
  %v174 = vpack.c.b16 %v120, %v118
  %v175 = vpack.c.b16 %v121, %v119
  %v176 = vpack.c.b16 %v124, %v122
  %v177 = vpack.c.b16 %v125, %v123
  %v178 = vpack.c.b16 %v128, %v126
  %v179 = vpack.c.b16 %v129, %v127
  %v180 = vpack.c.b16 %v132, %v130
  %v181 = vpack.c.b16 %v133, %v131
  %v182 = vpack.c.b16 %v136, %v134
  %v183 = vpack.c.b16 %v137, %v135
  %v184 = vpack.c.b16 %v140, %v138
  %v185 = vpack.c.b16 %v141, %v139
  %v186 = vpack.c.b16 %v144, %v142
  %v187 = vpack.c.b16 %v145, %v143
  %v188 = vpack.c.b16 %v148, %v146
  %v189 = vpack.c.b16 %v149, %v147
  %v190 = vpack.c.b16 %v152, %v150
  %v191 = vpack.c.b16 %v153, %v151
  %v192 = vpack.c.b16 %v156, %v154
  %v193 = vpack.c.b16 %v157, %v155
  %v194 = vpack.c.b16 %v160, %v158
  %v195 = vpack.c.b16 %v161, %v159
  %v196 = vpack.c.b16 %v164, %v162
  %v197 = vpack.c.b16 %v165, %v163
  %230 = vmatprep.subr.bf16.mxu0 %v167
  %231 = vmatpush1.bf16.msra.mxu0 %v166
  %232 = vmatprep.subr.bf16.mxu0 %v169
  %233 = vmatpush1.bf16.msra.mxu0 %v168
  %234 = vmatprep.subr.bf16.mxu0 %v171
  %235 = vmatpush1.bf16.msra.mxu0 %v170
  %236 = vmatprep.subr.bf16.mxu0 %v173
  %237 = vmatpush1.bf16.msra.mxu0 %v172
  %238 = vmatprep.subr.bf16.mxu0 %v175
  %239 = vmatpush1.bf16.msra.mxu0 %v174
  %240 = vmatprep.subr.bf16.mxu0 %v177
  %241 = vmatpush1.bf16.msra.mxu0 %v176
  %242 = vmatprep.subr.bf16.mxu0 %v179
  %243 = vmatpush1.bf16.msra.mxu0 %v178
  %244 = vmatprep.subr.bf16.mxu0 %v181
  %245 = vmatpush1.bf16.msra.mxu0 %v180
  %246 = vmatprep.subr.bf16.mxu0 %v183
  %247 = vmatpush1.bf16.msra.mxu0 %v182
  %248 = vmatprep.subr.bf16.mxu0 %v185
  %249 = vmatpush1.bf16.msra.mxu0 %v184
  %250 = vmatprep.subr.bf16.mxu0 %v187
  %251 = vmatpush1.bf16.msra.mxu0 %v186
  %252 = vmatprep.subr.bf16.mxu0 %v189
  %253 = vmatpush1.bf16.msra.mxu0 %v188
  %254 = vmatprep.subr.bf16.mxu0 %v191
  %255 = vmatpush1.bf16.msra.mxu0 %v190
  %256 = vmatprep.subr.bf16.mxu0 %v193
  %257 = vmatpush1.bf16.msra.mxu0 %v192
  %258 = vmatprep.subr.bf16.mxu0 %v195
  %259 = vmatpush1.bf16.msra.mxu0 %v194
  %260 = vmatprep.subr.bf16.mxu0 %v197
  %261 = vmatpush1.bf16.msra.mxu0 %v196
  %262 = vmatprep.mubr.bf16.mxu0 %v67
  %263 = vmatmul.mubr.bf16.gmra.mrb[0].mxu0 %v66
  %v264 = vpop.f32.mrb[0].mxu0
  %v265 = vadd.f32 %v53, %v264
  %v266 = vpop.f32.mrb[0].mxu0
  %v267 = vadd.f32 %v57, %v266
  %v268 = vpop.f32.mrb[0].mxu0
  %v269 = vadd.f32 %v53, %v268
  %v270 = vpop.f32.mrb[0].mxu0
  %v271 = vadd.f32 %v57, %v270
  %272 = vdwg.mxu0
  %v273 = vpack.c.bf16 %v269, %v265
  %v274 = vpack.c.bf16 %v271, %v267
  %v277 = vunpack.c.l.b16 %v273
  %v278 = vunpack.c.l.b16 %v274
  %v279 = vunpack.c.h.b16 %v273
  %v280 = vunpack.c.h.b16 %v274
  %v281 = vpack.c.b16 %v278, %v277
  %v282 = vpack.c.b16 %v280, %v279
  %285 = vst [vmem:[%s3] sm:$0xff] %v281
  %286 = vst [vmem:[%s3 + $0x8] sm:$0xff] %v282
  // Predicated region
  $region14: #{transformer_forward.31} parent=0 // pred_check
    _
  $region15: #{transformer_forward.31} parent=0 // pred_check_branch
    %288 = sbr.rel (0) target = $region17
  $region16: #{transformer_forward.31} parent=0 // pred_region
    _
  $region17: #{transformer_forward.31} parent=0 // pred_fallthru
    _
  // Predicated region
  $region18: #{transformer_forward.31} parent=0 // pred_check
    _
  $region19: #{transformer_forward.31} parent=0 // pred_check_branch
    %290 = sbr.rel (0) target = $region21
  $region20: #{transformer_forward.31} parent=0 // pred_region
    _
  $region21: #{transformer_forward.31} parent=0 // pred_fallthru
    _

// kernel: transformer_forward.32
$region0: #{transformer_forward.32}
  #allocation0 [shape = 'u32[]', space=smem, size = 0x4, offset = 0x4, fixed_abs, tag = 'smem constant byte address 0x4 - core index']
  #allocation1 [shape = 'u32[144,128]{1,0:T(1,128)}', space=vmem, size = 0x12000, scoped, tag = 'internal scratch']
  %s0 = inlined_call_operand.vmem [shape: bf16[16,256], index: 0, kind: input, shape index: {}]
  %s1 = inlined_call_operand.vmem [shape: bf16[256,512], index: 1, kind: input, shape index: {}]
  %s2 = inlined_call_operand.vmem [shape: f32[1,512], index: 2, kind: input, shape index: {}]
  %s3 = inlined_call_operand.vmem [shape: bf16[16,512], index: 3, kind: output, shape index: {}]
  %s4 = sld [smem:[#allocation0]]
  $region22: #{transformer_forward.32} parent=0
    _
  %s6 = ssub.s32 1, %s4
  %s7 = scalar_select 0, %s6, %s4
  // Predicated region
  $region2: #{transformer_forward.32} parent=0 // pred_check
    _
  $region3: #{transformer_forward.32} parent=0 // pred_check_branch
    %9 = sbr.rel (0) target = $region5
  $region4: #{transformer_forward.32} parent=0 // pred_region
    _
  $region5: #{transformer_forward.32} parent=0 // pred_fallthru
    _
  // Predicated region
  $region6: #{transformer_forward.32} parent=0 // pred_check
    _
  $region7: #{transformer_forward.32} parent=0 // pred_check_branch
    %11 = sbr.rel (0) target = $region9
  $region8: #{transformer_forward.32} parent=0 // pred_region
    _
  $region9: #{transformer_forward.32} parent=0 // pred_fallthru
    _
  // Predicated region
  $region10: #{transformer_forward.32} parent=0 // pred_check
    _
  $region11: #{transformer_forward.32} parent=0 // pred_check_branch
    %13 = sbr.rel (0) target = $region13
  $region12: #{transformer_forward.32} parent=0 // pred_region
    _
  $region13: #{transformer_forward.32} parent=0 // pred_fallthru
    _
  %v14 = vld [vmem:[%s0] sm:$0xff]
  %v15 = vld [vmem:[%s0 + $0x8] sm:$0xff]
  %v16 = vld [vmem:[%s1] sm:$0xff]
  %v17 = vld [vmem:[%s1 + $0x8] sm:$0xff]
  %v18 = vld [vmem:[%s1 + $0x10] sm:$0xff]
  %v19 = vld [vmem:[%s1 + $0x18] sm:$0xff]
  %v20 = vld [vmem:[%s1 + $0x20] sm:$0xff]
  %v21 = vld [vmem:[%s1 + $0x28] sm:$0xff]
  %v22 = vld [vmem:[%s1 + $0x30] sm:$0xff]
  %v23 = vld [vmem:[%s1 + $0x38] sm:$0xff]
  %v24 = vld [vmem:[%s1 + $0x40] sm:$0xff]
  %v25 = vld [vmem:[%s1 + $0x48] sm:$0xff]
  %v26 = vld [vmem:[%s1 + $0x50] sm:$0xff]
  %v27 = vld [vmem:[%s1 + $0x58] sm:$0xff]
  %v28 = vld [vmem:[%s1 + $0x60] sm:$0xff]
  %v29 = vld [vmem:[%s1 + $0x68] sm:$0xff]
  %v30 = vld [vmem:[%s1 + $0x70] sm:$0xff]
  %v31 = vld [vmem:[%s1 + $0x78] sm:$0xff]
  %v32 = vld [vmem:[%s1 + $0x80] sm:$0xff]
  %v33 = vld [vmem:[%s1 + $0x88] sm:$0xff]
  %v34 = vld [vmem:[%s1 + $0x90] sm:$0xff]
  %v35 = vld [vmem:[%s1 + $0x98] sm:$0xff]
  %v36 = vld [vmem:[%s1 + $0xa0] sm:$0xff]
  %v37 = vld [vmem:[%s1 + $0xa8] sm:$0xff]
  %v38 = vld [vmem:[%s1 + $0xb0] sm:$0xff]
  %v39 = vld [vmem:[%s1 + $0xb8] sm:$0xff]
  %v40 = vld [vmem:[%s1 + $0xc0] sm:$0xff]
  %v41 = vld [vmem:[%s1 + $0xc8] sm:$0xff]
  %v42 = vld [vmem:[%s1 + $0xd0] sm:$0xff]
  %v43 = vld [vmem:[%s1 + $0xd8] sm:$0xff]
  %v44 = vld [vmem:[%s1 + $0xe0] sm:$0xff]
  %v45 = vld [vmem:[%s1 + $0xe8] sm:$0xff]
  %v46 = vld [vmem:[%s1 + $0xf0] sm:$0xff]
  %v47 = vld [vmem:[%s1 + $0xf8] sm:$0xff]
  %v48 = vld [vmem:[%s1 + $0x100] sm:$0xff]
  %v49 = vld [vmem:[%s1 + $0x108] sm:$0xff]
  %v50 = vld [vmem:[%s1 + $0x110] sm:$0xff]
  %v51 = vld [vmem:[%s1 + $0x118] sm:$0xff]
  %v52 = vld [vmem:[%s1 + $0x120] sm:$0xff]
  %v53 = vld [vmem:[%s1 + $0x128] sm:$0xff]
  %v54 = vld [vmem:[%s1 + $0x130] sm:$0xff]
  %v55 = vld [vmem:[%s1 + $0x138] sm:$0xff]
  %v56 = vld [vmem:[%s1 + $0x140] sm:$0xff]
  %v57 = vld [vmem:[%s1 + $0x148] sm:$0xff]
  %v58 = vld [vmem:[%s1 + $0x150] sm:$0xff]
  %v59 = vld [vmem:[%s1 + $0x158] sm:$0xff]
  %v60 = vld [vmem:[%s1 + $0x160] sm:$0xff]
  %v61 = vld [vmem:[%s1 + $0x168] sm:$0xff]
  %v62 = vld [vmem:[%s1 + $0x170] sm:$0xff]
  %v63 = vld [vmem:[%s1 + $0x178] sm:$0xff]
  %v64 = vld [vmem:[%s1 + $0x180] sm:$0xff]
  %v65 = vld [vmem:[%s1 + $0x188] sm:$0xff]
  %v66 = vld [vmem:[%s1 + $0x190] sm:$0xff]
  %v67 = vld [vmem:[%s1 + $0x198] sm:$0xff]
  %v68 = vld [vmem:[%s1 + $0x1a0] sm:$0xff]
  %v69 = vld [vmem:[%s1 + $0x1a8] sm:$0xff]
  %v70 = vld [vmem:[%s1 + $0x1b0] sm:$0xff]
  %v71 = vld [vmem:[%s1 + $0x1b8] sm:$0xff]
  %v72 = vld [vmem:[%s1 + $0x1c0] sm:$0xff]
  %v73 = vld [vmem:[%s1 + $0x1c8] sm:$0xff]
  %v74 = vld [vmem:[%s1 + $0x1d0] sm:$0xff]
  %v75 = vld [vmem:[%s1 + $0x1d8] sm:$0xff]
  %v76 = vld [vmem:[%s1 + $0x1e0] sm:$0xff]
  %v77 = vld [vmem:[%s1 + $0x1e8] sm:$0xff]
  %v78 = vld [vmem:[%s1 + $0x1f0] sm:$0xff]
  %v79 = vld [vmem:[%s1 + $0x1f8] sm:$0xff]
  %v80 = vld [vmem:[%s2] sm:$0xf]
  %v82 = vlaneseq
  %v83 = vshrl.u32 %v82, 7
  %v84 = vsub.s32 0, %v83
  %v85 = vrot.slane %v80, %v84
  %v86 = vlaneseq
  %v87 = vshrl.u32 %v86, 7
  %v88 = vsub.s32 1, %v87
  %v89 = vrot.slane %v80, %v88
  %v90 = vlaneseq
  %v91 = vshrl.u32 %v90, 7
  %v92 = vsub.s32 2, %v91
  %v93 = vrot.slane %v80, %v92
  %v94 = vlaneseq
  %v95 = vshrl.u32 %v94, 7
  %v96 = vsub.s32 3, %v95
  %v97 = vrot.slane %v80, %v96
  %v104 = vunpack.c.l.b16 %v14
  %v105 = vunpack.c.h.b16 %v14
  %v106 = vunpack.c.l.b16 %v15
  %v107 = vunpack.c.h.b16 %v15
  %v108 = vpack.c.b16 %v106, %v104
  %v109 = vpack.c.b16 %v107, %v105
  %v176 = vunpack.c.l.b16 %v16
  %v177 = vunpack.c.h.b16 %v16
  %v178 = vunpack.c.l.b16 %v17
  %v179 = vunpack.c.h.b16 %v17
  %v180 = vunpack.c.l.b16 %v18
  %v181 = vunpack.c.h.b16 %v18
  %v182 = vunpack.c.l.b16 %v19
  %v183 = vunpack.c.h.b16 %v19
  %v184 = vunpack.c.l.b16 %v20
  %v185 = vunpack.c.h.b16 %v20
  %v186 = vunpack.c.l.b16 %v21
  %v187 = vunpack.c.h.b16 %v21
  %v188 = vunpack.c.l.b16 %v22
  %v189 = vunpack.c.h.b16 %v22
  %v190 = vunpack.c.l.b16 %v23
  %v191 = vunpack.c.h.b16 %v23
  %v192 = vunpack.c.l.b16 %v24
  %v193 = vunpack.c.h.b16 %v24
  %v194 = vunpack.c.l.b16 %v25
  %v195 = vunpack.c.h.b16 %v25
  %v196 = vunpack.c.l.b16 %v26
  %v197 = vunpack.c.h.b16 %v26
  %v198 = vunpack.c.l.b16 %v27
  %v199 = vunpack.c.h.b16 %v27
  %v200 = vunpack.c.l.b16 %v28
  %v201 = vunpack.c.h.b16 %v28
  %v202 = vunpack.c.l.b16 %v29
  %v203 = vunpack.c.h.b16 %v29
  %v204 = vunpack.c.l.b16 %v30
  %v205 = vunpack.c.h.b16 %v30
  %v206 = vunpack.c.l.b16 %v31
  %v207 = vunpack.c.h.b16 %v31
  %v208 = vunpack.c.l.b16 %v32
  %v209 = vunpack.c.h.b16 %v32
  %v210 = vunpack.c.l.b16 %v33
  %v211 = vunpack.c.h.b16 %v33
  %v212 = vunpack.c.l.b16 %v34
  %v213 = vunpack.c.h.b16 %v34
  %v214 = vunpack.c.l.b16 %v35
  %v215 = vunpack.c.h.b16 %v35
  %v216 = vunpack.c.l.b16 %v36
  %v217 = vunpack.c.h.b16 %v36
  %v218 = vunpack.c.l.b16 %v37
  %v219 = vunpack.c.h.b16 %v37
  %v220 = vunpack.c.l.b16 %v38
  %v221 = vunpack.c.h.b16 %v38
  %v222 = vunpack.c.l.b16 %v39
  %v223 = vunpack.c.h.b16 %v39
  %v224 = vunpack.c.l.b16 %v40
  %v225 = vunpack.c.h.b16 %v40
  %v226 = vunpack.c.l.b16 %v41
  %v227 = vunpack.c.h.b16 %v41
  %v228 = vunpack.c.l.b16 %v42
  %v229 = vunpack.c.h.b16 %v42
  %v230 = vunpack.c.l.b16 %v43
  %v231 = vunpack.c.h.b16 %v43
  %v232 = vunpack.c.l.b16 %v44
  %v233 = vunpack.c.h.b16 %v44
  %v234 = vunpack.c.l.b16 %v45
  %v235 = vunpack.c.h.b16 %v45
  %v236 = vunpack.c.l.b16 %v46
  %v237 = vunpack.c.h.b16 %v46
  %v238 = vunpack.c.l.b16 %v47
  %v239 = vunpack.c.h.b16 %v47
  %v240 = vunpack.c.l.b16 %v48
  %v241 = vunpack.c.h.b16 %v48
  %v242 = vunpack.c.l.b16 %v49
  %v243 = vunpack.c.h.b16 %v49
  %v244 = vunpack.c.l.b16 %v50
  %v245 = vunpack.c.h.b16 %v50
  %v246 = vunpack.c.l.b16 %v51
  %v247 = vunpack.c.h.b16 %v51
  %v248 = vunpack.c.l.b16 %v52
  %v249 = vunpack.c.h.b16 %v52
  %v250 = vunpack.c.l.b16 %v53
  %v251 = vunpack.c.h.b16 %v53
  %v252 = vunpack.c.l.b16 %v54
  %v253 = vunpack.c.h.b16 %v54
  %v254 = vunpack.c.l.b16 %v55
  %v255 = vunpack.c.h.b16 %v55
  %v256 = vunpack.c.l.b16 %v56
  %v257 = vunpack.c.h.b16 %v56
  %v258 = vunpack.c.l.b16 %v57
  %v259 = vunpack.c.h.b16 %v57
  %v260 = vunpack.c.l.b16 %v58
  %v261 = vunpack.c.h.b16 %v58
  %v262 = vunpack.c.l.b16 %v59
  %v263 = vunpack.c.h.b16 %v59
  %v264 = vunpack.c.l.b16 %v60
  %v265 = vunpack.c.h.b16 %v60
  %v266 = vunpack.c.l.b16 %v61
  %v267 = vunpack.c.h.b16 %v61
  %v268 = vunpack.c.l.b16 %v62
  %v269 = vunpack.c.h.b16 %v62
  %v270 = vunpack.c.l.b16 %v63
  %v271 = vunpack.c.h.b16 %v63
  %v272 = vunpack.c.l.b16 %v64
  %v273 = vunpack.c.h.b16 %v64
  %v274 = vunpack.c.l.b16 %v65
  %v275 = vunpack.c.h.b16 %v65
  %v276 = vunpack.c.l.b16 %v66
  %v277 = vunpack.c.h.b16 %v66
  %v278 = vunpack.c.l.b16 %v67
  %v279 = vunpack.c.h.b16 %v67
  %v280 = vunpack.c.l.b16 %v68
  %v281 = vunpack.c.h.b16 %v68
  %v282 = vunpack.c.l.b16 %v69
  %v283 = vunpack.c.h.b16 %v69
  %v284 = vunpack.c.l.b16 %v70
  %v285 = vunpack.c.h.b16 %v70
  %v286 = vunpack.c.l.b16 %v71
  %v287 = vunpack.c.h.b16 %v71
  %v288 = vunpack.c.l.b16 %v72
  %v289 = vunpack.c.h.b16 %v72
  %v290 = vunpack.c.l.b16 %v73
  %v291 = vunpack.c.h.b16 %v73
  %v292 = vunpack.c.l.b16 %v74
  %v293 = vunpack.c.h.b16 %v74
  %v294 = vunpack.c.l.b16 %v75
  %v295 = vunpack.c.h.b16 %v75
  %v296 = vunpack.c.l.b16 %v76
  %v297 = vunpack.c.h.b16 %v76
  %v298 = vunpack.c.l.b16 %v77
  %v299 = vunpack.c.h.b16 %v77
  %v300 = vunpack.c.l.b16 %v78
  %v301 = vunpack.c.h.b16 %v78
  %v302 = vunpack.c.l.b16 %v79
  %v303 = vunpack.c.h.b16 %v79
  %v304 = vpack.c.b16 %v180, %v176
  %v305 = vpack.c.b16 %v181, %v177
  %v306 = vpack.c.b16 %v182, %v178
  %v307 = vpack.c.b16 %v183, %v179
  %v308 = vpack.c.b16 %v188, %v184
  %v309 = vpack.c.b16 %v189, %v185
  %v310 = vpack.c.b16 %v190, %v186
  %v311 = vpack.c.b16 %v191, %v187
  %v312 = vpack.c.b16 %v196, %v192
  %v313 = vpack.c.b16 %v197, %v193
  %v314 = vpack.c.b16 %v198, %v194
  %v315 = vpack.c.b16 %v199, %v195
  %v316 = vpack.c.b16 %v204, %v200
  %v317 = vpack.c.b16 %v205, %v201
  %v318 = vpack.c.b16 %v206, %v202
  %v319 = vpack.c.b16 %v207, %v203
  %v320 = vpack.c.b16 %v212, %v208
  %v321 = vpack.c.b16 %v213, %v209
  %v322 = vpack.c.b16 %v214, %v210
  %v323 = vpack.c.b16 %v215, %v211
  %v324 = vpack.c.b16 %v220, %v216
  %v325 = vpack.c.b16 %v221, %v217
  %v326 = vpack.c.b16 %v222, %v218
  %v327 = vpack.c.b16 %v223, %v219
  %v328 = vpack.c.b16 %v228, %v224
  %v329 = vpack.c.b16 %v229, %v225
  %v330 = vpack.c.b16 %v230, %v226
  %v331 = vpack.c.b16 %v231, %v227
  %v332 = vpack.c.b16 %v236, %v232
  %v333 = vpack.c.b16 %v237, %v233
  %v334 = vpack.c.b16 %v238, %v234
  %v335 = vpack.c.b16 %v239, %v235
  %v336 = vpack.c.b16 %v244, %v240
  %v337 = vpack.c.b16 %v245, %v241
  %v338 = vpack.c.b16 %v246, %v242
  %v339 = vpack.c.b16 %v247, %v243
  %v340 = vpack.c.b16 %v252, %v248
  %v341 = vpack.c.b16 %v253, %v249
  %v342 = vpack.c.b16 %v254, %v250
  %v343 = vpack.c.b16 %v255, %v251
  %v344 = vpack.c.b16 %v260, %v256
  %v345 = vpack.c.b16 %v261, %v257
  %v346 = vpack.c.b16 %v262, %v258
  %v347 = vpack.c.b16 %v263, %v259
  %v348 = vpack.c.b16 %v268, %v264
  %v349 = vpack.c.b16 %v269, %v265
  %v350 = vpack.c.b16 %v270, %v266
  %v351 = vpack.c.b16 %v271, %v267
  %v352 = vpack.c.b16 %v276, %v272
  %v353 = vpack.c.b16 %v277, %v273
  %v354 = vpack.c.b16 %v278, %v274
  %v355 = vpack.c.b16 %v279, %v275
  %v356 = vpack.c.b16 %v284, %v280
  %v357 = vpack.c.b16 %v285, %v281
  %v358 = vpack.c.b16 %v286, %v282
  %v359 = vpack.c.b16 %v287, %v283
  %v360 = vpack.c.b16 %v292, %v288
  %v361 = vpack.c.b16 %v293, %v289
  %v362 = vpack.c.b16 %v294, %v290
  %v363 = vpack.c.b16 %v295, %v291
  %v364 = vpack.c.b16 %v300, %v296
  %v365 = vpack.c.b16 %v301, %v297
  %v366 = vpack.c.b16 %v302, %v298
  %v367 = vpack.c.b16 %v303, %v299
  %432 = vmatprep.subr.bf16.mxu0 %v305
  %433 = vmatpush1.bf16.msra.mxu0 %v304
  %434 = vmatprep.subr.bf16.mxu0 %v309
  %435 = vmatpush1.bf16.msra.mxu0 %v308
  %436 = vmatprep.subr.bf16.mxu0 %v313
  %437 = vmatpush1.bf16.msra.mxu0 %v312
  %438 = vmatprep.subr.bf16.mxu0 %v317
  %439 = vmatpush1.bf16.msra.mxu0 %v316
  %440 = vmatprep.subr.bf16.mxu0 %v321
  %441 = vmatpush1.bf16.msra.mxu0 %v320
  %442 = vmatprep.subr.bf16.mxu0 %v325
  %443 = vmatpush1.bf16.msra.mxu0 %v324
  %444 = vmatprep.subr.bf16.mxu0 %v329
  %445 = vmatpush1.bf16.msra.mxu0 %v328
  %446 = vmatprep.subr.bf16.mxu0 %v333
  %447 = vmatpush1.bf16.msra.mxu0 %v332
  %448 = vmatprep.subr.bf16.mxu0 %v337
  %449 = vmatpush1.bf16.msra.mxu0 %v336
  %450 = vmatprep.subr.bf16.mxu0 %v341
  %451 = vmatpush1.bf16.msra.mxu0 %v340
  %452 = vmatprep.subr.bf16.mxu0 %v345
  %453 = vmatpush1.bf16.msra.mxu0 %v344
  %454 = vmatprep.subr.bf16.mxu0 %v349
  %455 = vmatpush1.bf16.msra.mxu0 %v348
  %456 = vmatprep.subr.bf16.mxu0 %v353
  %457 = vmatpush1.bf16.msra.mxu0 %v352
  %458 = vmatprep.subr.bf16.mxu0 %v357
  %459 = vmatpush1.bf16.msra.mxu0 %v356
  %460 = vmatprep.subr.bf16.mxu0 %v361
  %461 = vmatpush1.bf16.msra.mxu0 %v360
  %462 = vmatprep.subr.bf16.mxu0 %v365
  %463 = vmatpush1.bf16.msra.mxu0 %v364
  %464 = vmatprep.mubr.bf16.mxu0 %v109
  %465 = vmatmul.mubr.bf16.gmra.mrb[0].mxu0 %v108
  %v466 = vpop.f32.mrb[0].mxu0
  %v467 = vadd.f32 %v85, %v466
  %v468 = vpop.f32.mrb[0].mxu0
  %v469 = vadd.f32 %v89, %v468
  %v470 = vpop.f32.mrb[0].mxu0
  %v471 = vadd.f32 %v85, %v470
  %v472 = vpop.f32.mrb[0].mxu0
  %v473 = vadd.f32 %v89, %v472
  %474 = vdwg.mxu0
  %475 = vmatprep.subr.bf16.mxu0 %v307
  %476 = vmatpush1.bf16.msra.mxu0 %v306
  %477 = vmatprep.subr.bf16.mxu0 %v311
  %478 = vmatpush1.bf16.msra.mxu0 %v310
  %479 = vmatprep.subr.bf16.mxu0 %v315
  %480 = vmatpush1.bf16.msra.mxu0 %v314
  %481 = vmatprep.subr.bf16.mxu0 %v319
  %482 = vmatpush1.bf16.msra.mxu0 %v318
  %483 = vmatprep.subr.bf16.mxu0 %v323
  %484 = vmatpush1.bf16.msra.mxu0 %v322
  %485 = vmatprep.subr.bf16.mxu0 %v327
  %486 = vmatpush1.bf16.msra.mxu0 %v326
  %487 = vmatprep.subr.bf16.mxu0 %v331
  %488 = vmatpush1.bf16.msra.mxu0 %v330
  %489 = vmatprep.subr.bf16.mxu0 %v335
  %490 = vmatpush1.bf16.msra.mxu0 %v334
  %491 = vmatprep.subr.bf16.mxu0 %v339
  %492 = vmatpush1.bf16.msra.mxu0 %v338
  %493 = vmatprep.subr.bf16.mxu0 %v343
  %494 = vmatpush1.bf16.msra.mxu0 %v342
  %495 = vmatprep.subr.bf16.mxu0 %v347
  %496 = vmatpush1.bf16.msra.mxu0 %v346
  %497 = vmatprep.subr.bf16.mxu0 %v351
  %498 = vmatpush1.bf16.msra.mxu0 %v350
  %499 = vmatprep.subr.bf16.mxu0 %v355
  %500 = vmatpush1.bf16.msra.mxu0 %v354
  %501 = vmatprep.subr.bf16.mxu0 %v359
  %502 = vmatpush1.bf16.msra.mxu0 %v358
  %503 = vmatprep.subr.bf16.mxu0 %v363
  %504 = vmatpush1.bf16.msra.mxu0 %v362
  %505 = vmatprep.subr.bf16.mxu0 %v367
  %506 = vmatpush1.bf16.msra.mxu0 %v366
  %507 = vmatprep.mubr.bf16.mxu0 %v109
  %508 = vmatmul.mubr.bf16.gmra.mrb[0].mxu0 %v108
  %v509 = vpop.f32.mrb[0].mxu0
  %v510 = vadd.f32 %v93, %v509
  %v511 = vpop.f32.mrb[0].mxu0
  %v512 = vadd.f32 %v97, %v511
  %v513 = vpop.f32.mrb[0].mxu0
  %v514 = vadd.f32 %v93, %v513
  %v515 = vpop.f32.mrb[0].mxu0
  %v516 = vadd.f32 %v97, %v515
  %517 = vdwg.mxu0
  %v518 = vpack.c.bf16 %v471, %v467
  %v519 = vpack.c.bf16 %v473, %v469
  %v520 = vpack.c.bf16 %v514, %v510
  %v521 = vpack.c.bf16 %v516, %v512
  %v526 = vunpack.c.l.b16 %v518
  %v527 = vunpack.c.l.b16 %v519
  %v528 = vunpack.c.l.b16 %v520
  %v529 = vunpack.c.l.b16 %v521
  %v530 = vunpack.c.h.b16 %v518
  %v531 = vunpack.c.h.b16 %v519
  %v532 = vunpack.c.h.b16 %v520
  %v533 = vunpack.c.h.b16 %v521
  %v534 = vpack.c.b16 %v527, %v526
  %v535 = vpack.c.b16 %v529, %v528
  %v536 = vpack.c.b16 %v531, %v530
  %v537 = vpack.c.b16 %v533, %v532
  %542 = vst [vmem:[%s3] sm:$0xff] %v534
  %543 = vst [vmem:[%s3 + $0x8] sm:$0xff] %v535
  %544 = vst [vmem:[%s3 + $0x10] sm:$0xff] %v536
  %545 = vst [vmem:[%s3 + $0x18] sm:$0xff] %v537
  // Predicated region
  $region14: #{transformer_forward.32} parent=0 // pred_check
    _
  $region15: #{transformer_forward.32} parent=0 // pred_check_branch
    %547 = sbr.rel (0) target = $region17
  $region16: #{transformer_forward.32} parent=0 // pred_region
    _
  $region17: #{transformer_forward.32} parent=0 // pred_fallthru
    _
  // Predicated region
  $region18: #{transformer_forward.32} parent=0 // pred_check
    _
  $region19: #{transformer_forward.32} parent=0 // pred_check_branch
    %549 = sbr.rel (0) target = $region21
  $region20: #{transformer_forward.32} parent=0 // pred_region
    _
  $region21: #{transformer_forward.32} parent=0 // pred_fallthru
    _

// kernel: transformer_forward.25
$region0: #{transformer_forward.25}
  #allocation0 [shape = 'u32[]', space=smem, size = 0x4, offset = 0x4, fixed_abs, tag = 'smem constant byte address 0x4 - core index']
  #allocation1 [shape = 'u32[144,128]{1,0:T(1,128)}', space=vmem, size = 0x12000, scoped, tag = 'internal scratch']
  #allocation2 [shape = 'f32[8,256]{1,0:T(8,128)}', space=vmem, size = 0x2000, scoped, tag = 'scratch operand']
  %s0 = inlined_call_operand.vmem [shape: bf16[2,8,256], index: 0, kind: input, shape index: {}]
  %s1 = inlined_call_operand.vmem [shape: bf16[2,8,256], index: 1, kind: input, shape index: {}]
  %s2 = inlined_call_operand.vmem [shape: bf16[2,8,512], index: 2, kind: input, shape index: {}, may-alias: {2,3}]
  %s3 = inlined_call_operand.vmem [shape: bf16[2,8,512], index: 3, kind: input, shape index: {}, may-alias: {2,3}]
  %s4 = inlined_call_operand.vmem [shape: f32[2,1,8], index: 4, kind: input, shape index: {}]
  %s5 = inlined_call_operand.vmem [shape: bf16[256,256], index: 5, kind: input, shape index: {}]
  %s6 = inlined_call_operand.vmem [shape: f32[1,256], index: 6, kind: input, shape index: {}]
  %s7 = inlined_call_operand.vmem [shape: f32[1,256], index: 7, kind: input, shape index: {}]
  %s8 = inlined_call_operand.vmem [shape: f32[1,256], index: 8, kind: input, shape index: {}]
  %s9 = inlined_call_operand.vmem [shape: bf16[2,8,256], index: 9, kind: output, shape index: {}]
  %s10 = sld [smem:[#allocation0]]
  $region77: #{transformer_forward.25} parent=0
    _
  %s12 = ssub.s32 1, %s10
  %s13 = scalar_select 0, %s12, %s10
  loop: start=0, step=1, limit=6
  $region2: #{transformer_forward.25} parent=0 // loop_pre_header
    _
  $region3: #{transformer_forward.25} parent=0 // loop_header
    %s15 = sphi 0, %s19
    %p16 = scmp.ge.s32.totalorder %s15, 6
    %s22 = sphi 0, %s34
    %s23 = sphi 0, %s30
    %s24 = sphi 0, %s22
    %s25 = sphi 0, %s23
    %s26 = sphi 0, %s24
    %s27 = sphi 0, %s25
    %s37 = sphi 0, %s39
    %s40 = sphi 0, %s37
    %s41 = sphi 0, %s40
    %s57 = sphi 0, %s41
    %s65 = sphi 0, %s67
    %s68 = sphi 0, %s65
    %s69 = sphi 0, %s68
    %s85 = sphi 0, %s69
    %s93 = sphi 0, %s95
    %s96 = sphi 0, %s93
    %s97 = sphi 0, %s96
    %s113 = sphi 0, %s97
    %s123 = sphi 0, %s125
    %s126 = sphi 0, %s123
    %s127 = sphi 0, %s126
    %s143 = sphi 0, %s127
    %s149 = sphi 0, %s151
    %s152 = sphi 0, %s149
    %s153 = sphi 0, %s152
    %s169 = sphi 0, %s153
    %s175 = sphi 0, %s177
    %s178 = sphi 0, %s175
    %s179 = sphi 0, %s178
    %s195 = sphi 0, %s179
    %s199 = sphi 0, %s199
    %s201 = sphi 0, %s199
    %s202 = sphi 0, %s201
    %s216 = sphi 0, %s202
    %s220 = sphi 0, %s220
    %s222 = sphi 0, %s220
    %s223 = sphi 0, %s222
    %s237 = sphi 0, %s223
    %s241 = sphi 0, %s241
    %s243 = sphi 0, %s241
    %s244 = sphi 0, %s243
    %s258 = sphi 0, %s244
    %s264 = sphi 0, %s266
    %s267 = sphi 0, %s264
    %s268 = sphi 0, %s267
    %s284 = sphi 0, %s268
  $region4: #{transformer_forward.25} parent=0 // loop_header_branch
    %18 = sbr.rel (%p16) target = $region8
  $region5: #{transformer_forward.25} parent=0 // loop_body
    %s20 = ssub.s32 %s15, 1
    %s21 = ssub.s32 %s15, 2
    %s28 = sadd.s32 1, %s23
    %p29 = scmp.ge.s32.totalorder %s28, 2
    %s30 = scalar_select %p29, 0, %s28
    %s31 = sadd.s32 1, %s22
    %s32 = scalar_select %p29, %s31, %s22
    %p33 = scmp.ge.s32.totalorder %s32, 2
    %s34 = scalar_select %p33, 0, %s32
    %s35 = ssub.s32 %s22, %s34
    %p36 = scmp.eq.s32.totalorder %s35, 0
    %s38 = sadd.s32 %s37, 1
    %s39 = scalar_select %p36, %s37, %s38
    %p42 = pneg %p36
    %p43 = scmp.eq.s32.totalorder %s15, 3
    %p44 = por %p42, %p43
    %p45 = scmp.ne.s32.totalorder %s37, %s40
    %p46 = scmp.eq.s32.totalorder %s15, 0
    %p47 = por %p45, %p46
    %p48 = scmp.ne.s32.totalorder %s37, %s40
    %p49 = scmp.eq.s32.totalorder %s20, 3
    %p50 = por %p48, %p49
    %p51 = scmp.ne.s32.totalorder %s40, %s41
    %p52 = scmp.eq.s32.totalorder %s20, 0
    %p53 = por %p51, %p52
    %p54 = scmp.ne.s32.totalorder %s40, %s41
    %p55 = scmp.eq.s32.totalorder %s21, 3
    %p56 = por %p54, %p55
    %p58 = scmp.ne.s32.totalorder %s41, %s57
    %p59 = scmp.eq.s32.totalorder %s21, 0
    %p60 = por %p58, %p59
    %s61 = ssub.s32 %s22, %s34
    %s62 = ssub.s32 %s23, %s30
    %s63 = sor.u32 %s61, %s62
    %p64 = scmp.eq.s32.totalorder %s63, 0
    %s66 = sadd.s32 %s65, 1
    %s67 = scalar_select %p64, %s65, %s66
    %p70 = pneg %p64
    %p71 = scmp.eq.s32.totalorder %s15, 3
    %p72 = por %p70, %p71
    %p73 = scmp.ne.s32.totalorder %s65, %s68
    %p74 = scmp.eq.s32.totalorder %s15, 0
    %p75 = por %p73, %p74
    %p76 = scmp.ne.s32.totalorder %s65, %s68
    %p77 = scmp.eq.s32.totalorder %s20, 3
    %p78 = por %p76, %p77
    %p79 = scmp.ne.s32.totalorder %s68, %s69
    %p80 = scmp.eq.s32.totalorder %s20, 0
    %p81 = por %p79, %p80
    %p82 = scmp.ne.s32.totalorder %s68, %s69
    %p83 = scmp.eq.s32.totalorder %s21, 3
    %p84 = por %p82, %p83
    %p86 = scmp.ne.s32.totalorder %s69, %s85
    %p87 = scmp.eq.s32.totalorder %s21, 0
    %p88 = por %p86, %p87
    %s89 = ssub.s32 %s22, %s34
    %s90 = ssub.s32 %s23, %s30
    %s91 = sor.u32 %s89, %s90
    %p92 = scmp.eq.s32.totalorder %s91, 0
    %s94 = sadd.s32 %s93, 1
    %s95 = scalar_select %p92, %s93, %s94
    %p98 = pneg %p92
    %p99 = scmp.eq.s32.totalorder %s15, 3
    %p100 = por %p98, %p99
    %p101 = scmp.ne.s32.totalorder %s93, %s96
    %p102 = scmp.eq.s32.totalorder %s15, 0
    %p103 = por %p101, %p102
    %p104 = scmp.ne.s32.totalorder %s93, %s96
    %p105 = scmp.eq.s32.totalorder %s20, 3
    %p106 = por %p104, %p105
    %p107 = scmp.ne.s32.totalorder %s96, %s97
    %p108 = scmp.eq.s32.totalorder %s20, 0
    %p109 = por %p107, %p108
    %p110 = scmp.ne.s32.totalorder %s96, %s97
    %p111 = scmp.eq.s32.totalorder %s21, 3
    %p112 = por %p110, %p111
    %p114 = scmp.ne.s32.totalorder %s97, %s113
    %p115 = scmp.eq.s32.totalorder %s21, 0
    %p116 = por %p114, %p115
    %s117 = sadd.s32 %s23, 2
    %s118 = sadd.s32 %s30, 2
    %s119 = ssub.s32 %s22, %s34
    %s120 = ssub.s32 %s117, %s118
    %s121 = sor.u32 %s119, %s120
    %p122 = scmp.eq.s32.totalorder %s121, 0
    %s124 = sadd.s32 %s123, 1
    %s125 = scalar_select %p122, %s123, %s124
    %p128 = pneg %p122
    %p129 = scmp.eq.s32.totalorder %s15, 3
    %p130 = por %p128, %p129
    %p131 = scmp.ne.s32.totalorder %s123, %s126
    %p132 = scmp.eq.s32.totalorder %s15, 0
    %p133 = por %p131, %p132
    %p134 = scmp.ne.s32.totalorder %s123, %s126
    %p135 = scmp.eq.s32.totalorder %s20, 3
    %p136 = por %p134, %p135
    %p137 = scmp.ne.s32.totalorder %s126, %s127
    %p138 = scmp.eq.s32.totalorder %s20, 0
    %p139 = por %p137, %p138
    %p140 = scmp.ne.s32.totalorder %s126, %s127
    %p141 = scmp.eq.s32.totalorder %s21, 3
    %p142 = por %p140, %p141
    %p144 = scmp.ne.s32.totalorder %s127, %s143
    %p145 = scmp.eq.s32.totalorder %s21, 0
    %p146 = por %p144, %p145
    %s147 = ssub.s32 %s22, %s34
    %p148 = scmp.eq.s32.totalorder %s147, 0
    %s150 = sadd.s32 %s149, 1
    %s151 = scalar_select %p148, %s149, %s150
    %p154 = pneg %p148
    %p155 = scmp.eq.s32.totalorder %s15, 3
    %p156 = por %p154, %p155
    %p157 = scmp.ne.s32.totalorder %s149, %s152
    %p158 = scmp.eq.s32.totalorder %s15, 0
    %p159 = por %p157, %p158
    %p160 = scmp.ne.s32.totalorder %s149, %s152
    %p161 = scmp.eq.s32.totalorder %s20, 3
    %p162 = por %p160, %p161
    %p163 = scmp.ne.s32.totalorder %s152, %s153
    %p164 = scmp.eq.s32.totalorder %s20, 0
    %p165 = por %p163, %p164
    %p166 = scmp.ne.s32.totalorder %s152, %s153
    %p167 = scmp.eq.s32.totalorder %s21, 3
    %p168 = por %p166, %p167
    %p170 = scmp.ne.s32.totalorder %s153, %s169
    %p171 = scmp.eq.s32.totalorder %s21, 0
    %p172 = por %p170, %p171
    %s173 = ssub.s32 %s23, %s30
    %p174 = scmp.eq.s32.totalorder %s173, 0
    %s176 = sadd.s32 %s175, 1
    %s177 = scalar_select %p174, %s175, %s176
    %p180 = pneg %p174
    %p181 = scmp.eq.s32.totalorder %s15, 3
    %p182 = por %p180, %p181
    %p183 = scmp.ne.s32.totalorder %s175, %s178
    %p184 = scmp.eq.s32.totalorder %s15, 0
    %p185 = por %p183, %p184
    %p186 = scmp.ne.s32.totalorder %s175, %s178
    %p187 = scmp.eq.s32.totalorder %s20, 3
    %p188 = por %p186, %p187
    %p189 = scmp.ne.s32.totalorder %s178, %s179
    %p190 = scmp.eq.s32.totalorder %s20, 0
    %p191 = por %p189, %p190
    %p192 = scmp.ne.s32.totalorder %s178, %s179
    %p193 = scmp.eq.s32.totalorder %s21, 3
    %p194 = por %p192, %p193
    %p196 = scmp.ne.s32.totalorder %s179, %s195
    %p197 = scmp.eq.s32.totalorder %s21, 0
    %p198 = por %p196, %p197
    %s200 = sadd.s32 %s199, 1
    %p203 = scmp.eq.s32.totalorder %s15, 3
    %p204 = scmp.ne.s32.totalorder %s199, %s201
    %p205 = scmp.eq.s32.totalorder %s15, 0
    %p206 = por %p204, %p205
    %p207 = scmp.ne.s32.totalorder %s199, %s201
    %p208 = scmp.eq.s32.totalorder %s20, 3
    %p209 = por %p207, %p208
    %p210 = scmp.ne.s32.totalorder %s201, %s202
    %p211 = scmp.eq.s32.totalorder %s20, 0
    %p212 = por %p210, %p211
    %p213 = scmp.ne.s32.totalorder %s201, %s202
    %p214 = scmp.eq.s32.totalorder %s21, 3
    %p215 = por %p213, %p214
    %p217 = scmp.ne.s32.totalorder %s202, %s216
    %p218 = scmp.eq.s32.totalorder %s21, 0
    %p219 = por %p217, %p218
    %s221 = sadd.s32 %s220, 1
    %p224 = scmp.eq.s32.totalorder %s15, 3
    %p225 = scmp.ne.s32.totalorder %s220, %s222
    %p226 = scmp.eq.s32.totalorder %s15, 0
    %p227 = por %p225, %p226
    %p228 = scmp.ne.s32.totalorder %s220, %s222
    %p229 = scmp.eq.s32.totalorder %s20, 3
    %p230 = por %p228, %p229
    %p231 = scmp.ne.s32.totalorder %s222, %s223
    %p232 = scmp.eq.s32.totalorder %s20, 0
    %p233 = por %p231, %p232
    %p234 = scmp.ne.s32.totalorder %s222, %s223
    %p235 = scmp.eq.s32.totalorder %s21, 3
    %p236 = por %p234, %p235
    %p238 = scmp.ne.s32.totalorder %s223, %s237
    %p239 = scmp.eq.s32.totalorder %s21, 0
    %p240 = por %p238, %p239
    %s242 = sadd.s32 %s241, 1
    %p245 = scmp.eq.s32.totalorder %s15, 3
    %p246 = scmp.ne.s32.totalorder %s241, %s243
    %p247 = scmp.eq.s32.totalorder %s15, 0
    %p248 = por %p246, %p247
    %p249 = scmp.ne.s32.totalorder %s241, %s243
    %p250 = scmp.eq.s32.totalorder %s20, 3
    %p251 = por %p249, %p250
    %p252 = scmp.ne.s32.totalorder %s243, %s244
    %p253 = scmp.eq.s32.totalorder %s20, 0
    %p254 = por %p252, %p253
    %p255 = scmp.ne.s32.totalorder %s243, %s244
    %p256 = scmp.eq.s32.totalorder %s21, 3
    %p257 = por %p255, %p256
    %p259 = scmp.ne.s32.totalorder %s244, %s258
    %p260 = scmp.eq.s32.totalorder %s21, 0
    %p261 = por %p259, %p260
    %s262 = ssub.s32 %s22, %s34
    %p263 = scmp.eq.s32.totalorder %s262, 0
    %s265 = sadd.s32 %s264, 1
    %s266 = scalar_select %p263, %s264, %s265
    %p269 = pneg %p263
    %p270 = scmp.eq.s32.totalorder %s15, 3
    %p271 = por %p269, %p270
    %p272 = scmp.ne.s32.totalorder %s264, %s267
    %p273 = scmp.eq.s32.totalorder %s15, 0
    %p274 = por %p272, %p273
    %p275 = scmp.ne.s32.totalorder %s264, %s267
    %p276 = scmp.eq.s32.totalorder %s20, 3
    %p277 = por %p275, %p276
    %p278 = scmp.ne.s32.totalorder %s267, %s268
    %p279 = scmp.eq.s32.totalorder %s20, 0
    %p280 = por %p278, %p279
    %p281 = scmp.ne.s32.totalorder %s267, %s268
    %p282 = scmp.eq.s32.totalorder %s21, 3
    %p283 = por %p281, %p282
    %p285 = scmp.ne.s32.totalorder %s268, %s284
    %p286 = scmp.eq.s32.totalorder %s21, 0
    %p287 = por %p285, %p286
    %p288 = scmp.le.s32.totalorder 1, %s15
    %p289 = scmp.lt.s32.totalorder %s15, 5
    %p290 = pnand %p288, %p289
    %p291 = pneg %p290
    // Predicated region
    $region9: #{transformer_forward.25} parent=5 // pred_check
      _
    $region10: #{transformer_forward.25} parent=5 // pred_check_branch
      %293 = sbr.rel (%p290) target = $region12
    $region11: #{transformer_forward.25} parent=5 // pred_region
      %s294 = ssub.s32 %s15, 1
      // Predicated region
      $region13: #{transformer_forward.25} parent=11 // pred_check
        %p295 = pneg %p212
      $region14: #{transformer_forward.25} parent=11 // pred_check_branch
        %297 = sbr.rel (%p295) target = $region16
      $region15: #{transformer_forward.25} parent=11 // pred_region
        _
      $region16: #{transformer_forward.25} parent=11 // pred_fallthru
        _
      // Predicated region
      $region17: #{transformer_forward.25} parent=11 // pred_check
        %p298 = pneg %p233
      $region18: #{transformer_forward.25} parent=11 // pred_check_branch
        %300 = sbr.rel (%p298) target = $region20
      $region19: #{transformer_forward.25} parent=11 // pred_region
        _
      $region20: #{transformer_forward.25} parent=11 // pred_fallthru
        _
      // Predicated region
      $region21: #{transformer_forward.25} parent=11 // pred_check
        %p301 = pneg %p254
      $region22: #{transformer_forward.25} parent=11 // pred_check_branch
        %303 = sbr.rel (%p301) target = $region24
      $region23: #{transformer_forward.25} parent=11 // pred_region
        _
      $region24: #{transformer_forward.25} parent=11 // pred_fallthru
        _
    $region12: #{transformer_forward.25} parent=5 // pred_fallthru
      _
    %p304 = scmp.lt.s32.totalorder %s15, 4
    // Predicated region
    $region25: #{transformer_forward.25} parent=5 // pred_check
      %p305 = pneg %p304
    $region26: #{transformer_forward.25} parent=5 // pred_check_branch
      %307 = sbr.rel (%p305) target = $region28
    $region27: #{transformer_forward.25} parent=5 // pred_region
      // Predicated region
      $region29: #{transformer_forward.25} parent=27 // pred_check
        %p308 = pneg %p47
      $region30: #{transformer_forward.25} parent=27 // pred_check_branch
        %310 = sbr.rel (%p308) target = $region32
      $region31: #{transformer_forward.25} parent=27 // pred_region
        %p311 = scmp.lt.s32.totalorder %s22, 1
        %s312 = scalar_select %p311, %s22, 1
        %s313 = smul.addr %s312, 2
        %s314 = smul.addr %s313, 4
        %s315 = scalar_lea.vmem %s0, %s314
      $region32: #{transformer_forward.25} parent=27 // pred_fallthru
        _
      // Predicated region
      $region33: #{transformer_forward.25} parent=27 // pred_check
        %p316 = pneg %p75
      $region34: #{transformer_forward.25} parent=27 // pred_check_branch
        %318 = sbr.rel (%p316) target = $region36
      $region35: #{transformer_forward.25} parent=27 // pred_region
        %p319 = scmp.lt.s32.totalorder %s22, 1
        %s320 = scalar_select %p319, %s22, 1
        %p321 = scmp.lt.s32.totalorder %s23, 1
        %s322 = scalar_select %p321, %s23, 1
        %s323 = smul.addr %s320, 2
        %s324 = sadd.s32 %s322, %s323
        %s325 = smul.addr %s324, 4
        %s326 = scalar_lea.vmem %s1, %s325
      $region36: #{transformer_forward.25} parent=27 // pred_fallthru
        _
      // Predicated region
      $region37: #{transformer_forward.25} parent=27 // pred_check
        %p327 = pneg %p103
      $region38: #{transformer_forward.25} parent=27 // pred_check_branch
        %329 = sbr.rel (%p327) target = $region40
      $region39: #{transformer_forward.25} parent=27 // pred_region
        %p330 = scmp.lt.s32.totalorder %s22, 1
        %s331 = scalar_select %p330, %s22, 1
        %p332 = scmp.lt.s32.totalorder %s23, 3
        %s333 = scalar_select %p332, %s23, 3
        %s334 = smul.addr %s331, 4
        %s335 = sadd.s32 %s333, %s334
        %s336 = smul.addr %s335, 4
        %s337 = scalar_lea.vmem %s2, %s336
      $region40: #{transformer_forward.25} parent=27 // pred_fallthru
        _
      // Predicated region
      $region41: #{transformer_forward.25} parent=27 // pred_check
        %p338 = pneg %p133
      $region42: #{transformer_forward.25} parent=27 // pred_check_branch
        %340 = sbr.rel (%p338) target = $region44
      $region43: #{transformer_forward.25} parent=27 // pred_region
        %s341 = sadd.s32 %s23, 2
        %p342 = scmp.lt.s32.totalorder %s22, 1
        %s343 = scalar_select %p342, %s22, 1
        %p344 = scmp.lt.s32.totalorder %s341, 3
        %s345 = scalar_select %p344, %s341, 3
        %s346 = smul.addr %s343, 4
        %s347 = sadd.s32 %s345, %s346
        %s348 = smul.addr %s347, 4
        %s349 = scalar_lea.vmem %s3, %s348
        %s350 = sadd.s32 %s23, 2
      $region44: #{transformer_forward.25} parent=27 // pred_fallthru
        _
      // Predicated region
      $region45: #{transformer_forward.25} parent=27 // pred_check
        %p351 = pneg %p159
      $region46: #{transformer_forward.25} parent=27 // pred_check_branch
        %353 = sbr.rel (%p351) target = $region48
      $region47: #{transformer_forward.25} parent=27 // pred_region
        %p354 = scmp.lt.s32.totalorder %s22, 1
        %s355 = scalar_select %p354, %s22, 1
        %s356 = scalar_lea.vmem %s4, %s355
      $region48: #{transformer_forward.25} parent=27 // pred_fallthru
        _
      // Predicated region
      $region49: #{transformer_forward.25} parent=27 // pred_check
        %p357 = pneg %p185
      $region50: #{transformer_forward.25} parent=27 // pred_check_branch
        %359 = sbr.rel (%p357) target = $region52
      $region51: #{transformer_forward.25} parent=27 // pred_region
        %s360 = smul.u32 16, %s23
        %p361 = scmp.lt.s32.totalorder %s360, 31
        %s362 = scalar_select %p361, %s360, 31
        %s363 = smul.addr %s362, 2
        %s364 = smul.addr %s363, 4
        %s365 = scalar_lea.vmem %s5, %s364
        %s366 = smul.u32 16, %s23
      $region52: #{transformer_forward.25} parent=27 // pred_fallthru
        _
    $region28: #{transformer_forward.25} parent=5 // pred_fallthru
      _
    %p367 = scmp.le.s32.totalorder 1, %s15
    %p368 = scmp.lt.s32.totalorder %s15, 5
    %p369 = pnand %p367, %p368
    %p370 = pneg %p369
    // Predicated region
    $region53: #{transformer_forward.25} parent=5 // pred_check
      _
    $region54: #{transformer_forward.25} parent=5 // pred_check_branch
      %372 = sbr.rel (%p369) target = $region56
    $region55: #{transformer_forward.25} parent=5 // pred_region
      %s373 = ssub.s32 %s15, 1
      %p374 = scmp.lt.s32.totalorder %s24, 1
      %s375 = scalar_select %p374, %s24, 1
      %s376 = smul.addr %s375, 2
      %s377 = smul.addr %s376, 4
      %s378 = scalar_lea.vmem %s0, %s377
      %p379 = pneg %p53
      %p380 = pneg %p50
      %p381 = scmp.lt.s32.totalorder %s24, 1
      %s382 = scalar_select %p381, %s24, 1
      %p383 = scmp.lt.s32.totalorder %s25, 1
      %s384 = scalar_select %p383, %s25, 1
      %s385 = smul.addr %s382, 2
      %s386 = sadd.s32 %s384, %s385
      %s387 = smul.addr %s386, 4
      %s388 = scalar_lea.vmem %s1, %s387
      %p389 = pneg %p81
      %p390 = pneg %p78
      %p391 = scmp.lt.s32.totalorder %s24, 1
      %s392 = scalar_select %p391, %s24, 1
      %p393 = scmp.lt.s32.totalorder %s25, 3
      %s394 = scalar_select %p393, %s25, 3
      %s395 = smul.addr %s392, 4
      %s396 = sadd.s32 %s394, %s395
      %s397 = smul.addr %s396, 4
      %s398 = scalar_lea.vmem %s2, %s397
      %p399 = pneg %p109
      %p400 = pneg %p106
      %s401 = sadd.s32 %s25, 2
      %p402 = scmp.lt.s32.totalorder %s24, 1
      %s403 = scalar_select %p402, %s24, 1
      %p404 = scmp.lt.s32.totalorder %s401, 3
      %s405 = scalar_select %p404, %s401, 3
      %s406 = smul.addr %s403, 4
      %s407 = sadd.s32 %s405, %s406
      %s408 = smul.addr %s407, 4
      %s409 = scalar_lea.vmem %s3, %s408
      %p410 = pneg %p139
      %p411 = pneg %p136
      %p412 = scmp.lt.s32.totalorder %s24, 1
      %s413 = scalar_select %p412, %s24, 1
      %s414 = scalar_lea.vmem %s4, %s413
      %p415 = pneg %p165
      %p416 = pneg %p162
      %s417 = smul.u32 16, %s25
      %p418 = scmp.lt.s32.totalorder %s417, 31
      %s419 = scalar_select %p418, %s417, 31
      %s420 = smul.addr %s419, 2
      %s421 = smul.addr %s420, 4
      %s422 = scalar_lea.vmem %s5, %s421
      %p423 = pneg %p191
      %p424 = pneg %p188
      %p425 = pneg %p212
      %p426 = pneg %p209
      %p427 = pneg %p233
      %p428 = pneg %p230
      %p429 = pneg %p254
      %p430 = pneg %p251
      %p431 = pneg %p280
      %p432 = pneg %p277
      %p433 = scmp.lt.s32.totalorder %s24, 1
      %s434 = scalar_select %p433, %s24, 1
      %s435 = smul.addr %s434, 2
      %s436 = smul.addr %s435, 4
      %s437 = scalar_lea.vmem %s9, %s436
      %p438 = scmp.lt.s32.totalorder %s24, 1
      %s439 = scalar_select %p438, %s24, 1
      %s440 = smul.addr %s439, 2
      %s441 = smul.addr %s440, 4
      %s442 = scalar_lea.vmem %s0, %s441
      %p443 = scmp.lt.s32.totalorder %s24, 1
      %s444 = scalar_select %p443, %s24, 1
      %p445 = scmp.lt.s32.totalorder %s25, 1
      %s446 = scalar_select %p445, %s25, 1
      %s447 = smul.addr %s444, 2
      %s448 = sadd.s32 %s446, %s447
      %s449 = smul.addr %s448, 4
      %s450 = scalar_lea.vmem %s1, %s449
      %p451 = scmp.lt.s32.totalorder %s24, 1
      %s452 = scalar_select %p451, %s24, 1
      %p453 = scmp.lt.s32.totalorder %s25, 3
      %s454 = scalar_select %p453, %s25, 3
      %s455 = smul.addr %s452, 4
      %s456 = sadd.s32 %s454, %s455
      %s457 = smul.addr %s456, 4
      %s458 = scalar_lea.vmem %s2, %s457
      %s459 = sadd.s32 %s25, 2
      %p460 = scmp.lt.s32.totalorder %s24, 1
      %s461 = scalar_select %p460, %s24, 1
      %p462 = scmp.lt.s32.totalorder %s459, 3
      %s463 = scalar_select %p462, %s459, 3
      %s464 = smul.addr %s461, 4
      %s465 = sadd.s32 %s463, %s464
      %s466 = smul.addr %s465, 4
      %s467 = scalar_lea.vmem %s3, %s466
      %s468 = sadd.s32 %s25, 2
      %p469 = scmp.lt.s32.totalorder %s24, 1
      %s470 = scalar_select %p469, %s24, 1
      %s471 = scalar_lea.vmem %s4, %s470
      %s472 = smul.u32 16, %s25
      %p473 = scmp.lt.s32.totalorder %s472, 31
      %s474 = scalar_select %p473, %s472, 31
      %s475 = smul.addr %s474, 2
      %s476 = smul.addr %s475, 4
      %s477 = scalar_lea.vmem %s5, %s476
      %s478 = smul.u32 16, %s25
      %p479 = scmp.lt.s32.totalorder %s24, 1
      %s480 = scalar_select %p479, %s24, 1
      %s481 = smul.addr %s480, 2
      %s482 = smul.addr %s481, 4
      %s483 = scalar_lea.vmem %s9, %s482
      %p485 = scmp.eq.s32.totalorder %s25, 0
      // Predicated region
      $region57: #{transformer_forward.25} parent=55 // pred_check
        %p486 = pneg %p485
      $region58: #{transformer_forward.25} parent=55 // pred_check_branch
        %488 = sbr.rel (%p486) target = $region60
      $region59: #{transformer_forward.25} parent=55 // pred_region
        %v489 = vld [vmem:[%s442] sm:$0xff]
        %v490 = vunpack.c.l.bf16 %v489
        %v491 = vunpack.c.h.bf16 %v489
        %v492 = vld [vmem:[%s6] sm:$0x3]
        %v494 = vlaneseq
        %v495 = vshrl.u32 %v494, 7
        %v496 = vsub.s32 0, %v495
        %v497 = vrot.slane %v492, %v496
        %v498 = vlaneseq
        %v499 = vshrl.u32 %v498, 7
        %v500 = vsub.s32 1, %v499
        %v501 = vrot.slane %v492, %v500
        %v504 = vadd.f32 %v490, %v497
        %v505 = vadd.f32 %v491, %v501
        %506 = vst [vmem:[#allocation2] sm:$0xff] %v504
        %507 = vst [vmem:[#allocation2 + $0x8] sm:$0xff] %v505
      $region60: #{transformer_forward.25} parent=55 // pred_fallthru
        _
      %v508 = vld [vmem:[%s450] sm:$0xf]
      %v509 = vld [vmem:[%s458] sm:$0xf]
      %v510 = vld [vmem:[%s467] sm:$0xf]
      %v511 = vld [vmem:[%s471] sm:$0x1]
      %v513 = vlaneseq
      %v514 = vshrl.u32 %v513, 7
      %v515 = vsub.s32 0, %v514
      %v516 = vrot.slane %v511, %v515
      %518 = vmatprep.subr.bf16.mxu0 0
      %519 = vmatpush1.bf16.xpose.msra.mxu0 %v509
      %520 = vmatprep.subr.bf16.mxu0 0
      %521 = vmatpush1.bf16.xpose.msra.mxu0 0
      %522 = vmatprep.subr.bf16.mxu0 0
      %523 = vmatpush1.bf16.xpose.msra.mxu0 0
      %524 = vmatprep.subr.bf16.mxu0 0
      %525 = vmatpush1.bf16.xpose.msra.mxu0 0
      %526 = vmatprep.subr.bf16.mxu0 0
      %527 = vmatpush1.bf16.xpose.msra.mxu0 0
      %528 = vmatprep.subr.bf16.mxu0 0
      %529 = vmatpush1.bf16.xpose.msra.mxu0 0
      %530 = vmatprep.subr.bf16.mxu0 0
      %531 = vmatpush1.bf16.xpose.msra.mxu0 0
      %532 = vmatprep.subr.bf16.mxu0 0
      %533 = vmatpush1.bf16.xpose.msra.mxu0 0
      %534 = vmatprep.subr.bf16.mxu0 0
      %535 = vmatpush1.bf16.xpose.msra.mxu0 0
      %536 = vmatprep.subr.bf16.mxu0 0
      %537 = vmatpush1.bf16.xpose.msra.mxu0 0
      %538 = vmatprep.subr.bf16.mxu0 0
      %539 = vmatpush1.bf16.xpose.msra.mxu0 0
      %540 = vmatprep.subr.bf16.mxu0 0
      %541 = vmatpush1.bf16.xpose.msra.mxu0 0
      %542 = vmatprep.subr.bf16.mxu0 0
      %543 = vmatpush1.bf16.xpose.msra.mxu0 0
      %544 = vmatprep.subr.bf16.mxu0 0
      %545 = vmatpush1.bf16.xpose.msra.mxu0 0
      %546 = vmatprep.subr.bf16.mxu0 0
      %547 = vmatpush1.bf16.xpose.msra.mxu0 0
      %548 = vmatprep.subr.bf16.mxu0 0
      %549 = vmatpush1.bf16.xpose.msra.mxu0 0
      %550 = vmatprep.mubr.bf16.mxu0 0
      %551 = vmatmul.mubr.bf16.gmra.mrb[0].mxu0 %v508
      %v552 = vpop.f32.mrb[0].mxu0
      %v553 = vadd.f32 %v516, %v552
      %v554 = vpop.f32.mrb[0].mxu0
      %v555 = vpop.f32.mrb[0].mxu0
      %v556 = vpop.f32.mrb[0].mxu0
      %557 = vdwg.mxu0
      %vm558 = vcmask 64512
      %v559 = vsel %vm558, %v553, -inf
      %560 = vmax.xlane.f32.xlu0 %v559
      %v561 = vpop.xlane.xlu0 %560
      %v562 = vsub.f32 %v553, %v561
      %v563 = vmul.f32 %v562, 1.442695
      %v564 = vpow.pop %v563
      %v565 = vsel %vm558, %v564, 0.0
      %566 = vadd.xlane.f32.xlu0 %v565
      %v567 = vpop.xlane.xlu0 %566
      %v568 = vrcp.pop %v567
      %v569 = vmul.f32 %v564, %v568
      %v570 = vpack.c.bf16 %v569, %v569
      %v572 = vsel %vm558, %v570, 0
      %vm574 = vcmask 1043456
      %v576 = vsel %vm574, %v510, 0
      %578 = vmatprep.subr.bf16.mxu0 0
      %579 = vmatpush1.bf16.msra.mxu0 %v576
      %580 = vmatprep.subr.bf16.mxu0 0
      %581 = vmatpush1.bf16.msra.mxu0 0
      %582 = vmatprep.subr.bf16.mxu0 0
      %583 = vmatpush1.bf16.msra.mxu0 0
      %584 = vmatprep.subr.bf16.mxu0 0
      %585 = vmatpush1.bf16.msra.mxu0 0
      %586 = vmatprep.subr.bf16.mxu0 0
      %587 = vmatpush1.bf16.msra.mxu0 0
      %588 = vmatprep.subr.bf16.mxu0 0
      %589 = vmatpush1.bf16.msra.mxu0 0
      %590 = vmatprep.subr.bf16.mxu0 0
      %591 = vmatpush1.bf16.msra.mxu0 0
      %592 = vmatprep.subr.bf16.mxu0 0
      %593 = vmatpush1.bf16.msra.mxu0 0
      %594 = vmatprep.subr.bf16.mxu0 0
      %595 = vmatpush1.bf16.msra.mxu0 0
      %596 = vmatprep.subr.bf16.mxu0 0
      %597 = vmatpush1.bf16.msra.mxu0 0
      %598 = vmatprep.subr.bf16.mxu0 0
      %599 = vmatpush1.bf16.msra.mxu0 0
      %600 = vmatprep.subr.bf16.mxu0 0
      %601 = vmatpush1.bf16.msra.mxu0 0
      %602 = vmatprep.subr.bf16.mxu0 0
      %603 = vmatpush1.bf16.msra.mxu0 0
      %604 = vmatprep.subr.bf16.mxu0 0
      %605 = vmatpush1.bf16.msra.mxu0 0
      %606 = vmatprep.subr.bf16.mxu0 0
      %607 = vmatpush1.bf16.msra.mxu0 0
      %608 = vmatprep.subr.bf16.mxu0 0
      %609 = vmatpush1.bf16.msra.mxu0 0
      %610 = vmatprep.mubr.bf16.mxu0 0
      %611 = vmatmul.mubr.bf16.gmra.mrb[0].mxu0 %v572
      %v612 = vpop.f32.mrb[0].mxu0
      %v613 = vadd.f32 0.0, %v612
      %v614 = vpop.f32.mrb[0].mxu0
      %v615 = vpop.f32.mrb[0].mxu0
      %v616 = vpop.f32.mrb[0].mxu0
      %617 = vdwg.mxu0
      %v618 = vld [vmem:[#allocation2] sm:$0xff]
      %v619 = vld [vmem:[#allocation2 + $0x8] sm:$0xff]
      %v620 = vpack.c.bf16 %v613, %v613
      %v621 = vld [vmem:[%s477] sm:$0xff]
      %v622 = vld [vmem:[%s477 + $0x8] sm:$0xff]
      %v623 = vld [vmem:[%s477 + $0x10] sm:$0xff]
      %v624 = vld [vmem:[%s477 + $0x18] sm:$0xff]
      %v625 = vld [vmem:[%s477 + $0x20] sm:$0xff]
      %v626 = vld [vmem:[%s477 + $0x28] sm:$0xff]
      %v627 = vld [vmem:[%s477 + $0x30] sm:$0xff]
      %v628 = vld [vmem:[%s477 + $0x38] sm:$0xff]
      %v629 = vld [vmem:[%s477 + $0x40] sm:$0xff]
      %v630 = vld [vmem:[%s477 + $0x48] sm:$0xff]
      %v631 = vld [vmem:[%s477 + $0x50] sm:$0xff]
      %v632 = vld [vmem:[%s477 + $0x58] sm:$0xff]
      %v633 = vld [vmem:[%s477 + $0x60] sm:$0xff]
      %v634 = vld [vmem:[%s477 + $0x68] sm:$0xff]
      %v635 = vld [vmem:[%s477 + $0x70] sm:$0xff]
      %v636 = vld [vmem:[%s477 + $0x78] sm:$0xff]
      %v653 = vunpack.c.l.b16 %v621
      %v654 = vunpack.c.h.b16 %v621
      %v655 = vunpack.c.l.b16 %v622
      %v656 = vunpack.c.h.b16 %v622
      %v657 = vunpack.c.l.b16 %v623
      %v658 = vunpack.c.h.b16 %v623
      %v659 = vunpack.c.l.b16 %v624
      %v660 = vunpack.c.h.b16 %v624
      %v661 = vunpack.c.l.b16 %v625
      %v662 = vunpack.c.h.b16 %v625
      %v663 = vunpack.c.l.b16 %v626
      %v664 = vunpack.c.h.b16 %v626
      %v665 = vunpack.c.l.b16 %v627
      %v666 = vunpack.c.h.b16 %v627
      %v667 = vunpack.c.l.b16 %v628
      %v668 = vunpack.c.h.b16 %v628
      %v669 = vunpack.c.l.b16 %v629
      %v670 = vunpack.c.h.b16 %v629
      %v671 = vunpack.c.l.b16 %v630
      %v672 = vunpack.c.h.b16 %v630
      %v673 = vunpack.c.l.b16 %v631
      %v674 = vunpack.c.h.b16 %v631
      %v675 = vunpack.c.l.b16 %v632
      %v676 = vunpack.c.h.b16 %v632
      %v677 = vunpack.c.l.b16 %v633
      %v678 = vunpack.c.h.b16 %v633
      %v679 = vunpack.c.l.b16 %v634
      %v680 = vunpack.c.h.b16 %v634
      %v681 = vunpack.c.l.b16 %v635
      %v682 = vunpack.c.h.b16 %v635
      %v683 = vunpack.c.l.b16 %v636
      %v684 = vunpack.c.h.b16 %v636
      %v685 = vpack.c.b16 %v655, %v653
      %v686 = vpack.c.b16 %v656, %v654
      %v687 = vpack.c.b16 %v659, %v657
      %v688 = vpack.c.b16 %v660, %v658
      %v689 = vpack.c.b16 %v663, %v661
      %v690 = vpack.c.b16 %v664, %v662
      %v691 = vpack.c.b16 %v667, %v665
      %v692 = vpack.c.b16 %v668, %v666
      %v693 = vpack.c.b16 %v671, %v669
      %v694 = vpack.c.b16 %v672, %v670
      %v695 = vpack.c.b16 %v675, %v673
      %v696 = vpack.c.b16 %v676, %v674
      %v697 = vpack.c.b16 %v679, %v677
      %v698 = vpack.c.b16 %v680, %v678
      %v699 = vpack.c.b16 %v683, %v681
      %v700 = vpack.c.b16 %v684, %v682
      %717 = vmatprep.subr.bf16.mxu0 %v686
      %718 = vmatpush1.bf16.msra.mxu0 %v685
      %719 = vmatprep.subr.bf16.mxu0 %v688
      %720 = vmatpush1.bf16.msra.mxu0 %v687
      %721 = vmatprep.subr.bf16.mxu0 %v690
      %722 = vmatpush1.bf16.msra.mxu0 %v689
      %723 = vmatprep.subr.bf16.mxu0 %v692
      %724 = vmatpush1.bf16.msra.mxu0 %v691
      %725 = vmatprep.subr.bf16.mxu0 %v694
      %726 = vmatpush1.bf16.msra.mxu0 %v693
      %727 = vmatprep.subr.bf16.mxu0 %v696
      %728 = vmatpush1.bf16.msra.mxu0 %v695
      %729 = vmatprep.subr.bf16.mxu0 %v698
      %730 = vmatpush1.bf16.msra.mxu0 %v697
      %731 = vmatprep.subr.bf16.mxu0 %v700
      %732 = vmatpush1.bf16.msra.mxu0 %v699
      %733 = vmatprep.subr.bf16.mxu0 0
      %734 = vmatpush1.bf16.msra.mxu0 0
      %735 = vmatprep.subr.bf16.mxu0 0
      %736 = vmatpush1.bf16.msra.mxu0 0
      %737 = vmatprep.subr.bf16.mxu0 0
      %738 = vmatpush1.bf16.msra.mxu0 0
      %739 = vmatprep.subr.bf16.mxu0 0
      %740 = vmatpush1.bf16.msra.mxu0 0
      %741 = vmatprep.subr.bf16.mxu0 0
      %742 = vmatpush1.bf16.msra.mxu0 0
      %743 = vmatprep.subr.bf16.mxu0 0
      %744 = vmatpush1.bf16.msra.mxu0 0
      %745 = vmatprep.subr.bf16.mxu0 0
      %746 = vmatpush1.bf16.msra.mxu0 0
      %747 = vmatprep.subr.bf16.mxu0 0
      %748 = vmatpush1.bf16.msra.mxu0 0
      %749 = vmatprep.mubr.bf16.mxu0 0
      %750 = vmatmul.mubr.bf16.gmra.mrb[0].mxu0 %v620
      %v751 = vpop.f32.mrb[0].mxu0
      %v752 = vadd.f32 0.0, %v751
      %v753 = vpop.f32.mrb[0].mxu0
      %v754 = vadd.f32 0.0, %v753
      %v755 = vpop.f32.mrb[0].mxu0
      %v756 = vpop.f32.mrb[0].mxu0
      %757 = vdwg.mxu0
      %v758 = vadd.f32 %v618, %v752
      %v759 = vadd.f32 %v619, %v754
      %760 = vst [vmem:[#allocation2] sm:$0xff] %v758
      %761 = vst [vmem:[#allocation2 + $0x8] sm:$0xff] %v759
      %p762 = scmp.eq.s32.totalorder %s25, 1
      // Predicated region
      $region61: #{transformer_forward.25} parent=55 // pred_check
        %p763 = pneg %p762
      $region62: #{transformer_forward.25} parent=55 // pred_check_branch
        %765 = sbr.rel (%p763) target = $region64
      $region63: #{transformer_forward.25} parent=55 // pred_region
        %v766 = vld [vmem:[#allocation2] sm:$0xff]
        %v767 = vld [vmem:[#allocation2 + $0x8] sm:$0xff]
        %v768 = vadd.f32 %v766, %v767
        %769 = vadd.xlane.f32.xlu0 %v768
        %v770 = vpop.xlane.xlu0 %769
        %v771 = vrcp.pop 256.0
        %v772 = vmul.f32 %v770, %v771
        %v773 = vsub.f32 %v766, %v772
        %v774 = vsub.f32 %v767, %v772
        %v775 = vmul.f32 %v773, %v773
        %v776 = vmul.f32 %v774, %v774
        %v777 = vadd.f32 %v775, %v776
        %778 = vadd.xlane.f32.xlu0 %v777
        %v779 = vpop.xlane.xlu0 %778
        %v780 = vmul.f32 %v779, %v771
        %v781 = vadd.f32 %v780, 1e-05
        %v782 = vrsqrt.pop %v781
        %v783 = vmul.f32 %v773, %v782
        %v784 = vmul.f32 %v774, %v782
        %v785 = vld [vmem:[%s7] sm:$0x3]
        %v787 = vlaneseq
        %v788 = vshrl.u32 %v787, 7
        %v789 = vsub.s32 0, %v788
        %v790 = vrot.slane %v785, %v789
        %v791 = vlaneseq
        %v792 = vshrl.u32 %v791, 7
        %v793 = vsub.s32 1, %v792
        %v794 = vrot.slane %v785, %v793
        %v797 = vmul.f32 %v783, %v790
        %v798 = vmul.f32 %v784, %v794
        %v799 = vld [vmem:[%s8] sm:$0x3]
        %v801 = vlaneseq
        %v802 = vshrl.u32 %v801, 7
        %v803 = vsub.s32 0, %v802
        %v804 = vrot.slane %v799, %v803
        %v805 = vlaneseq
        %v806 = vshrl.u32 %v805, 7
        %v807 = vsub.s32 1, %v806
        %v808 = vrot.slane %v799, %v807
        %v811 = vadd.f32 %v797, %v804
        %v812 = vadd.f32 %v798, %v808
        %v813 = vpack.c.bf16 %v811, %v811
        %v814 = vpack.c.bf16 %v812, %v812
        %v817 = vunpack.c.l.b16 %v813
        %v818 = vunpack.c.l.b16 %v814
        %v819 = vpack.c.b16 %v818, %v817
        %821 = vst [vmem:[%s483] sm:$0xff] %v819
      $region64: #{transformer_forward.25} parent=55 // pred_fallthru
        _
      %p822 = scmp.lt.s32.totalorder %s24, 1
      %s823 = scalar_select %p822, %s24, 1
      %s824 = smul.addr %s823, 2
      %s825 = smul.addr %s824, 4
      %s826 = scalar_lea.vmem %s9, %s825
      // Predicated region
      $region65: #{transformer_forward.25} parent=55 // pred_check
        %p827 = pneg %p277
      $region66: #{transformer_forward.25} parent=55 // pred_check_branch
        %829 = sbr.rel (%p827) target = $region68
      $region67: #{transformer_forward.25} parent=55 // pred_region
        _
      $region68: #{transformer_forward.25} parent=55 // pred_fallthru
        _
    $region56: #{transformer_forward.25} parent=5 // pred_fallthru
      _
    %p830 = scmp.le.s32.totalorder 2, %s15
    // Predicated region
    $region69: #{transformer_forward.25} parent=5 // pred_check
      %p831 = pneg %p830
    $region70: #{transformer_forward.25} parent=5 // pred_check_branch
      %833 = sbr.rel (%p831) target = $region72
    $region71: #{transformer_forward.25} parent=5 // pred_region
      %s834 = ssub.s32 %s15, 2
      // Predicated region
      $region73: #{transformer_forward.25} parent=71 // pred_check
        %p835 = pneg %p283
      $region74: #{transformer_forward.25} parent=71 // pred_check_branch
        %837 = sbr.rel (%p835) target = $region76
      $region75: #{transformer_forward.25} parent=71 // pred_region
        %p838 = scmp.lt.s32.totalorder %s26, 1
        %s839 = scalar_select %p838, %s26, 1
        %s840 = smul.addr %s839, 2
        %s841 = smul.addr %s840, 4
        %s842 = scalar_lea.vmem %s9, %s841
      $region76: #{transformer_forward.25} parent=71 // pred_fallthru
        _
    $region72: #{transformer_forward.25} parent=5 // pred_fallthru
      _
  $region6: #{transformer_forward.25} parent=0 // loop_footer
    %s19 = sadd.s32 1, %s15
  $region7: #{transformer_forward.25} parent=0 // loop_footer_branch
    %14 = sbr.rel target = $region3
  $region8: #{transformer_forward.25} parent=0 // loop_exit
    _

// kernel: transformer_forward.33
$region0: #{transformer_forward.33}
  #allocation0 [shape = 'u32[]', space=smem, size = 0x4, offset = 0x4, fixed_abs, tag = 'smem constant byte address 0x4 - core index']
  #allocation1 [shape = 'u32[144,128]{1,0:T(1,128)}', space=vmem, size = 0x12000, scoped, tag = 'internal scratch']
  #allocation2 [shape = 'f32[8,256]{1,0:T(8,128)}', space=vmem, size = 0x2000, scoped, tag = 'scratch operand']
  #allocation3 [shape = 'f32[8,8]{1,0:T(8,128)}', space=vmem, size = 0x1000, scoped, tag = 'scratch operand']
  %s0 = inlined_call_operand.vmem [shape: bf16[2,8,256], index: 0, kind: input, shape index: {}]
  %s1 = inlined_call_operand.vmem [shape: bf16[2,8,256], index: 1, kind: input, shape index: {}]
  %s2 = inlined_call_operand.vmem [shape: bf16[2,8,512], index: 2, kind: input, shape index: {}, may-alias: {2,3}]
  %s3 = inlined_call_operand.vmem [shape: bf16[2,8,512], index: 3, kind: input, shape index: {}, may-alias: {2,3}]
  %s4 = inlined_call_operand.vmem [shape: f32[2,1,8], index: 4, kind: input, shape index: {}]
  %s5 = inlined_call_operand.vmem [shape: bf16[256,256], index: 5, kind: input, shape index: {}]
  %s6 = inlined_call_operand.vmem [shape: f32[1,256], index: 6, kind: input, shape index: {}]
  %s7 = inlined_call_operand.vmem [shape: f32[1,256], index: 7, kind: input, shape index: {}]
  %s8 = inlined_call_operand.vmem [shape: f32[1,256], index: 8, kind: input, shape index: {}]
  %s9 = inlined_call_operand.vmem [shape: bf16[2,8,256], index: 9, kind: output, shape index: {}]
  %s10 = sld [smem:[#allocation0]]
  $region77: #{transformer_forward.33} parent=0
    _
  %s12 = ssub.s32 1, %s10
  %s13 = scalar_select 0, %s12, %s10
  loop: start=0, step=1, limit=6
  $region2: #{transformer_forward.33} parent=0 // loop_pre_header
    _
  $region3: #{transformer_forward.33} parent=0 // loop_header
    %s15 = sphi 0, %s19
    %p16 = scmp.ge.s32.totalorder %s15, 6
    %s22 = sphi 0, %s34
    %s23 = sphi 0, %s30
    %s24 = sphi 0, %s22
    %s25 = sphi 0, %s23
    %s26 = sphi 0, %s24
    %s27 = sphi 0, %s25
    %s37 = sphi 0, %s39
    %s40 = sphi 0, %s37
    %s41 = sphi 0, %s40
    %s57 = sphi 0, %s41
    %s65 = sphi 0, %s67
    %s68 = sphi 0, %s65
    %s69 = sphi 0, %s68
    %s85 = sphi 0, %s69
    %s93 = sphi 0, %s95
    %s96 = sphi 0, %s93
    %s97 = sphi 0, %s96
    %s113 = sphi 0, %s97
    %s123 = sphi 0, %s125
    %s126 = sphi 0, %s123
    %s127 = sphi 0, %s126
    %s143 = sphi 0, %s127
    %s149 = sphi 0, %s151
    %s152 = sphi 0, %s149
    %s153 = sphi 0, %s152
    %s169 = sphi 0, %s153
    %s175 = sphi 0, %s177
    %s178 = sphi 0, %s175
    %s179 = sphi 0, %s178
    %s195 = sphi 0, %s179
    %s199 = sphi 0, %s199
    %s201 = sphi 0, %s199
    %s202 = sphi 0, %s201
    %s216 = sphi 0, %s202
    %s220 = sphi 0, %s220
    %s222 = sphi 0, %s220
    %s223 = sphi 0, %s222
    %s237 = sphi 0, %s223
    %s241 = sphi 0, %s241
    %s243 = sphi 0, %s241
    %s244 = sphi 0, %s243
    %s258 = sphi 0, %s244
    %s264 = sphi 0, %s266
    %s267 = sphi 0, %s264
    %s268 = sphi 0, %s267
    %s284 = sphi 0, %s268
  $region4: #{transformer_forward.33} parent=0 // loop_header_branch
    %18 = sbr.rel (%p16) target = $region8
  $region5: #{transformer_forward.33} parent=0 // loop_body
    %s20 = ssub.s32 %s15, 1
    %s21 = ssub.s32 %s15, 2
    %s28 = sadd.s32 1, %s23
    %p29 = scmp.ge.s32.totalorder %s28, 2
    %s30 = scalar_select %p29, 0, %s28
    %s31 = sadd.s32 1, %s22
    %s32 = scalar_select %p29, %s31, %s22
    %p33 = scmp.ge.s32.totalorder %s32, 2
    %s34 = scalar_select %p33, 0, %s32
    %s35 = ssub.s32 %s22, %s34
    %p36 = scmp.eq.s32.totalorder %s35, 0
    %s38 = sadd.s32 %s37, 1
    %s39 = scalar_select %p36, %s37, %s38
    %p42 = pneg %p36
    %p43 = scmp.eq.s32.totalorder %s15, 3
    %p44 = por %p42, %p43
    %p45 = scmp.ne.s32.totalorder %s37, %s40
    %p46 = scmp.eq.s32.totalorder %s15, 0
    %p47 = por %p45, %p46
    %p48 = scmp.ne.s32.totalorder %s37, %s40
    %p49 = scmp.eq.s32.totalorder %s20, 3
    %p50 = por %p48, %p49
    %p51 = scmp.ne.s32.totalorder %s40, %s41
    %p52 = scmp.eq.s32.totalorder %s20, 0
    %p53 = por %p51, %p52
    %p54 = scmp.ne.s32.totalorder %s40, %s41
    %p55 = scmp.eq.s32.totalorder %s21, 3
    %p56 = por %p54, %p55
    %p58 = scmp.ne.s32.totalorder %s41, %s57
    %p59 = scmp.eq.s32.totalorder %s21, 0
    %p60 = por %p58, %p59
    %s61 = ssub.s32 %s22, %s34
    %s62 = ssub.s32 %s23, %s30
    %s63 = sor.u32 %s61, %s62
    %p64 = scmp.eq.s32.totalorder %s63, 0
    %s66 = sadd.s32 %s65, 1
    %s67 = scalar_select %p64, %s65, %s66
    %p70 = pneg %p64
    %p71 = scmp.eq.s32.totalorder %s15, 3
    %p72 = por %p70, %p71
    %p73 = scmp.ne.s32.totalorder %s65, %s68
    %p74 = scmp.eq.s32.totalorder %s15, 0
    %p75 = por %p73, %p74
    %p76 = scmp.ne.s32.totalorder %s65, %s68
    %p77 = scmp.eq.s32.totalorder %s20, 3
    %p78 = por %p76, %p77
    %p79 = scmp.ne.s32.totalorder %s68, %s69
    %p80 = scmp.eq.s32.totalorder %s20, 0
    %p81 = por %p79, %p80
    %p82 = scmp.ne.s32.totalorder %s68, %s69
    %p83 = scmp.eq.s32.totalorder %s21, 3
    %p84 = por %p82, %p83
    %p86 = scmp.ne.s32.totalorder %s69, %s85
    %p87 = scmp.eq.s32.totalorder %s21, 0
    %p88 = por %p86, %p87
    %s89 = ssub.s32 %s22, %s34
    %s90 = ssub.s32 %s23, %s30
    %s91 = sor.u32 %s89, %s90
    %p92 = scmp.eq.s32.totalorder %s91, 0
    %s94 = sadd.s32 %s93, 1
    %s95 = scalar_select %p92, %s93, %s94
    %p98 = pneg %p92
    %p99 = scmp.eq.s32.totalorder %s15, 3
    %p100 = por %p98, %p99
    %p101 = scmp.ne.s32.totalorder %s93, %s96
    %p102 = scmp.eq.s32.totalorder %s15, 0
    %p103 = por %p101, %p102
    %p104 = scmp.ne.s32.totalorder %s93, %s96
    %p105 = scmp.eq.s32.totalorder %s20, 3
    %p106 = por %p104, %p105
    %p107 = scmp.ne.s32.totalorder %s96, %s97
    %p108 = scmp.eq.s32.totalorder %s20, 0
    %p109 = por %p107, %p108
    %p110 = scmp.ne.s32.totalorder %s96, %s97
    %p111 = scmp.eq.s32.totalorder %s21, 3
    %p112 = por %p110, %p111
    %p114 = scmp.ne.s32.totalorder %s97, %s113
    %p115 = scmp.eq.s32.totalorder %s21, 0
    %p116 = por %p114, %p115
    %s117 = sadd.s32 %s23, 2
    %s118 = sadd.s32 %s30, 2
    %s119 = ssub.s32 %s22, %s34
    %s120 = ssub.s32 %s117, %s118
    %s121 = sor.u32 %s119, %s120
    %p122 = scmp.eq.s32.totalorder %s121, 0
    %s124 = sadd.s32 %s123, 1
    %s125 = scalar_select %p122, %s123, %s124
    %p128 = pneg %p122
    %p129 = scmp.eq.s32.totalorder %s15, 3
    %p130 = por %p128, %p129
    %p131 = scmp.ne.s32.totalorder %s123, %s126
    %p132 = scmp.eq.s32.totalorder %s15, 0
    %p133 = por %p131, %p132
    %p134 = scmp.ne.s32.totalorder %s123, %s126
    %p135 = scmp.eq.s32.totalorder %s20, 3
    %p136 = por %p134, %p135
    %p137 = scmp.ne.s32.totalorder %s126, %s127
    %p138 = scmp.eq.s32.totalorder %s20, 0
    %p139 = por %p137, %p138
    %p140 = scmp.ne.s32.totalorder %s126, %s127
    %p141 = scmp.eq.s32.totalorder %s21, 3
    %p142 = por %p140, %p141
    %p144 = scmp.ne.s32.totalorder %s127, %s143
    %p145 = scmp.eq.s32.totalorder %s21, 0
    %p146 = por %p144, %p145
    %s147 = ssub.s32 %s22, %s34
    %p148 = scmp.eq.s32.totalorder %s147, 0
    %s150 = sadd.s32 %s149, 1
    %s151 = scalar_select %p148, %s149, %s150
    %p154 = pneg %p148
    %p155 = scmp.eq.s32.totalorder %s15, 3
    %p156 = por %p154, %p155
    %p157 = scmp.ne.s32.totalorder %s149, %s152
    %p158 = scmp.eq.s32.totalorder %s15, 0
    %p159 = por %p157, %p158
    %p160 = scmp.ne.s32.totalorder %s149, %s152
    %p161 = scmp.eq.s32.totalorder %s20, 3
    %p162 = por %p160, %p161
    %p163 = scmp.ne.s32.totalorder %s152, %s153
    %p164 = scmp.eq.s32.totalorder %s20, 0
    %p165 = por %p163, %p164
    %p166 = scmp.ne.s32.totalorder %s152, %s153
    %p167 = scmp.eq.s32.totalorder %s21, 3
    %p168 = por %p166, %p167
    %p170 = scmp.ne.s32.totalorder %s153, %s169
    %p171 = scmp.eq.s32.totalorder %s21, 0
    %p172 = por %p170, %p171
    %s173 = ssub.s32 %s23, %s30
    %p174 = scmp.eq.s32.totalorder %s173, 0
    %s176 = sadd.s32 %s175, 1
    %s177 = scalar_select %p174, %s175, %s176
    %p180 = pneg %p174
    %p181 = scmp.eq.s32.totalorder %s15, 3
    %p182 = por %p180, %p181
    %p183 = scmp.ne.s32.totalorder %s175, %s178
    %p184 = scmp.eq.s32.totalorder %s15, 0
    %p185 = por %p183, %p184
    %p186 = scmp.ne.s32.totalorder %s175, %s178
    %p187 = scmp.eq.s32.totalorder %s20, 3
    %p188 = por %p186, %p187
    %p189 = scmp.ne.s32.totalorder %s178, %s179
    %p190 = scmp.eq.s32.totalorder %s20, 0
    %p191 = por %p189, %p190
    %p192 = scmp.ne.s32.totalorder %s178, %s179
    %p193 = scmp.eq.s32.totalorder %s21, 3
    %p194 = por %p192, %p193
    %p196 = scmp.ne.s32.totalorder %s179, %s195
    %p197 = scmp.eq.s32.totalorder %s21, 0
    %p198 = por %p196, %p197
    %s200 = sadd.s32 %s199, 1
    %p203 = scmp.eq.s32.totalorder %s15, 3
    %p204 = scmp.ne.s32.totalorder %s199, %s201
    %p205 = scmp.eq.s32.totalorder %s15, 0
    %p206 = por %p204, %p205
    %p207 = scmp.ne.s32.totalorder %s199, %s201
    %p208 = scmp.eq.s32.totalorder %s20, 3
    %p209 = por %p207, %p208
    %p210 = scmp.ne.s32.totalorder %s201, %s202
    %p211 = scmp.eq.s32.totalorder %s20, 0
    %p212 = por %p210, %p211
    %p213 = scmp.ne.s32.totalorder %s201, %s202
    %p214 = scmp.eq.s32.totalorder %s21, 3
    %p215 = por %p213, %p214
    %p217 = scmp.ne.s32.totalorder %s202, %s216
    %p218 = scmp.eq.s32.totalorder %s21, 0
    %p219 = por %p217, %p218
    %s221 = sadd.s32 %s220, 1
    %p224 = scmp.eq.s32.totalorder %s15, 3
    %p225 = scmp.ne.s32.totalorder %s220, %s222
    %p226 = scmp.eq.s32.totalorder %s15, 0
    %p227 = por %p225, %p226
    %p228 = scmp.ne.s32.totalorder %s220, %s222
    %p229 = scmp.eq.s32.totalorder %s20, 3
    %p230 = por %p228, %p229
    %p231 = scmp.ne.s32.totalorder %s222, %s223
    %p232 = scmp.eq.s32.totalorder %s20, 0
    %p233 = por %p231, %p232
    %p234 = scmp.ne.s32.totalorder %s222, %s223
    %p235 = scmp.eq.s32.totalorder %s21, 3
    %p236 = por %p234, %p235
    %p238 = scmp.ne.s32.totalorder %s223, %s237
    %p239 = scmp.eq.s32.totalorder %s21, 0
    %p240 = por %p238, %p239
    %s242 = sadd.s32 %s241, 1
    %p245 = scmp.eq.s32.totalorder %s15, 3
    %p246 = scmp.ne.s32.totalorder %s241, %s243
    %p247 = scmp.eq.s32.totalorder %s15, 0
    %p248 = por %p246, %p247
    %p249 = scmp.ne.s32.totalorder %s241, %s243
    %p250 = scmp.eq.s32.totalorder %s20, 3
    %p251 = por %p249, %p250
    %p252 = scmp.ne.s32.totalorder %s243, %s244
    %p253 = scmp.eq.s32.totalorder %s20, 0
    %p254 = por %p252, %p253
    %p255 = scmp.ne.s32.totalorder %s243, %s244
    %p256 = scmp.eq.s32.totalorder %s21, 3
    %p257 = por %p255, %p256
    %p259 = scmp.ne.s32.totalorder %s244, %s258
    %p260 = scmp.eq.s32.totalorder %s21, 0
    %p261 = por %p259, %p260
    %s262 = ssub.s32 %s22, %s34
    %p263 = scmp.eq.s32.totalorder %s262, 0
    %s265 = sadd.s32 %s264, 1
    %s266 = scalar_select %p263, %s264, %s265
    %p269 = pneg %p263
    %p270 = scmp.eq.s32.totalorder %s15, 3
    %p271 = por %p269, %p270
    %p272 = scmp.ne.s32.totalorder %s264, %s267
    %p273 = scmp.eq.s32.totalorder %s15, 0
    %p274 = por %p272, %p273
    %p275 = scmp.ne.s32.totalorder %s264, %s267
    %p276 = scmp.eq.s32.totalorder %s20, 3
    %p277 = por %p275, %p276
    %p278 = scmp.ne.s32.totalorder %s267, %s268
    %p279 = scmp.eq.s32.totalorder %s20, 0
    %p280 = por %p278, %p279
    %p281 = scmp.ne.s32.totalorder %s267, %s268
    %p282 = scmp.eq.s32.totalorder %s21, 3
    %p283 = por %p281, %p282
    %p285 = scmp.ne.s32.totalorder %s268, %s284
    %p286 = scmp.eq.s32.totalorder %s21, 0
    %p287 = por %p285, %p286
    %p288 = scmp.le.s32.totalorder 1, %s15
    %p289 = scmp.lt.s32.totalorder %s15, 5
    %p290 = pnand %p288, %p289
    %p291 = pneg %p290
    // Predicated region
    $region9: #{transformer_forward.33} parent=5 // pred_check
      _
    $region10: #{transformer_forward.33} parent=5 // pred_check_branch
      %293 = sbr.rel (%p290) target = $region12
    $region11: #{transformer_forward.33} parent=5 // pred_region
      %s294 = ssub.s32 %s15, 1
      // Predicated region
      $region13: #{transformer_forward.33} parent=11 // pred_check
        %p295 = pneg %p212
      $region14: #{transformer_forward.33} parent=11 // pred_check_branch
        %297 = sbr.rel (%p295) target = $region16
      $region15: #{transformer_forward.33} parent=11 // pred_region
        _
      $region16: #{transformer_forward.33} parent=11 // pred_fallthru
        _
      // Predicated region
      $region17: #{transformer_forward.33} parent=11 // pred_check
        %p298 = pneg %p233
      $region18: #{transformer_forward.33} parent=11 // pred_check_branch
        %300 = sbr.rel (%p298) target = $region20
      $region19: #{transformer_forward.33} parent=11 // pred_region
        _
      $region20: #{transformer_forward.33} parent=11 // pred_fallthru
        _
      // Predicated region
      $region21: #{transformer_forward.33} parent=11 // pred_check
        %p301 = pneg %p254
      $region22: #{transformer_forward.33} parent=11 // pred_check_branch
        %303 = sbr.rel (%p301) target = $region24
      $region23: #{transformer_forward.33} parent=11 // pred_region
        _
      $region24: #{transformer_forward.33} parent=11 // pred_fallthru
        _
    $region12: #{transformer_forward.33} parent=5 // pred_fallthru
      _
    %p304 = scmp.lt.s32.totalorder %s15, 4
    // Predicated region
    $region25: #{transformer_forward.33} parent=5 // pred_check
      %p305 = pneg %p304
    $region26: #{transformer_forward.33} parent=5 // pred_check_branch
      %307 = sbr.rel (%p305) target = $region28
    $region27: #{transformer_forward.33} parent=5 // pred_region
      // Predicated region
      $region29: #{transformer_forward.33} parent=27 // pred_check
        %p308 = pneg %p47
      $region30: #{transformer_forward.33} parent=27 // pred_check_branch
        %310 = sbr.rel (%p308) target = $region32
      $region31: #{transformer_forward.33} parent=27 // pred_region
        %p311 = scmp.lt.s32.totalorder %s22, 1
        %s312 = scalar_select %p311, %s22, 1
        %s313 = smul.addr %s312, 2
        %s314 = smul.addr %s313, 4
        %s315 = scalar_lea.vmem %s0, %s314
      $region32: #{transformer_forward.33} parent=27 // pred_fallthru
        _
      // Predicated region
      $region33: #{transformer_forward.33} parent=27 // pred_check
        %p316 = pneg %p75
      $region34: #{transformer_forward.33} parent=27 // pred_check_branch
        %318 = sbr.rel (%p316) target = $region36
      $region35: #{transformer_forward.33} parent=27 // pred_region
        %p319 = scmp.lt.s32.totalorder %s22, 1
        %s320 = scalar_select %p319, %s22, 1
        %p321 = scmp.lt.s32.totalorder %s23, 1
        %s322 = scalar_select %p321, %s23, 1
        %s323 = smul.addr %s320, 2
        %s324 = sadd.s32 %s322, %s323
        %s325 = smul.addr %s324, 4
        %s326 = scalar_lea.vmem %s1, %s325
      $region36: #{transformer_forward.33} parent=27 // pred_fallthru
        _
      // Predicated region
      $region37: #{transformer_forward.33} parent=27 // pred_check
        %p327 = pneg %p103
      $region38: #{transformer_forward.33} parent=27 // pred_check_branch
        %329 = sbr.rel (%p327) target = $region40
      $region39: #{transformer_forward.33} parent=27 // pred_region
        %p330 = scmp.lt.s32.totalorder %s22, 1
        %s331 = scalar_select %p330, %s22, 1
        %p332 = scmp.lt.s32.totalorder %s23, 3
        %s333 = scalar_select %p332, %s23, 3
        %s334 = smul.addr %s331, 4
        %s335 = sadd.s32 %s333, %s334
        %s336 = smul.addr %s335, 4
        %s337 = scalar_lea.vmem %s2, %s336
      $region40: #{transformer_forward.33} parent=27 // pred_fallthru
        _
      // Predicated region
      $region41: #{transformer_forward.33} parent=27 // pred_check
        %p338 = pneg %p133
      $region42: #{transformer_forward.33} parent=27 // pred_check_branch
        %340 = sbr.rel (%p338) target = $region44
      $region43: #{transformer_forward.33} parent=27 // pred_region
        %s341 = sadd.s32 %s23, 2
        %p342 = scmp.lt.s32.totalorder %s22, 1
        %s343 = scalar_select %p342, %s22, 1
        %p344 = scmp.lt.s32.totalorder %s341, 3
        %s345 = scalar_select %p344, %s341, 3
        %s346 = smul.addr %s343, 4
        %s347 = sadd.s32 %s345, %s346
        %s348 = smul.addr %s347, 4
        %s349 = scalar_lea.vmem %s3, %s348
        %s350 = sadd.s32 %s23, 2
      $region44: #{transformer_forward.33} parent=27 // pred_fallthru
        _
      // Predicated region
      $region45: #{transformer_forward.33} parent=27 // pred_check
        %p351 = pneg %p159
      $region46: #{transformer_forward.33} parent=27 // pred_check_branch
        %353 = sbr.rel (%p351) target = $region48
      $region47: #{transformer_forward.33} parent=27 // pred_region
        %p354 = scmp.lt.s32.totalorder %s22, 1
        %s355 = scalar_select %p354, %s22, 1
        %s356 = scalar_lea.vmem %s4, %s355
      $region48: #{transformer_forward.33} parent=27 // pred_fallthru
        _
      // Predicated region
      $region49: #{transformer_forward.33} parent=27 // pred_check
        %p357 = pneg %p185
      $region50: #{transformer_forward.33} parent=27 // pred_check_branch
        %359 = sbr.rel (%p357) target = $region52
      $region51: #{transformer_forward.33} parent=27 // pred_region
        %s360 = smul.u32 16, %s23
        %p361 = scmp.lt.s32.totalorder %s360, 31
        %s362 = scalar_select %p361, %s360, 31
        %s363 = smul.addr %s362, 2
        %s364 = smul.addr %s363, 4
        %s365 = scalar_lea.vmem %s5, %s364
        %s366 = smul.u32 16, %s23
      $region52: #{transformer_forward.33} parent=27 // pred_fallthru
        _
    $region28: #{transformer_forward.33} parent=5 // pred_fallthru
      _
    %p367 = scmp.le.s32.totalorder 1, %s15
    %p368 = scmp.lt.s32.totalorder %s15, 5
    %p369 = pnand %p367, %p368
    %p370 = pneg %p369
    // Predicated region
    $region53: #{transformer_forward.33} parent=5 // pred_check
      _
    $region54: #{transformer_forward.33} parent=5 // pred_check_branch
      %372 = sbr.rel (%p369) target = $region56
    $region55: #{transformer_forward.33} parent=5 // pred_region
      %s373 = ssub.s32 %s15, 1
      %p374 = scmp.lt.s32.totalorder %s24, 1
      %s375 = scalar_select %p374, %s24, 1
      %s376 = smul.addr %s375, 2
      %s377 = smul.addr %s376, 4
      %s378 = scalar_lea.vmem %s0, %s377
      %p379 = pneg %p53
      %p380 = pneg %p50
      %p381 = scmp.lt.s32.totalorder %s24, 1
      %s382 = scalar_select %p381, %s24, 1
      %p383 = scmp.lt.s32.totalorder %s25, 1
      %s384 = scalar_select %p383, %s25, 1
      %s385 = smul.addr %s382, 2
      %s386 = sadd.s32 %s384, %s385
      %s387 = smul.addr %s386, 4
      %s388 = scalar_lea.vmem %s1, %s387
      %p389 = pneg %p81
      %p390 = pneg %p78
      %p391 = scmp.lt.s32.totalorder %s24, 1
      %s392 = scalar_select %p391, %s24, 1
      %p393 = scmp.lt.s32.totalorder %s25, 3
      %s394 = scalar_select %p393, %s25, 3
      %s395 = smul.addr %s392, 4
      %s396 = sadd.s32 %s394, %s395
      %s397 = smul.addr %s396, 4
      %s398 = scalar_lea.vmem %s2, %s397
      %p399 = pneg %p109
      %p400 = pneg %p106
      %s401 = sadd.s32 %s25, 2
      %p402 = scmp.lt.s32.totalorder %s24, 1
      %s403 = scalar_select %p402, %s24, 1
      %p404 = scmp.lt.s32.totalorder %s401, 3
      %s405 = scalar_select %p404, %s401, 3
      %s406 = smul.addr %s403, 4
      %s407 = sadd.s32 %s405, %s406
      %s408 = smul.addr %s407, 4
      %s409 = scalar_lea.vmem %s3, %s408
      %p410 = pneg %p139
      %p411 = pneg %p136
      %p412 = scmp.lt.s32.totalorder %s24, 1
      %s413 = scalar_select %p412, %s24, 1
      %s414 = scalar_lea.vmem %s4, %s413
      %p415 = pneg %p165
      %p416 = pneg %p162
      %s417 = smul.u32 16, %s25
      %p418 = scmp.lt.s32.totalorder %s417, 31
      %s419 = scalar_select %p418, %s417, 31
      %s420 = smul.addr %s419, 2
      %s421 = smul.addr %s420, 4
      %s422 = scalar_lea.vmem %s5, %s421
      %p423 = pneg %p191
      %p424 = pneg %p188
      %p425 = pneg %p212
      %p426 = pneg %p209
      %p427 = pneg %p233
      %p428 = pneg %p230
      %p429 = pneg %p254
      %p430 = pneg %p251
      %p431 = pneg %p280
      %p432 = pneg %p277
      %p433 = scmp.lt.s32.totalorder %s24, 1
      %s434 = scalar_select %p433, %s24, 1
      %s435 = smul.addr %s434, 2
      %s436 = smul.addr %s435, 4
      %s437 = scalar_lea.vmem %s9, %s436
      %p438 = scmp.lt.s32.totalorder %s24, 1
      %s439 = scalar_select %p438, %s24, 1
      %s440 = smul.addr %s439, 2
      %s441 = smul.addr %s440, 4
      %s442 = scalar_lea.vmem %s0, %s441
      %p443 = scmp.lt.s32.totalorder %s24, 1
      %s444 = scalar_select %p443, %s24, 1
      %p445 = scmp.lt.s32.totalorder %s25, 1
      %s446 = scalar_select %p445, %s25, 1
      %s447 = smul.addr %s444, 2
      %s448 = sadd.s32 %s446, %s447
      %s449 = smul.addr %s448, 4
      %s450 = scalar_lea.vmem %s1, %s449
      %p451 = scmp.lt.s32.totalorder %s24, 1
      %s452 = scalar_select %p451, %s24, 1
      %p453 = scmp.lt.s32.totalorder %s25, 3
      %s454 = scalar_select %p453, %s25, 3
      %s455 = smul.addr %s452, 4
      %s456 = sadd.s32 %s454, %s455
      %s457 = smul.addr %s456, 4
      %s458 = scalar_lea.vmem %s2, %s457
      %s459 = sadd.s32 %s25, 2
      %p460 = scmp.lt.s32.totalorder %s24, 1
      %s461 = scalar_select %p460, %s24, 1
      %p462 = scmp.lt.s32.totalorder %s459, 3
      %s463 = scalar_select %p462, %s459, 3
      %s464 = smul.addr %s461, 4
      %s465 = sadd.s32 %s463, %s464
      %s466 = smul.addr %s465, 4
      %s467 = scalar_lea.vmem %s3, %s466
      %s468 = sadd.s32 %s25, 2
      %p469 = scmp.lt.s32.totalorder %s24, 1
      %s470 = scalar_select %p469, %s24, 1
      %s471 = scalar_lea.vmem %s4, %s470
      %s472 = smul.u32 16, %s25
      %p473 = scmp.lt.s32.totalorder %s472, 31
      %s474 = scalar_select %p473, %s472, 31
      %s475 = smul.addr %s474, 2
      %s476 = smul.addr %s475, 4
      %s477 = scalar_lea.vmem %s5, %s476
      %s478 = smul.u32 16, %s25
      %p479 = scmp.lt.s32.totalorder %s24, 1
      %s480 = scalar_select %p479, %s24, 1
      %s481 = smul.addr %s480, 2
      %s482 = smul.addr %s481, 4
      %s483 = scalar_lea.vmem %s9, %s482
      %p485 = scmp.eq.s32.totalorder %s25, 0
      // Predicated region
      $region57: #{transformer_forward.33} parent=55 // pred_check
        %p486 = pneg %p485
      $region58: #{transformer_forward.33} parent=55 // pred_check_branch
        %488 = sbr.rel (%p486) target = $region60
      $region59: #{transformer_forward.33} parent=55 // pred_region
        %v489 = vld [vmem:[%s442] sm:$0xff]
        %v490 = vunpack.c.l.bf16 %v489
        %v491 = vunpack.c.h.bf16 %v489
        %v492 = vld [vmem:[%s6] sm:$0x3]
        %v494 = vlaneseq
        %v495 = vshrl.u32 %v494, 7
        %v496 = vsub.s32 0, %v495
        %v497 = vrot.slane %v492, %v496
        %v498 = vlaneseq
        %v499 = vshrl.u32 %v498, 7
        %v500 = vsub.s32 1, %v499
        %v501 = vrot.slane %v492, %v500
        %v504 = vadd.f32 %v490, %v497
        %v505 = vadd.f32 %v491, %v501
        %506 = vst [vmem:[#allocation2] sm:$0xff] %v504
        %507 = vst [vmem:[#allocation2 + $0x8] sm:$0xff] %v505
        %v508 = vlaneseq
        %v509 = vshrl.u32 %v508, 7
        %v510 = vlaneseq
        %v511 = vand.u32 %v510, 127
        %v512 = vld [vmem:[%s471] sm:$0x1]
        %vm513 = vcmp.gt.s32.totalorder %v511, %v509
        %v514 = vsel %vm513, -1e+10, 0.0
        %v516 = vlaneseq
        %v517 = vshrl.u32 %v516, 7
        %v518 = vsub.s32 0, %v517
        %v519 = vrot.slane %v512, %v518
        %v521 = vadd.f32 %v519, %v514
        %vm522 = vcmask 64512
        %523 = vst.msk [vmem:[#allocation3] sm:$0xff] %vm522, %v521
      $region60: #{transformer_forward.33} parent=55 // pred_fallthru
        _
      %v524 = vld [vmem:[%s450] sm:$0xf]
      %v525 = vld [vmem:[%s458] sm:$0xf]
      %v526 = vld [vmem:[%s467] sm:$0xf]
      %v527 = vld [vmem:[#allocation3] sm:$0xff]
      %528 = vmatprep.subr.bf16.mxu0 0
      %529 = vmatpush1.bf16.xpose.msra.mxu0 %v525
      %530 = vmatprep.subr.bf16.mxu0 0
      %531 = vmatpush1.bf16.xpose.msra.mxu0 0
      %532 = vmatprep.subr.bf16.mxu0 0
      %533 = vmatpush1.bf16.xpose.msra.mxu0 0
      %534 = vmatprep.subr.bf16.mxu0 0
      %535 = vmatpush1.bf16.xpose.msra.mxu0 0
      %536 = vmatprep.subr.bf16.mxu0 0
      %537 = vmatpush1.bf16.xpose.msra.mxu0 0
      %538 = vmatprep.subr.bf16.mxu0 0
      %539 = vmatpush1.bf16.xpose.msra.mxu0 0
      %540 = vmatprep.subr.bf16.mxu0 0
      %541 = vmatpush1.bf16.xpose.msra.mxu0 0
      %542 = vmatprep.subr.bf16.mxu0 0
      %543 = vmatpush1.bf16.xpose.msra.mxu0 0
      %544 = vmatprep.subr.bf16.mxu0 0
      %545 = vmatpush1.bf16.xpose.msra.mxu0 0
      %546 = vmatprep.subr.bf16.mxu0 0
      %547 = vmatpush1.bf16.xpose.msra.mxu0 0
      %548 = vmatprep.subr.bf16.mxu0 0
      %549 = vmatpush1.bf16.xpose.msra.mxu0 0
      %550 = vmatprep.subr.bf16.mxu0 0
      %551 = vmatpush1.bf16.xpose.msra.mxu0 0
      %552 = vmatprep.subr.bf16.mxu0 0
      %553 = vmatpush1.bf16.xpose.msra.mxu0 0
      %554 = vmatprep.subr.bf16.mxu0 0
      %555 = vmatpush1.bf16.xpose.msra.mxu0 0
      %556 = vmatprep.subr.bf16.mxu0 0
      %557 = vmatpush1.bf16.xpose.msra.mxu0 0
      %558 = vmatprep.subr.bf16.mxu0 0
      %559 = vmatpush1.bf16.xpose.msra.mxu0 0
      %560 = vmatprep.mubr.bf16.mxu0 0
      %561 = vmatmul.mubr.bf16.gmra.mrb[0].mxu0 %v524
      %v562 = vpop.f32.mrb[0].mxu0
      %v563 = vadd.f32 %v527, %v562
      %v564 = vpop.f32.mrb[0].mxu0
      %v565 = vpop.f32.mrb[0].mxu0
      %v566 = vpop.f32.mrb[0].mxu0
      %567 = vdwg.mxu0
      %vm568 = vcmask 64512
      %v569 = vsel %vm568, %v563, -inf
      %570 = vmax.xlane.f32.xlu0 %v569
      %v571 = vpop.xlane.xlu0 %570
      %v572 = vsub.f32 %v563, %v571
      %v573 = vmul.f32 %v572, 1.442695
      %v574 = vpow.pop %v573
      %v575 = vsel %vm568, %v574, 0.0
      %576 = vadd.xlane.f32.xlu0 %v575
      %v577 = vpop.xlane.xlu0 %576
      %v578 = vrcp.pop %v577
      %v579 = vmul.f32 %v574, %v578
      %v580 = vpack.c.bf16 %v579, %v579
      %v582 = vsel %vm568, %v580, 0
      %vm584 = vcmask 1043456
      %v586 = vsel %vm584, %v526, 0
      %588 = vmatprep.subr.bf16.mxu0 0
      %589 = vmatpush1.bf16.msra.mxu0 %v586
      %590 = vmatprep.subr.bf16.mxu0 0
      %591 = vmatpush1.bf16.msra.mxu0 0
      %592 = vmatprep.subr.bf16.mxu0 0
      %593 = vmatpush1.bf16.msra.mxu0 0
      %594 = vmatprep.subr.bf16.mxu0 0
      %595 = vmatpush1.bf16.msra.mxu0 0
      %596 = vmatprep.subr.bf16.mxu0 0
      %597 = vmatpush1.bf16.msra.mxu0 0
      %598 = vmatprep.subr.bf16.mxu0 0
      %599 = vmatpush1.bf16.msra.mxu0 0
      %600 = vmatprep.subr.bf16.mxu0 0
      %601 = vmatpush1.bf16.msra.mxu0 0
      %602 = vmatprep.subr.bf16.mxu0 0
      %603 = vmatpush1.bf16.msra.mxu0 0
      %604 = vmatprep.subr.bf16.mxu0 0
      %605 = vmatpush1.bf16.msra.mxu0 0
      %606 = vmatprep.subr.bf16.mxu0 0
      %607 = vmatpush1.bf16.msra.mxu0 0
      %608 = vmatprep.subr.bf16.mxu0 0
      %609 = vmatpush1.bf16.msra.mxu0 0
      %610 = vmatprep.subr.bf16.mxu0 0
      %611 = vmatpush1.bf16.msra.mxu0 0
      %612 = vmatprep.subr.bf16.mxu0 0
      %613 = vmatpush1.bf16.msra.mxu0 0
      %614 = vmatprep.subr.bf16.mxu0 0
      %615 = vmatpush1.bf16.msra.mxu0 0
      %616 = vmatprep.subr.bf16.mxu0 0
      %617 = vmatpush1.bf16.msra.mxu0 0
      %618 = vmatprep.subr.bf16.mxu0 0
      %619 = vmatpush1.bf16.msra.mxu0 0
      %620 = vmatprep.mubr.bf16.mxu0 0
      %621 = vmatmul.mubr.bf16.gmra.mrb[0].mxu0 %v582
      %v622 = vpop.f32.mrb[0].mxu0
      %v623 = vadd.f32 0.0, %v622
      %v624 = vpop.f32.mrb[0].mxu0
      %v625 = vpop.f32.mrb[0].mxu0
      %v626 = vpop.f32.mrb[0].mxu0
      %627 = vdwg.mxu0
      %v628 = vld [vmem:[#allocation2] sm:$0xff]
      %v629 = vld [vmem:[#allocation2 + $0x8] sm:$0xff]
      %v630 = vpack.c.bf16 %v623, %v623
      %v631 = vld [vmem:[%s477] sm:$0xff]
      %v632 = vld [vmem:[%s477 + $0x8] sm:$0xff]
      %v633 = vld [vmem:[%s477 + $0x10] sm:$0xff]
      %v634 = vld [vmem:[%s477 + $0x18] sm:$0xff]
      %v635 = vld [vmem:[%s477 + $0x20] sm:$0xff]
      %v636 = vld [vmem:[%s477 + $0x28] sm:$0xff]
      %v637 = vld [vmem:[%s477 + $0x30] sm:$0xff]
      %v638 = vld [vmem:[%s477 + $0x38] sm:$0xff]
      %v639 = vld [vmem:[%s477 + $0x40] sm:$0xff]
      %v640 = vld [vmem:[%s477 + $0x48] sm:$0xff]
      %v641 = vld [vmem:[%s477 + $0x50] sm:$0xff]
      %v642 = vld [vmem:[%s477 + $0x58] sm:$0xff]
      %v643 = vld [vmem:[%s477 + $0x60] sm:$0xff]
      %v644 = vld [vmem:[%s477 + $0x68] sm:$0xff]
      %v645 = vld [vmem:[%s477 + $0x70] sm:$0xff]
      %v646 = vld [vmem:[%s477 + $0x78] sm:$0xff]
      %v663 = vunpack.c.l.b16 %v631
      %v664 = vunpack.c.h.b16 %v631
      %v665 = vunpack.c.l.b16 %v632
      %v666 = vunpack.c.h.b16 %v632
      %v667 = vunpack.c.l.b16 %v633
      %v668 = vunpack.c.h.b16 %v633
      %v669 = vunpack.c.l.b16 %v634
      %v670 = vunpack.c.h.b16 %v634
      %v671 = vunpack.c.l.b16 %v635
      %v672 = vunpack.c.h.b16 %v635
      %v673 = vunpack.c.l.b16 %v636
      %v674 = vunpack.c.h.b16 %v636
      %v675 = vunpack.c.l.b16 %v637
      %v676 = vunpack.c.h.b16 %v637
      %v677 = vunpack.c.l.b16 %v638
      %v678 = vunpack.c.h.b16 %v638
      %v679 = vunpack.c.l.b16 %v639
      %v680 = vunpack.c.h.b16 %v639
      %v681 = vunpack.c.l.b16 %v640
      %v682 = vunpack.c.h.b16 %v640
      %v683 = vunpack.c.l.b16 %v641
      %v684 = vunpack.c.h.b16 %v641
      %v685 = vunpack.c.l.b16 %v642
      %v686 = vunpack.c.h.b16 %v642
      %v687 = vunpack.c.l.b16 %v643
      %v688 = vunpack.c.h.b16 %v643
      %v689 = vunpack.c.l.b16 %v644
      %v690 = vunpack.c.h.b16 %v644
      %v691 = vunpack.c.l.b16 %v645
      %v692 = vunpack.c.h.b16 %v645
      %v693 = vunpack.c.l.b16 %v646
      %v694 = vunpack.c.h.b16 %v646
      %v695 = vpack.c.b16 %v665, %v663
      %v696 = vpack.c.b16 %v666, %v664
      %v697 = vpack.c.b16 %v669, %v667
      %v698 = vpack.c.b16 %v670, %v668
      %v699 = vpack.c.b16 %v673, %v671
      %v700 = vpack.c.b16 %v674, %v672
      %v701 = vpack.c.b16 %v677, %v675
      %v702 = vpack.c.b16 %v678, %v676
      %v703 = vpack.c.b16 %v681, %v679
      %v704 = vpack.c.b16 %v682, %v680
      %v705 = vpack.c.b16 %v685, %v683
      %v706 = vpack.c.b16 %v686, %v684
      %v707 = vpack.c.b16 %v689, %v687
      %v708 = vpack.c.b16 %v690, %v688
      %v709 = vpack.c.b16 %v693, %v691
      %v710 = vpack.c.b16 %v694, %v692
      %727 = vmatprep.subr.bf16.mxu0 %v696
      %728 = vmatpush1.bf16.msra.mxu0 %v695
      %729 = vmatprep.subr.bf16.mxu0 %v698
      %730 = vmatpush1.bf16.msra.mxu0 %v697
      %731 = vmatprep.subr.bf16.mxu0 %v700
      %732 = vmatpush1.bf16.msra.mxu0 %v699
      %733 = vmatprep.subr.bf16.mxu0 %v702
      %734 = vmatpush1.bf16.msra.mxu0 %v701
      %735 = vmatprep.subr.bf16.mxu0 %v704
      %736 = vmatpush1.bf16.msra.mxu0 %v703
      %737 = vmatprep.subr.bf16.mxu0 %v706
      %738 = vmatpush1.bf16.msra.mxu0 %v705
      %739 = vmatprep.subr.bf16.mxu0 %v708
      %740 = vmatpush1.bf16.msra.mxu0 %v707
      %741 = vmatprep.subr.bf16.mxu0 %v710
      %742 = vmatpush1.bf16.msra.mxu0 %v709
      %743 = vmatprep.subr.bf16.mxu0 0
      %744 = vmatpush1.bf16.msra.mxu0 0
      %745 = vmatprep.subr.bf16.mxu0 0
      %746 = vmatpush1.bf16.msra.mxu0 0
      %747 = vmatprep.subr.bf16.mxu0 0
      %748 = vmatpush1.bf16.msra.mxu0 0
      %749 = vmatprep.subr.bf16.mxu0 0
      %750 = vmatpush1.bf16.msra.mxu0 0
      %751 = vmatprep.subr.bf16.mxu0 0
      %752 = vmatpush1.bf16.msra.mxu0 0
      %753 = vmatprep.subr.bf16.mxu0 0
      %754 = vmatpush1.bf16.msra.mxu0 0
      %755 = vmatprep.subr.bf16.mxu0 0
      %756 = vmatpush1.bf16.msra.mxu0 0
      %757 = vmatprep.subr.bf16.mxu0 0
      %758 = vmatpush1.bf16.msra.mxu0 0
      %759 = vmatprep.mubr.bf16.mxu0 0
      %760 = vmatmul.mubr.bf16.gmra.mrb[0].mxu0 %v630
      %v761 = vpop.f32.mrb[0].mxu0
      %v762 = vadd.f32 0.0, %v761
      %v763 = vpop.f32.mrb[0].mxu0
      %v764 = vadd.f32 0.0, %v763
      %v765 = vpop.f32.mrb[0].mxu0
      %v766 = vpop.f32.mrb[0].mxu0
      %767 = vdwg.mxu0
      %v768 = vadd.f32 %v628, %v762
      %v769 = vadd.f32 %v629, %v764
      %770 = vst [vmem:[#allocation2] sm:$0xff] %v768
      %771 = vst [vmem:[#allocation2 + $0x8] sm:$0xff] %v769
      %p772 = scmp.eq.s32.totalorder %s25, 1
      // Predicated region
      $region61: #{transformer_forward.33} parent=55 // pred_check
        %p773 = pneg %p772
      $region62: #{transformer_forward.33} parent=55 // pred_check_branch
        %775 = sbr.rel (%p773) target = $region64
      $region63: #{transformer_forward.33} parent=55 // pred_region
        %v776 = vld [vmem:[#allocation2] sm:$0xff]
        %v777 = vld [vmem:[#allocation2 + $0x8] sm:$0xff]
        %v778 = vadd.f32 %v776, %v777
        %779 = vadd.xlane.f32.xlu0 %v778
        %v780 = vpop.xlane.xlu0 %779
        %v781 = vrcp.pop 256.0
        %v782 = vmul.f32 %v780, %v781
        %v783 = vsub.f32 %v776, %v782
        %v784 = vsub.f32 %v777, %v782
        %v785 = vmul.f32 %v783, %v783
        %v786 = vmul.f32 %v784, %v784
        %v787 = vadd.f32 %v785, %v786
        %788 = vadd.xlane.f32.xlu0 %v787
        %v789 = vpop.xlane.xlu0 %788
        %v790 = vmul.f32 %v789, %v781
        %v791 = vadd.f32 %v790, 1e-05
        %v792 = vrsqrt.pop %v791
        %v793 = vmul.f32 %v783, %v792
        %v794 = vmul.f32 %v784, %v792
        %v795 = vld [vmem:[%s7] sm:$0x3]
        %v797 = vlaneseq
        %v798 = vshrl.u32 %v797, 7
        %v799 = vsub.s32 0, %v798
        %v800 = vrot.slane %v795, %v799
        %v801 = vlaneseq
        %v802 = vshrl.u32 %v801, 7
        %v803 = vsub.s32 1, %v802
        %v804 = vrot.slane %v795, %v803
        %v807 = vmul.f32 %v793, %v800
        %v808 = vmul.f32 %v794, %v804
        %v809 = vld [vmem:[%s8] sm:$0x3]
        %v811 = vlaneseq
        %v812 = vshrl.u32 %v811, 7
        %v813 = vsub.s32 0, %v812
        %v814 = vrot.slane %v809, %v813
        %v815 = vlaneseq
        %v816 = vshrl.u32 %v815, 7
        %v817 = vsub.s32 1, %v816
        %v818 = vrot.slane %v809, %v817
        %v821 = vadd.f32 %v807, %v814
        %v822 = vadd.f32 %v808, %v818
        %v823 = vpack.c.bf16 %v821, %v821
        %v824 = vpack.c.bf16 %v822, %v822
        %v827 = vunpack.c.l.b16 %v823
        %v828 = vunpack.c.l.b16 %v824
        %v829 = vpack.c.b16 %v828, %v827
        %831 = vst [vmem:[%s483] sm:$0xff] %v829
      $region64: #{transformer_forward.33} parent=55 // pred_fallthru
        _
      %p832 = scmp.lt.s32.totalorder %s24, 1
      %s833 = scalar_select %p832, %s24, 1
      %s834 = smul.addr %s833, 2
      %s835 = smul.addr %s834, 4
      %s836 = scalar_lea.vmem %s9, %s835
      // Predicated region
      $region65: #{transformer_forward.33} parent=55 // pred_check
        %p837 = pneg %p277
      $region66: #{transformer_forward.33} parent=55 // pred_check_branch
        %839 = sbr.rel (%p837) target = $region68
      $region67: #{transformer_forward.33} parent=55 // pred_region
        _
      $region68: #{transformer_forward.33} parent=55 // pred_fallthru
        _
    $region56: #{transformer_forward.33} parent=5 // pred_fallthru
      _
    %p840 = scmp.le.s32.totalorder 2, %s15
    // Predicated region
    $region69: #{transformer_forward.33} parent=5 // pred_check
      %p841 = pneg %p840
    $region70: #{transformer_forward.33} parent=5 // pred_check_branch
      %843 = sbr.rel (%p841) target = $region72
    $region71: #{transformer_forward.33} parent=5 // pred_region
      %s844 = ssub.s32 %s15, 2
      // Predicated region
      $region73: #{transformer_forward.33} parent=71 // pred_check
        %p845 = pneg %p283
      $region74: #{transformer_forward.33} parent=71 // pred_check_branch
        %847 = sbr.rel (%p845) target = $region76
      $region75: #{transformer_forward.33} parent=71 // pred_region
        %p848 = scmp.lt.s32.totalorder %s26, 1
        %s849 = scalar_select %p848, %s26, 1
        %s850 = smul.addr %s849, 2
        %s851 = smul.addr %s850, 4
        %s852 = scalar_lea.vmem %s9, %s851
      $region76: #{transformer_forward.33} parent=71 // pred_fallthru
        _
    $region72: #{transformer_forward.33} parent=5 // pred_fallthru
      _
  $region6: #{transformer_forward.33} parent=0 // loop_footer
    %s19 = sadd.s32 1, %s15
  $region7: #{transformer_forward.33} parent=0 // loop_footer_branch
    %14 = sbr.rel target = $region3
  $region8: #{transformer_forward.33} parent=0 // loop_exit
    _

// kernel: transformer_forward.45
$region0: #{transformer_forward.45}
  #allocation0 [shape = 'u32[]', space=smem, size = 0x4, offset = 0x4, fixed_abs, tag = 'smem constant byte address 0x4 - core index']
  #allocation1 [shape = 'u32[144,128]{1,0:T(1,128)}', space=vmem, size = 0x12000, scoped, tag = 'internal scratch']
  %s0 = inlined_call_operand.vmem [shape: bf16[16,256], index: 0, kind: input, shape index: {}]
  %s1 = inlined_call_operand.vmem [shape: bf16[256,256], index: 1, kind: input, shape index: {}]
  %s2 = inlined_call_operand.vmem [shape: f32[1,256], index: 2, kind: input, shape index: {}]
  %s3 = inlined_call_operand.hbm [shape: f32[16,256], index: 3, kind: output, shape index: {}]
  %s4 = sld [smem:[#allocation0]]
  $region22: #{transformer_forward.45} parent=0
    _
  %s6 = ssub.s32 1, %s4
  %s7 = scalar_select 0, %s6, %s4
  $region1: #{transformer_forward.45} parent=0
    #allocation2 [shape = 'u8[16384]{0}', space=vmem, size = 0x4000, scoped, tag = 'output window, operand 0, single buffered']
    #allocation3 [shape = 's32[1]{0}', space=sflag, size = 0x4, scoped, tag = 'scoped memory for transformer_forward.45']
    %8 = vsyncpa [#allocation3], 0
    // Predicated region
    $region2: #{transformer_forward.45} parent=1 // pred_check
      _
    $region3: #{transformer_forward.45} parent=1 // pred_check_branch
      %10 = sbr.rel (0) target = $region5
    $region4: #{transformer_forward.45} parent=1 // pred_region
      _
    $region5: #{transformer_forward.45} parent=1 // pred_fallthru
      _
    // Predicated region
    $region6: #{transformer_forward.45} parent=1 // pred_check
      _
    $region7: #{transformer_forward.45} parent=1 // pred_check_branch
      %12 = sbr.rel (0) target = $region9
    $region8: #{transformer_forward.45} parent=1 // pred_region
      _
    $region9: #{transformer_forward.45} parent=1 // pred_fallthru
      _
    // Predicated region
    $region10: #{transformer_forward.45} parent=1 // pred_check
      _
    $region11: #{transformer_forward.45} parent=1 // pred_check_branch
      %14 = sbr.rel (0) target = $region13
    $region12: #{transformer_forward.45} parent=1 // pred_region
      _
    $region13: #{transformer_forward.45} parent=1 // pred_fallthru
      _
    %v15 = vld [vmem:[%s0] sm:$0xff]
    %v16 = vld [vmem:[%s0 + $0x8] sm:$0xff]
    %v17 = vld [vmem:[%s1] sm:$0xff]
    %v18 = vld [vmem:[%s1 + $0x8] sm:$0xff]
    %v19 = vld [vmem:[%s1 + $0x10] sm:$0xff]
    %v20 = vld [vmem:[%s1 + $0x18] sm:$0xff]
    %v21 = vld [vmem:[%s1 + $0x20] sm:$0xff]
    %v22 = vld [vmem:[%s1 + $0x28] sm:$0xff]
    %v23 = vld [vmem:[%s1 + $0x30] sm:$0xff]
    %v24 = vld [vmem:[%s1 + $0x38] sm:$0xff]
    %v25 = vld [vmem:[%s1 + $0x40] sm:$0xff]
    %v26 = vld [vmem:[%s1 + $0x48] sm:$0xff]
    %v27 = vld [vmem:[%s1 + $0x50] sm:$0xff]
    %v28 = vld [vmem:[%s1 + $0x58] sm:$0xff]
    %v29 = vld [vmem:[%s1 + $0x60] sm:$0xff]
    %v30 = vld [vmem:[%s1 + $0x68] sm:$0xff]
    %v31 = vld [vmem:[%s1 + $0x70] sm:$0xff]
    %v32 = vld [vmem:[%s1 + $0x78] sm:$0xff]
    %v33 = vld [vmem:[%s1 + $0x80] sm:$0xff]
    %v34 = vld [vmem:[%s1 + $0x88] sm:$0xff]
    %v35 = vld [vmem:[%s1 + $0x90] sm:$0xff]
    %v36 = vld [vmem:[%s1 + $0x98] sm:$0xff]
    %v37 = vld [vmem:[%s1 + $0xa0] sm:$0xff]
    %v38 = vld [vmem:[%s1 + $0xa8] sm:$0xff]
    %v39 = vld [vmem:[%s1 + $0xb0] sm:$0xff]
    %v40 = vld [vmem:[%s1 + $0xb8] sm:$0xff]
    %v41 = vld [vmem:[%s1 + $0xc0] sm:$0xff]
    %v42 = vld [vmem:[%s1 + $0xc8] sm:$0xff]
    %v43 = vld [vmem:[%s1 + $0xd0] sm:$0xff]
    %v44 = vld [vmem:[%s1 + $0xd8] sm:$0xff]
    %v45 = vld [vmem:[%s1 + $0xe0] sm:$0xff]
    %v46 = vld [vmem:[%s1 + $0xe8] sm:$0xff]
    %v47 = vld [vmem:[%s1 + $0xf0] sm:$0xff]
    %v48 = vld [vmem:[%s1 + $0xf8] sm:$0xff]
    %v49 = vld [vmem:[%s2] sm:$0x3]
    %v51 = vlaneseq
    %v52 = vshrl.u32 %v51, 7
    %v53 = vsub.s32 0, %v52
    %v54 = vrot.slane %v49, %v53
    %v55 = vlaneseq
    %v56 = vshrl.u32 %v55, 7
    %v57 = vsub.s32 1, %v56
    %v58 = vrot.slane %v49, %v57
    %v63 = vunpack.c.l.b16 %v15
    %v64 = vunpack.c.h.b16 %v15
    %v65 = vunpack.c.l.b16 %v16
    %v66 = vunpack.c.h.b16 %v16
    %v67 = vpack.c.b16 %v65, %v63
    %v68 = vpack.c.b16 %v66, %v64
    %v103 = vunpack.c.l.b16 %v17
    %v104 = vunpack.c.h.b16 %v17
    %v105 = vunpack.c.l.b16 %v18
    %v106 = vunpack.c.h.b16 %v18
    %v107 = vunpack.c.l.b16 %v19
    %v108 = vunpack.c.h.b16 %v19
    %v109 = vunpack.c.l.b16 %v20
    %v110 = vunpack.c.h.b16 %v20
    %v111 = vunpack.c.l.b16 %v21
    %v112 = vunpack.c.h.b16 %v21
    %v113 = vunpack.c.l.b16 %v22
    %v114 = vunpack.c.h.b16 %v22
    %v115 = vunpack.c.l.b16 %v23
    %v116 = vunpack.c.h.b16 %v23
    %v117 = vunpack.c.l.b16 %v24
    %v118 = vunpack.c.h.b16 %v24
    %v119 = vunpack.c.l.b16 %v25
    %v120 = vunpack.c.h.b16 %v25
    %v121 = vunpack.c.l.b16 %v26
    %v122 = vunpack.c.h.b16 %v26
    %v123 = vunpack.c.l.b16 %v27
    %v124 = vunpack.c.h.b16 %v27
    %v125 = vunpack.c.l.b16 %v28
    %v126 = vunpack.c.h.b16 %v28
    %v127 = vunpack.c.l.b16 %v29
    %v128 = vunpack.c.h.b16 %v29
    %v129 = vunpack.c.l.b16 %v30
    %v130 = vunpack.c.h.b16 %v30
    %v131 = vunpack.c.l.b16 %v31
    %v132 = vunpack.c.h.b16 %v31
    %v133 = vunpack.c.l.b16 %v32
    %v134 = vunpack.c.h.b16 %v32
    %v135 = vunpack.c.l.b16 %v33
    %v136 = vunpack.c.h.b16 %v33
    %v137 = vunpack.c.l.b16 %v34
    %v138 = vunpack.c.h.b16 %v34
    %v139 = vunpack.c.l.b16 %v35
    %v140 = vunpack.c.h.b16 %v35
    %v141 = vunpack.c.l.b16 %v36
    %v142 = vunpack.c.h.b16 %v36
    %v143 = vunpack.c.l.b16 %v37
    %v144 = vunpack.c.h.b16 %v37
    %v145 = vunpack.c.l.b16 %v38
    %v146 = vunpack.c.h.b16 %v38
    %v147 = vunpack.c.l.b16 %v39
    %v148 = vunpack.c.h.b16 %v39
    %v149 = vunpack.c.l.b16 %v40
    %v150 = vunpack.c.h.b16 %v40
    %v151 = vunpack.c.l.b16 %v41
    %v152 = vunpack.c.h.b16 %v41
    %v153 = vunpack.c.l.b16 %v42
    %v154 = vunpack.c.h.b16 %v42
    %v155 = vunpack.c.l.b16 %v43
    %v156 = vunpack.c.h.b16 %v43
    %v157 = vunpack.c.l.b16 %v44
    %v158 = vunpack.c.h.b16 %v44
    %v159 = vunpack.c.l.b16 %v45
    %v160 = vunpack.c.h.b16 %v45
    %v161 = vunpack.c.l.b16 %v46
    %v162 = vunpack.c.h.b16 %v46
    %v163 = vunpack.c.l.b16 %v47
    %v164 = vunpack.c.h.b16 %v47
    %v165 = vunpack.c.l.b16 %v48
    %v166 = vunpack.c.h.b16 %v48
    %v167 = vpack.c.b16 %v105, %v103
    %v168 = vpack.c.b16 %v106, %v104
    %v169 = vpack.c.b16 %v109, %v107
    %v170 = vpack.c.b16 %v110, %v108
    %v171 = vpack.c.b16 %v113, %v111
    %v172 = vpack.c.b16 %v114, %v112
    %v173 = vpack.c.b16 %v117, %v115
    %v174 = vpack.c.b16 %v118, %v116
    %v175 = vpack.c.b16 %v121, %v119
    %v176 = vpack.c.b16 %v122, %v120
    %v177 = vpack.c.b16 %v125, %v123
    %v178 = vpack.c.b16 %v126, %v124
    %v179 = vpack.c.b16 %v129, %v127
    %v180 = vpack.c.b16 %v130, %v128
    %v181 = vpack.c.b16 %v133, %v131
    %v182 = vpack.c.b16 %v134, %v132
    %v183 = vpack.c.b16 %v137, %v135
    %v184 = vpack.c.b16 %v138, %v136
    %v185 = vpack.c.b16 %v141, %v139
    %v186 = vpack.c.b16 %v142, %v140
    %v187 = vpack.c.b16 %v145, %v143
    %v188 = vpack.c.b16 %v146, %v144
    %v189 = vpack.c.b16 %v149, %v147
    %v190 = vpack.c.b16 %v150, %v148
    %v191 = vpack.c.b16 %v153, %v151
    %v192 = vpack.c.b16 %v154, %v152
    %v193 = vpack.c.b16 %v157, %v155
    %v194 = vpack.c.b16 %v158, %v156
    %v195 = vpack.c.b16 %v161, %v159
    %v196 = vpack.c.b16 %v162, %v160
    %v197 = vpack.c.b16 %v165, %v163
    %v198 = vpack.c.b16 %v166, %v164
    %231 = vmatprep.subr.bf16.mxu0 %v168
    %232 = vmatpush1.bf16.msra.mxu0 %v167
    %233 = vmatprep.subr.bf16.mxu0 %v170
    %234 = vmatpush1.bf16.msra.mxu0 %v169
    %235 = vmatprep.subr.bf16.mxu0 %v172
    %236 = vmatpush1.bf16.msra.mxu0 %v171
    %237 = vmatprep.subr.bf16.mxu0 %v174
    %238 = vmatpush1.bf16.msra.mxu0 %v173
    %239 = vmatprep.subr.bf16.mxu0 %v176
    %240 = vmatpush1.bf16.msra.mxu0 %v175
    %241 = vmatprep.subr.bf16.mxu0 %v178
    %242 = vmatpush1.bf16.msra.mxu0 %v177
    %243 = vmatprep.subr.bf16.mxu0 %v180
    %244 = vmatpush1.bf16.msra.mxu0 %v179
    %245 = vmatprep.subr.bf16.mxu0 %v182
    %246 = vmatpush1.bf16.msra.mxu0 %v181
    %247 = vmatprep.subr.bf16.mxu0 %v184
    %248 = vmatpush1.bf16.msra.mxu0 %v183
    %249 = vmatprep.subr.bf16.mxu0 %v186
    %250 = vmatpush1.bf16.msra.mxu0 %v185
    %251 = vmatprep.subr.bf16.mxu0 %v188
    %252 = vmatpush1.bf16.msra.mxu0 %v187
    %253 = vmatprep.subr.bf16.mxu0 %v190
    %254 = vmatpush1.bf16.msra.mxu0 %v189
    %255 = vmatprep.subr.bf16.mxu0 %v192
    %256 = vmatpush1.bf16.msra.mxu0 %v191
    %257 = vmatprep.subr.bf16.mxu0 %v194
    %258 = vmatpush1.bf16.msra.mxu0 %v193
    %259 = vmatprep.subr.bf16.mxu0 %v196
    %260 = vmatpush1.bf16.msra.mxu0 %v195
    %261 = vmatprep.subr.bf16.mxu0 %v198
    %262 = vmatpush1.bf16.msra.mxu0 %v197
    %263 = vmatprep.mubr.bf16.mxu0 %v68
    %264 = vmatmul.mubr.bf16.gmra.mrb[0].mxu0 %v67
    %v265 = vpop.f32.mrb[0].mxu0
    %v266 = vadd.f32 %v54, %v265
    %v267 = vpop.f32.mrb[0].mxu0
    %v268 = vadd.f32 %v58, %v267
    %v269 = vpop.f32.mrb[0].mxu0
    %v270 = vadd.f32 %v54, %v269
    %v271 = vpop.f32.mrb[0].mxu0
    %v272 = vadd.f32 %v58, %v271
    %273 = vdwg.mxu0
    %274 = vst [vmem:[#allocation2] sm:$0xff] %v266
    %275 = vst [vmem:[#allocation2 + $0x8] sm:$0xff] %v268
    %276 = vst [vmem:[#allocation2 + $0x10] sm:$0xff] %v270
    %277 = vst [vmem:[#allocation2 + $0x18] sm:$0xff] %v272
    // Predicated region
    $region14: #{transformer_forward.45} parent=1 // pred_check
      _
    $region15: #{transformer_forward.45} parent=1 // pred_check_branch
      %279 = sbr.rel (0) target = $region17
    $region16: #{transformer_forward.45} parent=1 // pred_region
      %s281 = ssub.s32 512, 512
      %282 = vsyncadd [#allocation3], %s281
      %s283 = sshll.u32 [#allocation2], 4
      %s284 = int_to_ptr.vmem [resolvable:$true] %s283
      %289 = dma.vmem_to_hbm [thread:$0]  %s284, 512, %s3, [#allocation3], 256, 256, 16
    $region17: #{transformer_forward.45} parent=1 // pred_fallthru
      _
    // Predicated region
    $region18: #{transformer_forward.45} parent=1 // pred_check
      _
    $region19: #{transformer_forward.45} parent=1 // pred_check_branch
      %291 = sbr.rel (0) target = $region21
    $region20: #{transformer_forward.45} parent=1 // pred_region
      %292 = dma.done [#allocation3], 512
    $region21: #{transformer_forward.45} parent=1 // pred_fallthru
      _
    %293 = vsyncpa [#allocation3], 1

// kernel: transformer_forward.26
$region0: #{transformer_forward.26}
  #allocation0 [shape = 'u32[]', space=smem, size = 0x4, offset = 0x4, fixed_abs, tag = 'smem constant byte address 0x4 - core index']
  #allocation1 [shape = 'u32[144,128]{1,0:T(1,128)}', space=vmem, size = 0x12000, scoped, tag = 'internal scratch']
  #allocation2 [shape = 'f32[16,256]{1,0:T(8,128)}', space=vmem, size = 0x4000, scoped, tag = 'scratch operand']
  %s0 = inlined_call_operand.vmem [shape: bf16[16,256], index: 0, kind: input, shape index: {}]
  %s1 = inlined_call_operand.vmem [shape: bf16[256,512], index: 1, kind: input, shape index: {}]
  %s2 = inlined_call_operand.vmem [shape: f32[1,512], index: 2, kind: input, shape index: {}]
  %s3 = inlined_call_operand.vmem [shape: bf16[512,256], index: 3, kind: input, shape index: {}]
  %s4 = inlined_call_operand.vmem [shape: f32[1,256], index: 4, kind: input, shape index: {}]
  %s5 = inlined_call_operand.vmem [shape: f32[1,256], index: 5, kind: input, shape index: {}]
  %s6 = inlined_call_operand.vmem [shape: f32[1,256], index: 6, kind: input, shape index: {}]
  %s7 = inlined_call_operand.vmem [shape: bf16[16,256], index: 7, kind: output, shape index: {}]
  %s8 = sld [smem:[#allocation0]]
  $region46: #{transformer_forward.26} parent=0
    _
  %s10 = ssub.s32 1, %s8
  %s11 = scalar_select 0, %s10, %s8
  // Predicated region
  $region2: #{transformer_forward.26} parent=0 // pred_check
    _
  $region3: #{transformer_forward.26} parent=0 // pred_check_branch
    %13 = sbr.rel (0) target = $region5
  $region4: #{transformer_forward.26} parent=0 // pred_region
    _
  $region5: #{transformer_forward.26} parent=0 // pred_fallthru
    _
  // Predicated region
  $region6: #{transformer_forward.26} parent=0 // pred_check
    _
  $region7: #{transformer_forward.26} parent=0 // pred_check_branch
    %15 = sbr.rel (0) target = $region9
  $region8: #{transformer_forward.26} parent=0 // pred_region
    _
  $region9: #{transformer_forward.26} parent=0 // pred_fallthru
    _
  // Predicated region
  $region10: #{transformer_forward.26} parent=0 // pred_check
    _
  $region11: #{transformer_forward.26} parent=0 // pred_check_branch
    %17 = sbr.rel (0) target = $region13
  $region12: #{transformer_forward.26} parent=0 // pred_region
    _
  $region13: #{transformer_forward.26} parent=0 // pred_fallthru
    _
  // Predicated region
  $region14: #{transformer_forward.26} parent=0 // pred_check
    _
  $region15: #{transformer_forward.26} parent=0 // pred_check_branch
    %19 = sbr.rel (0) target = $region17
  $region16: #{transformer_forward.26} parent=0 // pred_region
    _
  $region17: #{transformer_forward.26} parent=0 // pred_fallthru
    _
  // Predicated region
  $region18: #{transformer_forward.26} parent=0 // pred_check
    _
  $region19: #{transformer_forward.26} parent=0 // pred_check_branch
    %21 = sbr.rel (0) target = $region21
  $region20: #{transformer_forward.26} parent=0 // pred_region
    _
  $region21: #{transformer_forward.26} parent=0 // pred_fallthru
    _
  // Predicated region
  $region22: #{transformer_forward.26} parent=0 // pred_check
    _
  $region23: #{transformer_forward.26} parent=0 // pred_check_branch
    %23 = sbr.rel (0) target = $region25
  $region24: #{transformer_forward.26} parent=0 // pred_region
    _
  $region25: #{transformer_forward.26} parent=0 // pred_fallthru
    _
  // Predicated region
  $region26: #{transformer_forward.26} parent=0 // pred_check
    _
  $region27: #{transformer_forward.26} parent=0 // pred_check_branch
    %25 = sbr.rel (0) target = $region29
  $region28: #{transformer_forward.26} parent=0 // pred_region
    _
  $region29: #{transformer_forward.26} parent=0 // pred_fallthru
    _
  %p26 = scmp.eq.s32.totalorder 0, 0
  // Predicated region
  $region30: #{transformer_forward.26} parent=0 // pred_check
    %p27 = pneg %p26
  $region31: #{transformer_forward.26} parent=0 // pred_check_branch
    %29 = sbr.rel (%p27) target = $region33
  $region32: #{transformer_forward.26} parent=0 // pred_region
    %v30 = vld [vmem:[%s0] sm:$0xff]
    %v31 = vld [vmem:[%s0 + $0x8] sm:$0xff]
    %v32 = vunpack.c.l.bf16 %v30
    %v33 = vunpack.c.h.bf16 %v30
    %v34 = vunpack.c.l.bf16 %v31
    %v35 = vunpack.c.h.bf16 %v31
    %v36 = vld [vmem:[%s4] sm:$0x3]
    %v38 = vlaneseq
    %v39 = vshrl.u32 %v38, 7
    %v40 = vsub.s32 0, %v39
    %v41 = vrot.slane %v36, %v40
    %v42 = vlaneseq
    %v43 = vshrl.u32 %v42, 7
    %v44 = vsub.s32 1, %v43
    %v45 = vrot.slane %v36, %v44
    %v48 = vadd.f32 %v32, %v41
    %v49 = vadd.f32 %v33, %v45
    %v50 = vadd.f32 %v34, %v41
    %v51 = vadd.f32 %v35, %v45
    %52 = vst [vmem:[#allocation2] sm:$0xff] %v48
    %53 = vst [vmem:[#allocation2 + $0x8] sm:$0xff] %v49
    %54 = vst [vmem:[#allocation2 + $0x10] sm:$0xff] %v50
    %55 = vst [vmem:[#allocation2 + $0x18] sm:$0xff] %v51
  $region33: #{transformer_forward.26} parent=0 // pred_fallthru
    _
  %v56 = vld [vmem:[%s0] sm:$0xff]
  %v57 = vld [vmem:[%s0 + $0x8] sm:$0xff]
  %v58 = vld [vmem:[%s1] sm:$0xff]
  %v59 = vld [vmem:[%s1 + $0x8] sm:$0xff]
  %v60 = vld [vmem:[%s1 + $0x10] sm:$0xff]
  %v61 = vld [vmem:[%s1 + $0x18] sm:$0xff]
  %v62 = vld [vmem:[%s1 + $0x20] sm:$0xff]
  %v63 = vld [vmem:[%s1 + $0x28] sm:$0xff]
  %v64 = vld [vmem:[%s1 + $0x30] sm:$0xff]
  %v65 = vld [vmem:[%s1 + $0x38] sm:$0xff]
  %v66 = vld [vmem:[%s1 + $0x40] sm:$0xff]
  %v67 = vld [vmem:[%s1 + $0x48] sm:$0xff]
  %v68 = vld [vmem:[%s1 + $0x50] sm:$0xff]
  %v69 = vld [vmem:[%s1 + $0x58] sm:$0xff]
  %v70 = vld [vmem:[%s1 + $0x60] sm:$0xff]
  %v71 = vld [vmem:[%s1 + $0x68] sm:$0xff]
  %v72 = vld [vmem:[%s1 + $0x70] sm:$0xff]
  %v73 = vld [vmem:[%s1 + $0x78] sm:$0xff]
  %v74 = vld [vmem:[%s1 + $0x80] sm:$0xff]
  %v75 = vld [vmem:[%s1 + $0x88] sm:$0xff]
  %v76 = vld [vmem:[%s1 + $0x90] sm:$0xff]
  %v77 = vld [vmem:[%s1 + $0x98] sm:$0xff]
  %v78 = vld [vmem:[%s1 + $0xa0] sm:$0xff]
  %v79 = vld [vmem:[%s1 + $0xa8] sm:$0xff]
  %v80 = vld [vmem:[%s1 + $0xb0] sm:$0xff]
  %v81 = vld [vmem:[%s1 + $0xb8] sm:$0xff]
  %v82 = vld [vmem:[%s1 + $0xc0] sm:$0xff]
  %v83 = vld [vmem:[%s1 + $0xc8] sm:$0xff]
  %v84 = vld [vmem:[%s1 + $0xd0] sm:$0xff]
  %v85 = vld [vmem:[%s1 + $0xd8] sm:$0xff]
  %v86 = vld [vmem:[%s1 + $0xe0] sm:$0xff]
  %v87 = vld [vmem:[%s1 + $0xe8] sm:$0xff]
  %v88 = vld [vmem:[%s1 + $0xf0] sm:$0xff]
  %v89 = vld [vmem:[%s1 + $0xf8] sm:$0xff]
  %v90 = vld [vmem:[%s1 + $0x100] sm:$0xff]
  %v91 = vld [vmem:[%s1 + $0x108] sm:$0xff]
  %v92 = vld [vmem:[%s1 + $0x110] sm:$0xff]
  %v93 = vld [vmem:[%s1 + $0x118] sm:$0xff]
  %v94 = vld [vmem:[%s1 + $0x120] sm:$0xff]
  %v95 = vld [vmem:[%s1 + $0x128] sm:$0xff]
  %v96 = vld [vmem:[%s1 + $0x130] sm:$0xff]
  %v97 = vld [vmem:[%s1 + $0x138] sm:$0xff]
  %v98 = vld [vmem:[%s1 + $0x140] sm:$0xff]
  %v99 = vld [vmem:[%s1 + $0x148] sm:$0xff]
  %v100 = vld [vmem:[%s1 + $0x150] sm:$0xff]
  %v101 = vld [vmem:[%s1 + $0x158] sm:$0xff]
  %v102 = vld [vmem:[%s1 + $0x160] sm:$0xff]
  %v103 = vld [vmem:[%s1 + $0x168] sm:$0xff]
  %v104 = vld [vmem:[%s1 + $0x170] sm:$0xff]
  %v105 = vld [vmem:[%s1 + $0x178] sm:$0xff]
  %v106 = vld [vmem:[%s1 + $0x180] sm:$0xff]
  %v107 = vld [vmem:[%s1 + $0x188] sm:$0xff]
  %v108 = vld [vmem:[%s1 + $0x190] sm:$0xff]
  %v109 = vld [vmem:[%s1 + $0x198] sm:$0xff]
  %v110 = vld [vmem:[%s1 + $0x1a0] sm:$0xff]
  %v111 = vld [vmem:[%s1 + $0x1a8] sm:$0xff]
  %v112 = vld [vmem:[%s1 + $0x1b0] sm:$0xff]
  %v113 = vld [vmem:[%s1 + $0x1b8] sm:$0xff]
  %v114 = vld [vmem:[%s1 + $0x1c0] sm:$0xff]
  %v115 = vld [vmem:[%s1 + $0x1c8] sm:$0xff]
  %v116 = vld [vmem:[%s1 + $0x1d0] sm:$0xff]
  %v117 = vld [vmem:[%s1 + $0x1d8] sm:$0xff]
  %v118 = vld [vmem:[%s1 + $0x1e0] sm:$0xff]
  %v119 = vld [vmem:[%s1 + $0x1e8] sm:$0xff]
  %v120 = vld [vmem:[%s1 + $0x1f0] sm:$0xff]
  %v121 = vld [vmem:[%s1 + $0x1f8] sm:$0xff]
  %v122 = vld [vmem:[%s2] sm:$0xf]
  %v124 = vlaneseq
  %v125 = vshrl.u32 %v124, 7
  %v126 = vsub.s32 0, %v125
  %v127 = vrot.slane %v122, %v126
  %v128 = vlaneseq
  %v129 = vshrl.u32 %v128, 7
  %v130 = vsub.s32 1, %v129
  %v131 = vrot.slane %v122, %v130
  %v132 = vlaneseq
  %v133 = vshrl.u32 %v132, 7
  %v134 = vsub.s32 2, %v133
  %v135 = vrot.slane %v122, %v134
  %v136 = vlaneseq
  %v137 = vshrl.u32 %v136, 7
  %v138 = vsub.s32 3, %v137
  %v139 = vrot.slane %v122, %v138
  %v146 = vunpack.c.l.b16 %v56
  %v147 = vunpack.c.h.b16 %v56
  %v148 = vunpack.c.l.b16 %v57
  %v149 = vunpack.c.h.b16 %v57
  %v150 = vpack.c.b16 %v148, %v146
  %v151 = vpack.c.b16 %v149, %v147
  %v218 = vunpack.c.l.b16 %v58
  %v219 = vunpack.c.h.b16 %v58
  %v220 = vunpack.c.l.b16 %v59
  %v221 = vunpack.c.h.b16 %v59
  %v222 = vunpack.c.l.b16 %v60
  %v223 = vunpack.c.h.b16 %v60
  %v224 = vunpack.c.l.b16 %v61
  %v225 = vunpack.c.h.b16 %v61
  %v226 = vunpack.c.l.b16 %v62
  %v227 = vunpack.c.h.b16 %v62
  %v228 = vunpack.c.l.b16 %v63
  %v229 = vunpack.c.h.b16 %v63
  %v230 = vunpack.c.l.b16 %v64
  %v231 = vunpack.c.h.b16 %v64
  %v232 = vunpack.c.l.b16 %v65
  %v233 = vunpack.c.h.b16 %v65
  %v234 = vunpack.c.l.b16 %v66
  %v235 = vunpack.c.h.b16 %v66
  %v236 = vunpack.c.l.b16 %v67
  %v237 = vunpack.c.h.b16 %v67
  %v238 = vunpack.c.l.b16 %v68
  %v239 = vunpack.c.h.b16 %v68
  %v240 = vunpack.c.l.b16 %v69
  %v241 = vunpack.c.h.b16 %v69
  %v242 = vunpack.c.l.b16 %v70
  %v243 = vunpack.c.h.b16 %v70
  %v244 = vunpack.c.l.b16 %v71
  %v245 = vunpack.c.h.b16 %v71
  %v246 = vunpack.c.l.b16 %v72
  %v247 = vunpack.c.h.b16 %v72
  %v248 = vunpack.c.l.b16 %v73
  %v249 = vunpack.c.h.b16 %v73
  %v250 = vunpack.c.l.b16 %v74
  %v251 = vunpack.c.h.b16 %v74
  %v252 = vunpack.c.l.b16 %v75
  %v253 = vunpack.c.h.b16 %v75
  %v254 = vunpack.c.l.b16 %v76
  %v255 = vunpack.c.h.b16 %v76
  %v256 = vunpack.c.l.b16 %v77
  %v257 = vunpack.c.h.b16 %v77
  %v258 = vunpack.c.l.b16 %v78
  %v259 = vunpack.c.h.b16 %v78
  %v260 = vunpack.c.l.b16 %v79
  %v261 = vunpack.c.h.b16 %v79
  %v262 = vunpack.c.l.b16 %v80
  %v263 = vunpack.c.h.b16 %v80
  %v264 = vunpack.c.l.b16 %v81
  %v265 = vunpack.c.h.b16 %v81
  %v266 = vunpack.c.l.b16 %v82
  %v267 = vunpack.c.h.b16 %v82
  %v268 = vunpack.c.l.b16 %v83
  %v269 = vunpack.c.h.b16 %v83
  %v270 = vunpack.c.l.b16 %v84
  %v271 = vunpack.c.h.b16 %v84
  %v272 = vunpack.c.l.b16 %v85
  %v273 = vunpack.c.h.b16 %v85
  %v274 = vunpack.c.l.b16 %v86
  %v275 = vunpack.c.h.b16 %v86
  %v276 = vunpack.c.l.b16 %v87
  %v277 = vunpack.c.h.b16 %v87
  %v278 = vunpack.c.l.b16 %v88
  %v279 = vunpack.c.h.b16 %v88
  %v280 = vunpack.c.l.b16 %v89
  %v281 = vunpack.c.h.b16 %v89
  %v282 = vunpack.c.l.b16 %v90
  %v283 = vunpack.c.h.b16 %v90
  %v284 = vunpack.c.l.b16 %v91
  %v285 = vunpack.c.h.b16 %v91
  %v286 = vunpack.c.l.b16 %v92
  %v287 = vunpack.c.h.b16 %v92
  %v288 = vunpack.c.l.b16 %v93
  %v289 = vunpack.c.h.b16 %v93
  %v290 = vunpack.c.l.b16 %v94
  %v291 = vunpack.c.h.b16 %v94
  %v292 = vunpack.c.l.b16 %v95
  %v293 = vunpack.c.h.b16 %v95
  %v294 = vunpack.c.l.b16 %v96
  %v295 = vunpack.c.h.b16 %v96
  %v296 = vunpack.c.l.b16 %v97
  %v297 = vunpack.c.h.b16 %v97
  %v298 = vunpack.c.l.b16 %v98
  %v299 = vunpack.c.h.b16 %v98
  %v300 = vunpack.c.l.b16 %v99
  %v301 = vunpack.c.h.b16 %v99
  %v302 = vunpack.c.l.b16 %v100
  %v303 = vunpack.c.h.b16 %v100
  %v304 = vunpack.c.l.b16 %v101
  %v305 = vunpack.c.h.b16 %v101
  %v306 = vunpack.c.l.b16 %v102
  %v307 = vunpack.c.h.b16 %v102
  %v308 = vunpack.c.l.b16 %v103
  %v309 = vunpack.c.h.b16 %v103
  %v310 = vunpack.c.l.b16 %v104
  %v311 = vunpack.c.h.b16 %v104
  %v312 = vunpack.c.l.b16 %v105
  %v313 = vunpack.c.h.b16 %v105
  %v314 = vunpack.c.l.b16 %v106
  %v315 = vunpack.c.h.b16 %v106
  %v316 = vunpack.c.l.b16 %v107
  %v317 = vunpack.c.h.b16 %v107
  %v318 = vunpack.c.l.b16 %v108
  %v319 = vunpack.c.h.b16 %v108
  %v320 = vunpack.c.l.b16 %v109
  %v321 = vunpack.c.h.b16 %v109
  %v322 = vunpack.c.l.b16 %v110
  %v323 = vunpack.c.h.b16 %v110
  %v324 = vunpack.c.l.b16 %v111
  %v325 = vunpack.c.h.b16 %v111
  %v326 = vunpack.c.l.b16 %v112
  %v327 = vunpack.c.h.b16 %v112
  %v328 = vunpack.c.l.b16 %v113
  %v329 = vunpack.c.h.b16 %v113
  %v330 = vunpack.c.l.b16 %v114
  %v331 = vunpack.c.h.b16 %v114
  %v332 = vunpack.c.l.b16 %v115
  %v333 = vunpack.c.h.b16 %v115
  %v334 = vunpack.c.l.b16 %v116
  %v335 = vunpack.c.h.b16 %v116
  %v336 = vunpack.c.l.b16 %v117
  %v337 = vunpack.c.h.b16 %v117
  %v338 = vunpack.c.l.b16 %v118
  %v339 = vunpack.c.h.b16 %v118
  %v340 = vunpack.c.l.b16 %v119
  %v341 = vunpack.c.h.b16 %v119
  %v342 = vunpack.c.l.b16 %v120
  %v343 = vunpack.c.h.b16 %v120
  %v344 = vunpack.c.l.b16 %v121
  %v345 = vunpack.c.h.b16 %v121
  %v346 = vpack.c.b16 %v222, %v218
  %v347 = vpack.c.b16 %v223, %v219
  %v348 = vpack.c.b16 %v224, %v220
  %v349 = vpack.c.b16 %v225, %v221
  %v350 = vpack.c.b16 %v230, %v226
  %v351 = vpack.c.b16 %v231, %v227
  %v352 = vpack.c.b16 %v232, %v228
  %v353 = vpack.c.b16 %v233, %v229
  %v354 = vpack.c.b16 %v238, %v234
  %v355 = vpack.c.b16 %v239, %v235
  %v356 = vpack.c.b16 %v240, %v236
  %v357 = vpack.c.b16 %v241, %v237
  %v358 = vpack.c.b16 %v246, %v242
  %v359 = vpack.c.b16 %v247, %v243
  %v360 = vpack.c.b16 %v248, %v244
  %v361 = vpack.c.b16 %v249, %v245
  %v362 = vpack.c.b16 %v254, %v250
  %v363 = vpack.c.b16 %v255, %v251
  %v364 = vpack.c.b16 %v256, %v252
  %v365 = vpack.c.b16 %v257, %v253
  %v366 = vpack.c.b16 %v262, %v258
  %v367 = vpack.c.b16 %v263, %v259
  %v368 = vpack.c.b16 %v264, %v260
  %v369 = vpack.c.b16 %v265, %v261
  %v370 = vpack.c.b16 %v270, %v266
  %v371 = vpack.c.b16 %v271, %v267
  %v372 = vpack.c.b16 %v272, %v268
  %v373 = vpack.c.b16 %v273, %v269
  %v374 = vpack.c.b16 %v278, %v274
  %v375 = vpack.c.b16 %v279, %v275
  %v376 = vpack.c.b16 %v280, %v276
  %v377 = vpack.c.b16 %v281, %v277
  %v378 = vpack.c.b16 %v286, %v282
  %v379 = vpack.c.b16 %v287, %v283
  %v380 = vpack.c.b16 %v288, %v284
  %v381 = vpack.c.b16 %v289, %v285
  %v382 = vpack.c.b16 %v294, %v290
  %v383 = vpack.c.b16 %v295, %v291
  %v384 = vpack.c.b16 %v296, %v292
  %v385 = vpack.c.b16 %v297, %v293
  %v386 = vpack.c.b16 %v302, %v298
  %v387 = vpack.c.b16 %v303, %v299
  %v388 = vpack.c.b16 %v304, %v300
  %v389 = vpack.c.b16 %v305, %v301
  %v390 = vpack.c.b16 %v310, %v306
  %v391 = vpack.c.b16 %v311, %v307
  %v392 = vpack.c.b16 %v312, %v308
  %v393 = vpack.c.b16 %v313, %v309
  %v394 = vpack.c.b16 %v318, %v314
  %v395 = vpack.c.b16 %v319, %v315
  %v396 = vpack.c.b16 %v320, %v316
  %v397 = vpack.c.b16 %v321, %v317
  %v398 = vpack.c.b16 %v326, %v322
  %v399 = vpack.c.b16 %v327, %v323
  %v400 = vpack.c.b16 %v328, %v324
  %v401 = vpack.c.b16 %v329, %v325
  %v402 = vpack.c.b16 %v334, %v330
  %v403 = vpack.c.b16 %v335, %v331
  %v404 = vpack.c.b16 %v336, %v332
  %v405 = vpack.c.b16 %v337, %v333
  %v406 = vpack.c.b16 %v342, %v338
  %v407 = vpack.c.b16 %v343, %v339
  %v408 = vpack.c.b16 %v344, %v340
  %v409 = vpack.c.b16 %v345, %v341
  %474 = vmatprep.subr.bf16.mxu0 %v347
  %475 = vmatpush1.bf16.msra.mxu0 %v346
  %476 = vmatprep.subr.bf16.mxu0 %v351
  %477 = vmatpush1.bf16.msra.mxu0 %v350
  %478 = vmatprep.subr.bf16.mxu0 %v355
  %479 = vmatpush1.bf16.msra.mxu0 %v354
  %480 = vmatprep.subr.bf16.mxu0 %v359
  %481 = vmatpush1.bf16.msra.mxu0 %v358
  %482 = vmatprep.subr.bf16.mxu0 %v363
  %483 = vmatpush1.bf16.msra.mxu0 %v362
  %484 = vmatprep.subr.bf16.mxu0 %v367
  %485 = vmatpush1.bf16.msra.mxu0 %v366
  %486 = vmatprep.subr.bf16.mxu0 %v371
  %487 = vmatpush1.bf16.msra.mxu0 %v370
  %488 = vmatprep.subr.bf16.mxu0 %v375
  %489 = vmatpush1.bf16.msra.mxu0 %v374
  %490 = vmatprep.subr.bf16.mxu0 %v379
  %491 = vmatpush1.bf16.msra.mxu0 %v378
  %492 = vmatprep.subr.bf16.mxu0 %v383
  %493 = vmatpush1.bf16.msra.mxu0 %v382
  %494 = vmatprep.subr.bf16.mxu0 %v387
  %495 = vmatpush1.bf16.msra.mxu0 %v386
  %496 = vmatprep.subr.bf16.mxu0 %v391
  %497 = vmatpush1.bf16.msra.mxu0 %v390
  %498 = vmatprep.subr.bf16.mxu0 %v395
  %499 = vmatpush1.bf16.msra.mxu0 %v394
  %500 = vmatprep.subr.bf16.mxu0 %v399
  %501 = vmatpush1.bf16.msra.mxu0 %v398
  %502 = vmatprep.subr.bf16.mxu0 %v403
  %503 = vmatpush1.bf16.msra.mxu0 %v402
  %504 = vmatprep.subr.bf16.mxu0 %v407
  %505 = vmatpush1.bf16.msra.mxu0 %v406
  %506 = vmatprep.mubr.bf16.mxu0 %v151
  %507 = vmatmul.mubr.bf16.gmra.mrb[0].mxu0 %v150
  %v508 = vpop.f32.mrb[0].mxu0
  %v509 = vadd.f32 %v127, %v508
  %v510 = vpop.f32.mrb[0].mxu0
  %v511 = vadd.f32 %v131, %v510
  %v512 = vpop.f32.mrb[0].mxu0
  %v513 = vadd.f32 %v127, %v512
  %v514 = vpop.f32.mrb[0].mxu0
  %v515 = vadd.f32 %v131, %v514
  %516 = vdwg.mxu0
  %517 = vmatprep.subr.bf16.mxu0 %v349
  %518 = vmatpush1.bf16.msra.mxu0 %v348
  %519 = vmatprep.subr.bf16.mxu0 %v353
  %520 = vmatpush1.bf16.msra.mxu0 %v352
  %521 = vmatprep.subr.bf16.mxu0 %v357
  %522 = vmatpush1.bf16.msra.mxu0 %v356
  %523 = vmatprep.subr.bf16.mxu0 %v361
  %524 = vmatpush1.bf16.msra.mxu0 %v360
  %525 = vmatprep.subr.bf16.mxu0 %v365
  %526 = vmatpush1.bf16.msra.mxu0 %v364
  %527 = vmatprep.subr.bf16.mxu0 %v369
  %528 = vmatpush1.bf16.msra.mxu0 %v368
  %529 = vmatprep.subr.bf16.mxu0 %v373
  %530 = vmatpush1.bf16.msra.mxu0 %v372
  %531 = vmatprep.subr.bf16.mxu0 %v377
  %532 = vmatpush1.bf16.msra.mxu0 %v376
  %533 = vmatprep.subr.bf16.mxu0 %v381
  %534 = vmatpush1.bf16.msra.mxu0 %v380
  %535 = vmatprep.subr.bf16.mxu0 %v385
  %536 = vmatpush1.bf16.msra.mxu0 %v384
  %537 = vmatprep.subr.bf16.mxu0 %v389
  %538 = vmatpush1.bf16.msra.mxu0 %v388
  %539 = vmatprep.subr.bf16.mxu0 %v393
  %540 = vmatpush1.bf16.msra.mxu0 %v392
  %541 = vmatprep.subr.bf16.mxu0 %v397
  %542 = vmatpush1.bf16.msra.mxu0 %v396
  %543 = vmatprep.subr.bf16.mxu0 %v401
  %544 = vmatpush1.bf16.msra.mxu0 %v400
  %545 = vmatprep.subr.bf16.mxu0 %v405
  %546 = vmatpush1.bf16.msra.mxu0 %v404
  %547 = vmatprep.subr.bf16.mxu0 %v409
  %548 = vmatpush1.bf16.msra.mxu0 %v408
  %549 = vmatprep.mubr.bf16.mxu0 %v151
  %550 = vmatmul.mubr.bf16.gmra.mrb[0].mxu0 %v150
  %v551 = vpop.f32.mrb[0].mxu0
  %v552 = vadd.f32 %v135, %v551
  %v553 = vpop.f32.mrb[0].mxu0
  %v554 = vadd.f32 %v139, %v553
  %v555 = vpop.f32.mrb[0].mxu0
  %v556 = vadd.f32 %v135, %v555
  %v557 = vpop.f32.mrb[0].mxu0
  %v558 = vadd.f32 %v139, %v557
  %559 = vdwg.mxu0
  %v560 = vmax.f32 %v509, 0.0
  %v561 = vmax.f32 %v511, 0.0
  %v562 = vmax.f32 %v552, 0.0
  %v563 = vmax.f32 %v554, 0.0
  %v564 = vmax.f32 %v513, 0.0
  %v565 = vmax.f32 %v515, 0.0
  %v566 = vmax.f32 %v556, 0.0
  %v567 = vmax.f32 %v558, 0.0
  %v568 = vld [vmem:[#allocation2] sm:$0xff]
  %v569 = vld [vmem:[#allocation2 + $0x8] sm:$0xff]
  %v570 = vld [vmem:[#allocation2 + $0x10] sm:$0xff]
  %v571 = vld [vmem:[#allocation2 + $0x18] sm:$0xff]
  %v572 = vpack.c.bf16 %v564, %v560
  %v573 = vpack.c.bf16 %v565, %v561
  %v574 = vpack.c.bf16 %v566, %v562
  %v575 = vpack.c.bf16 %v567, %v563
  %v576 = vld [vmem:[%s3] sm:$0xff]
  %v577 = vld [vmem:[%s3 + $0x8] sm:$0xff]
  %v578 = vld [vmem:[%s3 + $0x10] sm:$0xff]
  %v579 = vld [vmem:[%s3 + $0x18] sm:$0xff]
  %v580 = vld [vmem:[%s3 + $0x20] sm:$0xff]
  %v581 = vld [vmem:[%s3 + $0x28] sm:$0xff]
  %v582 = vld [vmem:[%s3 + $0x30] sm:$0xff]
  %v583 = vld [vmem:[%s3 + $0x38] sm:$0xff]
  %v584 = vld [vmem:[%s3 + $0x40] sm:$0xff]
  %v585 = vld [vmem:[%s3 + $0x48] sm:$0xff]
  %v586 = vld [vmem:[%s3 + $0x50] sm:$0xff]
  %v587 = vld [vmem:[%s3 + $0x58] sm:$0xff]
  %v588 = vld [vmem:[%s3 + $0x60] sm:$0xff]
  %v589 = vld [vmem:[%s3 + $0x68] sm:$0xff]
  %v590 = vld [vmem:[%s3 + $0x70] sm:$0xff]
  %v591 = vld [vmem:[%s3 + $0x78] sm:$0xff]
  %v592 = vld [vmem:[%s3 + $0x80] sm:$0xff]
  %v593 = vld [vmem:[%s3 + $0x88] sm:$0xff]
  %v594 = vld [vmem:[%s3 + $0x90] sm:$0xff]
  %v595 = vld [vmem:[%s3 + $0x98] sm:$0xff]
  %v596 = vld [vmem:[%s3 + $0xa0] sm:$0xff]
  %v597 = vld [vmem:[%s3 + $0xa8] sm:$0xff]
  %v598 = vld [vmem:[%s3 + $0xb0] sm:$0xff]
  %v599 = vld [vmem:[%s3 + $0xb8] sm:$0xff]
  %v600 = vld [vmem:[%s3 + $0xc0] sm:$0xff]
  %v601 = vld [vmem:[%s3 + $0xc8] sm:$0xff]
  %v602 = vld [vmem:[%s3 + $0xd0] sm:$0xff]
  %v603 = vld [vmem:[%s3 + $0xd8] sm:$0xff]
  %v604 = vld [vmem:[%s3 + $0xe0] sm:$0xff]
  %v605 = vld [vmem:[%s3 + $0xe8] sm:$0xff]
  %v606 = vld [vmem:[%s3 + $0xf0] sm:$0xff]
  %v607 = vld [vmem:[%s3 + $0xf8] sm:$0xff]
  %v608 = vld [vmem:[%s3 + $0x100] sm:$0xff]
  %v609 = vld [vmem:[%s3 + $0x108] sm:$0xff]
  %v610 = vld [vmem:[%s3 + $0x110] sm:$0xff]
  %v611 = vld [vmem:[%s3 + $0x118] sm:$0xff]
  %v612 = vld [vmem:[%s3 + $0x120] sm:$0xff]
  %v613 = vld [vmem:[%s3 + $0x128] sm:$0xff]
  %v614 = vld [vmem:[%s3 + $0x130] sm:$0xff]
  %v615 = vld [vmem:[%s3 + $0x138] sm:$0xff]
  %v616 = vld [vmem:[%s3 + $0x140] sm:$0xff]
  %v617 = vld [vmem:[%s3 + $0x148] sm:$0xff]
  %v618 = vld [vmem:[%s3 + $0x150] sm:$0xff]
  %v619 = vld [vmem:[%s3 + $0x158] sm:$0xff]
  %v620 = vld [vmem:[%s3 + $0x160] sm:$0xff]
  %v621 = vld [vmem:[%s3 + $0x168] sm:$0xff]
  %v622 = vld [vmem:[%s3 + $0x170] sm:$0xff]
  %v623 = vld [vmem:[%s3 + $0x178] sm:$0xff]
  %v624 = vld [vmem:[%s3 + $0x180] sm:$0xff]
  %v625 = vld [vmem:[%s3 + $0x188] sm:$0xff]
  %v626 = vld [vmem:[%s3 + $0x190] sm:$0xff]
  %v627 = vld [vmem:[%s3 + $0x198] sm:$0xff]
  %v628 = vld [vmem:[%s3 + $0x1a0] sm:$0xff]
  %v629 = vld [vmem:[%s3 + $0x1a8] sm:$0xff]
  %v630 = vld [vmem:[%s3 + $0x1b0] sm:$0xff]
  %v631 = vld [vmem:[%s3 + $0x1b8] sm:$0xff]
  %v632 = vld [vmem:[%s3 + $0x1c0] sm:$0xff]
  %v633 = vld [vmem:[%s3 + $0x1c8] sm:$0xff]
  %v634 = vld [vmem:[%s3 + $0x1d0] sm:$0xff]
  %v635 = vld [vmem:[%s3 + $0x1d8] sm:$0xff]
  %v636 = vld [vmem:[%s3 + $0x1e0] sm:$0xff]
  %v637 = vld [vmem:[%s3 + $0x1e8] sm:$0xff]
  %v638 = vld [vmem:[%s3 + $0x1f0] sm:$0xff]
  %v639 = vld [vmem:[%s3 + $0x1f8] sm:$0xff]
  %v704 = vunpack.c.l.b16 %v576
  %v705 = vunpack.c.h.b16 %v576
  %v706 = vunpack.c.l.b16 %v577
  %v707 = vunpack.c.h.b16 %v577
  %v708 = vunpack.c.l.b16 %v578
  %v709 = vunpack.c.h.b16 %v578
  %v710 = vunpack.c.l.b16 %v579
  %v711 = vunpack.c.h.b16 %v579
  %v712 = vunpack.c.l.b16 %v580
  %v713 = vunpack.c.h.b16 %v580
  %v714 = vunpack.c.l.b16 %v581
  %v715 = vunpack.c.h.b16 %v581
  %v716 = vunpack.c.l.b16 %v582
  %v717 = vunpack.c.h.b16 %v582
  %v718 = vunpack.c.l.b16 %v583
  %v719 = vunpack.c.h.b16 %v583
  %v720 = vunpack.c.l.b16 %v584
  %v721 = vunpack.c.h.b16 %v584
  %v722 = vunpack.c.l.b16 %v585
  %v723 = vunpack.c.h.b16 %v585
  %v724 = vunpack.c.l.b16 %v586
  %v725 = vunpack.c.h.b16 %v586
  %v726 = vunpack.c.l.b16 %v587
  %v727 = vunpack.c.h.b16 %v587
  %v728 = vunpack.c.l.b16 %v588
  %v729 = vunpack.c.h.b16 %v588
  %v730 = vunpack.c.l.b16 %v589
  %v731 = vunpack.c.h.b16 %v589
  %v732 = vunpack.c.l.b16 %v590
  %v733 = vunpack.c.h.b16 %v590
  %v734 = vunpack.c.l.b16 %v591
  %v735 = vunpack.c.h.b16 %v591
  %v736 = vunpack.c.l.b16 %v592
  %v737 = vunpack.c.h.b16 %v592
  %v738 = vunpack.c.l.b16 %v593
  %v739 = vunpack.c.h.b16 %v593
  %v740 = vunpack.c.l.b16 %v594
  %v741 = vunpack.c.h.b16 %v594
  %v742 = vunpack.c.l.b16 %v595
  %v743 = vunpack.c.h.b16 %v595
  %v744 = vunpack.c.l.b16 %v596
  %v745 = vunpack.c.h.b16 %v596
  %v746 = vunpack.c.l.b16 %v597
  %v747 = vunpack.c.h.b16 %v597
  %v748 = vunpack.c.l.b16 %v598
  %v749 = vunpack.c.h.b16 %v598
  %v750 = vunpack.c.l.b16 %v599
  %v751 = vunpack.c.h.b16 %v599
  %v752 = vunpack.c.l.b16 %v600
  %v753 = vunpack.c.h.b16 %v600
  %v754 = vunpack.c.l.b16 %v601
  %v755 = vunpack.c.h.b16 %v601
  %v756 = vunpack.c.l.b16 %v602
  %v757 = vunpack.c.h.b16 %v602
  %v758 = vunpack.c.l.b16 %v603
  %v759 = vunpack.c.h.b16 %v603
  %v760 = vunpack.c.l.b16 %v604
  %v761 = vunpack.c.h.b16 %v604
  %v762 = vunpack.c.l.b16 %v605
  %v763 = vunpack.c.h.b16 %v605
  %v764 = vunpack.c.l.b16 %v606
  %v765 = vunpack.c.h.b16 %v606
  %v766 = vunpack.c.l.b16 %v607
  %v767 = vunpack.c.h.b16 %v607
  %v768 = vunpack.c.l.b16 %v608
  %v769 = vunpack.c.h.b16 %v608
  %v770 = vunpack.c.l.b16 %v609
  %v771 = vunpack.c.h.b16 %v609
  %v772 = vunpack.c.l.b16 %v610
  %v773 = vunpack.c.h.b16 %v610
  %v774 = vunpack.c.l.b16 %v611
  %v775 = vunpack.c.h.b16 %v611
  %v776 = vunpack.c.l.b16 %v612
  %v777 = vunpack.c.h.b16 %v612
  %v778 = vunpack.c.l.b16 %v613
  %v779 = vunpack.c.h.b16 %v613
  %v780 = vunpack.c.l.b16 %v614
  %v781 = vunpack.c.h.b16 %v614
  %v782 = vunpack.c.l.b16 %v615
  %v783 = vunpack.c.h.b16 %v615
  %v784 = vunpack.c.l.b16 %v616
  %v785 = vunpack.c.h.b16 %v616
  %v786 = vunpack.c.l.b16 %v617
  %v787 = vunpack.c.h.b16 %v617
  %v788 = vunpack.c.l.b16 %v618
  %v789 = vunpack.c.h.b16 %v618
  %v790 = vunpack.c.l.b16 %v619
  %v791 = vunpack.c.h.b16 %v619
  %v792 = vunpack.c.l.b16 %v620
  %v793 = vunpack.c.h.b16 %v620
  %v794 = vunpack.c.l.b16 %v621
  %v795 = vunpack.c.h.b16 %v621
  %v796 = vunpack.c.l.b16 %v622
  %v797 = vunpack.c.h.b16 %v622
  %v798 = vunpack.c.l.b16 %v623
  %v799 = vunpack.c.h.b16 %v623
  %v800 = vunpack.c.l.b16 %v624
  %v801 = vunpack.c.h.b16 %v624
  %v802 = vunpack.c.l.b16 %v625
  %v803 = vunpack.c.h.b16 %v625
  %v804 = vunpack.c.l.b16 %v626
  %v805 = vunpack.c.h.b16 %v626
  %v806 = vunpack.c.l.b16 %v627
  %v807 = vunpack.c.h.b16 %v627
  %v808 = vunpack.c.l.b16 %v628
  %v809 = vunpack.c.h.b16 %v628
  %v810 = vunpack.c.l.b16 %v629
  %v811 = vunpack.c.h.b16 %v629
  %v812 = vunpack.c.l.b16 %v630
  %v813 = vunpack.c.h.b16 %v630
  %v814 = vunpack.c.l.b16 %v631
  %v815 = vunpack.c.h.b16 %v631
  %v816 = vunpack.c.l.b16 %v632
  %v817 = vunpack.c.h.b16 %v632
  %v818 = vunpack.c.l.b16 %v633
  %v819 = vunpack.c.h.b16 %v633
  %v820 = vunpack.c.l.b16 %v634
  %v821 = vunpack.c.h.b16 %v634
  %v822 = vunpack.c.l.b16 %v635
  %v823 = vunpack.c.h.b16 %v635
  %v824 = vunpack.c.l.b16 %v636
  %v825 = vunpack.c.h.b16 %v636
  %v826 = vunpack.c.l.b16 %v637
  %v827 = vunpack.c.h.b16 %v637
  %v828 = vunpack.c.l.b16 %v638
  %v829 = vunpack.c.h.b16 %v638
  %v830 = vunpack.c.l.b16 %v639
  %v831 = vunpack.c.h.b16 %v639
  %v832 = vpack.c.b16 %v706, %v704
  %v833 = vpack.c.b16 %v707, %v705
  %v834 = vpack.c.b16 %v710, %v708
  %v835 = vpack.c.b16 %v711, %v709
  %v836 = vpack.c.b16 %v714, %v712
  %v837 = vpack.c.b16 %v715, %v713
  %v838 = vpack.c.b16 %v718, %v716
  %v839 = vpack.c.b16 %v719, %v717
  %v840 = vpack.c.b16 %v722, %v720
  %v841 = vpack.c.b16 %v723, %v721
  %v842 = vpack.c.b16 %v726, %v724
  %v843 = vpack.c.b16 %v727, %v725
  %v844 = vpack.c.b16 %v730, %v728
  %v845 = vpack.c.b16 %v731, %v729
  %v846 = vpack.c.b16 %v734, %v732
  %v847 = vpack.c.b16 %v735, %v733
  %v848 = vpack.c.b16 %v738, %v736
  %v849 = vpack.c.b16 %v739, %v737
  %v850 = vpack.c.b16 %v742, %v740
  %v851 = vpack.c.b16 %v743, %v741
  %v852 = vpack.c.b16 %v746, %v744
  %v853 = vpack.c.b16 %v747, %v745
  %v854 = vpack.c.b16 %v750, %v748
  %v855 = vpack.c.b16 %v751, %v749
  %v856 = vpack.c.b16 %v754, %v752
  %v857 = vpack.c.b16 %v755, %v753
  %v858 = vpack.c.b16 %v758, %v756
  %v859 = vpack.c.b16 %v759, %v757
  %v860 = vpack.c.b16 %v762, %v760
  %v861 = vpack.c.b16 %v763, %v761
  %v862 = vpack.c.b16 %v766, %v764
  %v863 = vpack.c.b16 %v767, %v765
  %v864 = vpack.c.b16 %v770, %v768
  %v865 = vpack.c.b16 %v771, %v769
  %v866 = vpack.c.b16 %v774, %v772
  %v867 = vpack.c.b16 %v775, %v773
  %v868 = vpack.c.b16 %v778, %v776
  %v869 = vpack.c.b16 %v779, %v777
  %v870 = vpack.c.b16 %v782, %v780
  %v871 = vpack.c.b16 %v783, %v781
  %v872 = vpack.c.b16 %v786, %v784
  %v873 = vpack.c.b16 %v787, %v785
  %v874 = vpack.c.b16 %v790, %v788
  %v875 = vpack.c.b16 %v791, %v789
  %v876 = vpack.c.b16 %v794, %v792
  %v877 = vpack.c.b16 %v795, %v793
  %v878 = vpack.c.b16 %v798, %v796
  %v879 = vpack.c.b16 %v799, %v797
  %v880 = vpack.c.b16 %v802, %v800
  %v881 = vpack.c.b16 %v803, %v801
  %v882 = vpack.c.b16 %v806, %v804
  %v883 = vpack.c.b16 %v807, %v805
  %v884 = vpack.c.b16 %v810, %v808
  %v885 = vpack.c.b16 %v811, %v809
  %v886 = vpack.c.b16 %v814, %v812
  %v887 = vpack.c.b16 %v815, %v813
  %v888 = vpack.c.b16 %v818, %v816
  %v889 = vpack.c.b16 %v819, %v817
  %v890 = vpack.c.b16 %v822, %v820
  %v891 = vpack.c.b16 %v823, %v821
  %v892 = vpack.c.b16 %v826, %v824
  %v893 = vpack.c.b16 %v827, %v825
  %v894 = vpack.c.b16 %v830, %v828
  %v895 = vpack.c.b16 %v831, %v829
  %960 = vmatprep.subr.bf16.mxu0 %v833
  %961 = vmatpush1.bf16.msra.mxu0 %v832
  %962 = vmatprep.subr.bf16.mxu0 %v835
  %963 = vmatpush1.bf16.msra.mxu0 %v834
  %964 = vmatprep.subr.bf16.mxu0 %v837
  %965 = vmatpush1.bf16.msra.mxu0 %v836
  %966 = vmatprep.subr.bf16.mxu0 %v839
  %967 = vmatpush1.bf16.msra.mxu0 %v838
  %968 = vmatprep.subr.bf16.mxu0 %v841
  %969 = vmatpush1.bf16.msra.mxu0 %v840
  %970 = vmatprep.subr.bf16.mxu0 %v843
  %971 = vmatpush1.bf16.msra.mxu0 %v842
  %972 = vmatprep.subr.bf16.mxu0 %v845
  %973 = vmatpush1.bf16.msra.mxu0 %v844
  %974 = vmatprep.subr.bf16.mxu0 %v847
  %975 = vmatpush1.bf16.msra.mxu0 %v846
  %976 = vmatprep.subr.bf16.mxu0 %v849
  %977 = vmatpush1.bf16.msra.mxu0 %v848
  %978 = vmatprep.subr.bf16.mxu0 %v851
  %979 = vmatpush1.bf16.msra.mxu0 %v850
  %980 = vmatprep.subr.bf16.mxu0 %v853
  %981 = vmatpush1.bf16.msra.mxu0 %v852
  %982 = vmatprep.subr.bf16.mxu0 %v855
  %983 = vmatpush1.bf16.msra.mxu0 %v854
  %984 = vmatprep.subr.bf16.mxu0 %v857
  %985 = vmatpush1.bf16.msra.mxu0 %v856
  %986 = vmatprep.subr.bf16.mxu0 %v859
  %987 = vmatpush1.bf16.msra.mxu0 %v858
  %988 = vmatprep.subr.bf16.mxu0 %v861
  %989 = vmatpush1.bf16.msra.mxu0 %v860
  %990 = vmatprep.subr.bf16.mxu0 %v863
  %991 = vmatpush1.bf16.msra.mxu0 %v862
  %992 = vmatprep.mubr.bf16.mxu0 %v573
  %993 = vmatmul.mubr.bf16.gmra.mrb[0].mxu0 %v572
  %v994 = vpop.f32.mrb[0].mxu0
  %v995 = vadd.f32 0.0, %v994
  %v996 = vpop.f32.mrb[0].mxu0
  %v997 = vadd.f32 0.0, %v996
  %v998 = vpop.f32.mrb[0].mxu0
  %v999 = vadd.f32 0.0, %v998
  %v1000 = vpop.f32.mrb[0].mxu0
  %v1001 = vadd.f32 0.0, %v1000
  %1002 = vdwg.mxu0
  %1003 = vmatprep.subr.bf16.mxu0 %v865
  %1004 = vmatpush1.bf16.msra.mxu0 %v864
  %1005 = vmatprep.subr.bf16.mxu0 %v867
  %1006 = vmatpush1.bf16.msra.mxu0 %v866
  %1007 = vmatprep.subr.bf16.mxu0 %v869
  %1008 = vmatpush1.bf16.msra.mxu0 %v868
  %1009 = vmatprep.subr.bf16.mxu0 %v871
  %1010 = vmatpush1.bf16.msra.mxu0 %v870
  %1011 = vmatprep.subr.bf16.mxu0 %v873
  %1012 = vmatpush1.bf16.msra.mxu0 %v872
  %1013 = vmatprep.subr.bf16.mxu0 %v875
  %1014 = vmatpush1.bf16.msra.mxu0 %v874
  %1015 = vmatprep.subr.bf16.mxu0 %v877
  %1016 = vmatpush1.bf16.msra.mxu0 %v876
  %1017 = vmatprep.subr.bf16.mxu0 %v879
  %1018 = vmatpush1.bf16.msra.mxu0 %v878
  %1019 = vmatprep.subr.bf16.mxu0 %v881
  %1020 = vmatpush1.bf16.msra.mxu0 %v880
  %1021 = vmatprep.subr.bf16.mxu0 %v883
  %1022 = vmatpush1.bf16.msra.mxu0 %v882
  %1023 = vmatprep.subr.bf16.mxu0 %v885
  %1024 = vmatpush1.bf16.msra.mxu0 %v884
  %1025 = vmatprep.subr.bf16.mxu0 %v887
  %1026 = vmatpush1.bf16.msra.mxu0 %v886
  %1027 = vmatprep.subr.bf16.mxu0 %v889
  %1028 = vmatpush1.bf16.msra.mxu0 %v888
  %1029 = vmatprep.subr.bf16.mxu0 %v891
  %1030 = vmatpush1.bf16.msra.mxu0 %v890
  %1031 = vmatprep.subr.bf16.mxu0 %v893
  %1032 = vmatpush1.bf16.msra.mxu0 %v892
  %1033 = vmatprep.subr.bf16.mxu0 %v895
  %1034 = vmatpush1.bf16.msra.mxu0 %v894
  %1035 = vmatprep.mubr.bf16.mxu0 %v575
  %1036 = vmatmul.mubr.bf16.gmra.mrb[0].mxu0 %v574
  %v1037 = vpop.f32.mrb[0].mxu0
  %v1038 = vadd.f32 %v995, %v1037
  %v1039 = vpop.f32.mrb[0].mxu0
  %v1040 = vadd.f32 %v997, %v1039
  %v1041 = vpop.f32.mrb[0].mxu0
  %v1042 = vadd.f32 %v999, %v1041
  %v1043 = vpop.f32.mrb[0].mxu0
  %v1044 = vadd.f32 %v1001, %v1043
  %1045 = vdwg.mxu0
  %v1046 = vadd.f32 %v568, %v1038
  %v1047 = vadd.f32 %v569, %v1040
  %v1048 = vadd.f32 %v570, %v1042
  %v1049 = vadd.f32 %v571, %v1044
  %1050 = vst [vmem:[#allocation2] sm:$0xff] %v1046
  %1051 = vst [vmem:[#allocation2 + $0x8] sm:$0xff] %v1047
  %1052 = vst [vmem:[#allocation2 + $0x10] sm:$0xff] %v1048
  %1053 = vst [vmem:[#allocation2 + $0x18] sm:$0xff] %v1049
  // Predicated region
  $region34: #{transformer_forward.26} parent=0 // pred_check
    %p1054 = pneg %p26
  $region35: #{transformer_forward.26} parent=0 // pred_check_branch
    %1056 = sbr.rel (%p1054) target = $region37
  $region36: #{transformer_forward.26} parent=0 // pred_region
    %v1057 = vld [vmem:[#allocation2] sm:$0xff]
    %v1058 = vld [vmem:[#allocation2 + $0x8] sm:$0xff]
    %v1059 = vld [vmem:[#allocation2 + $0x10] sm:$0xff]
    %v1060 = vld [vmem:[#allocation2 + $0x18] sm:$0xff]
    %v1061 = vadd.f32 %v1057, %v1058
    %1062 = vadd.xlane.f32.xlu0 %v1061
    %v1063 = vpop.xlane.xlu0 %1062
    %v1064 = vadd.f32 %v1059, %v1060
    %1065 = vadd.xlane.f32.xlu0 %v1064
    %v1066 = vpop.xlane.xlu0 %1065
    %v1067 = vrcp.pop 256.0
    %v1068 = vmul.f32 %v1063, %v1067
    %v1069 = vmul.f32 %v1066, %v1067
    %v1070 = vsub.f32 %v1057, %v1068
    %v1071 = vsub.f32 %v1058, %v1068
    %v1072 = vsub.f32 %v1059, %v1069
    %v1073 = vsub.f32 %v1060, %v1069
    %v1074 = vmul.f32 %v1070, %v1070
    %v1075 = vmul.f32 %v1071, %v1071
    %v1076 = vmul.f32 %v1072, %v1072
    %v1077 = vmul.f32 %v1073, %v1073
    %v1078 = vadd.f32 %v1074, %v1075
    %1079 = vadd.xlane.f32.xlu0 %v1078
    %v1080 = vpop.xlane.xlu0 %1079
    %v1081 = vadd.f32 %v1076, %v1077
    %1082 = vadd.xlane.f32.xlu0 %v1081
    %v1083 = vpop.xlane.xlu0 %1082
    %v1084 = vmul.f32 %v1080, %v1067
    %v1085 = vmul.f32 %v1083, %v1067
    %v1086 = vadd.f32 %v1084, 1e-05
    %v1087 = vadd.f32 %v1085, 1e-05
    %v1088 = vrsqrt.pop %v1086
    %v1089 = vrsqrt.pop %v1087
    %v1090 = vmul.f32 %v1070, %v1088
    %v1091 = vmul.f32 %v1071, %v1088
    %v1092 = vmul.f32 %v1072, %v1089
    %v1093 = vmul.f32 %v1073, %v1089
    %v1094 = vld [vmem:[%s5] sm:$0x3]
    %v1096 = vlaneseq
    %v1097 = vshrl.u32 %v1096, 7
    %v1098 = vsub.s32 0, %v1097
    %v1099 = vrot.slane %v1094, %v1098
    %v1100 = vlaneseq
    %v1101 = vshrl.u32 %v1100, 7
    %v1102 = vsub.s32 1, %v1101
    %v1103 = vrot.slane %v1094, %v1102
    %v1106 = vmul.f32 %v1090, %v1099
    %v1107 = vmul.f32 %v1091, %v1103
    %v1108 = vmul.f32 %v1092, %v1099
    %v1109 = vmul.f32 %v1093, %v1103
    %v1110 = vld [vmem:[%s6] sm:$0x3]
    %v1112 = vlaneseq
    %v1113 = vshrl.u32 %v1112, 7
    %v1114 = vsub.s32 0, %v1113
    %v1115 = vrot.slane %v1110, %v1114
    %v1116 = vlaneseq
    %v1117 = vshrl.u32 %v1116, 7
    %v1118 = vsub.s32 1, %v1117
    %v1119 = vrot.slane %v1110, %v1118
    %v1122 = vadd.f32 %v1106, %v1115
    %v1123 = vadd.f32 %v1107, %v1119
    %v1124 = vadd.f32 %v1108, %v1115
    %v1125 = vadd.f32 %v1109, %v1119
    %v1126 = vpack.c.bf16 %v1124, %v1122
    %v1127 = vpack.c.bf16 %v1125, %v1123
    %v1130 = vunpack.c.l.b16 %v1126
    %v1131 = vunpack.c.l.b16 %v1127
    %v1132 = vunpack.c.h.b16 %v1126
    %v1133 = vunpack.c.h.b16 %v1127
    %v1134 = vpack.c.b16 %v1131, %v1130
    %v1135 = vpack.c.b16 %v1133, %v1132
    %1138 = vst [vmem:[%s7] sm:$0xff] %v1134
    %1139 = vst [vmem:[%s7 + $0x8] sm:$0xff] %v1135
  $region37: #{transformer_forward.26} parent=0 // pred_fallthru
    _
  // Predicated region
  $region38: #{transformer_forward.26} parent=0 // pred_check
    _
  $region39: #{transformer_forward.26} parent=0 // pred_check_branch
    %1141 = sbr.rel (0) target = $region41
  $region40: #{transformer_forward.26} parent=0 // pred_region
    _
  $region41: #{transformer_forward.26} parent=0 // pred_fallthru
    _
  // Predicated region
  $region42: #{transformer_forward.26} parent=0 // pred_check
    _
  $region43: #{transformer_forward.26} parent=0 // pred_check_branch
    %1143 = sbr.rel (0) target = $region45
  $region44: #{transformer_forward.26} parent=0 // pred_region
    _
  $region45: #{transformer_forward.26} parent=0 // pred_fallthru
    _

</llo_original>
